<compile_context>
chip_gen: v5e
topology: v5e:2x2
jax: 0.10.0
libtpu: 0.0.40
codegen_flags: <defaults>
</compile_context>

<pallas_src>
import jax
import jax.numpy as jnp
from jax.experimental import pallas as pl


_BN_EPS = 1e-5


# --------------------------------------------------------------------------------------
# Shared static layout of the packed parameter buffers
# --------------------------------------------------------------------------------------

def _w_layout(cin0, channels, out_dim):
    """Row offsets of each layer's (k*Cin, Cout) weight block inside w_pack."""
    sizes = (3 * cin0,      # expand conv   (k=3, d=1)
             3 * channels,  # layer1a conv  (k=3, d=3)
             channels,      # layer1b conv  (1x1)
             3 * channels,  # layer2a conv  (k=3, d=9)
             channels,      # layer2b conv  (1x1)
             channels,      # shrink conv   (1x1 -> out_dim)
             out_dim)       # final Linear  (out_dim -> cls)
    offs, o = [], 0
    for s in sizes:
        offs.append(o)
        o += s
    return tuple(offs), tuple(sizes), o


# p_pack row layout (each row is one per-channel vector, zero-padded to the pack width):
#   0/1  expand BN gamma/beta      2/3  bn1a gamma/beta     4/5  bn1b gamma/beta
#   6/7  bn2a gamma/beta           8/9  bn2b gamma/beta
#   10   shrink conv bias          11   final Linear bias
_P_ROWS = 12


def _pad_cols(a, width):
    return a if a.shape[1] == width else jnp.pad(a, ((0, 0), (0, width - a.shape[1])))


# --------------------------------------------------------------------------------------
# Kernel / forward builder (all config is static, closed over by the kernel)
# --------------------------------------------------------------------------------------

def build_forward(kp=34, feature_dim=3, channels=64, out_dim=64, cls=7):
    cin0 = kp * feature_dim
    width = max(channels, out_dim, cls)                 # packed lane width of both buffers
    (o_exp, o_1a, o_1b, o_2a, o_2b, o_shr, o_fin), _, w_rows = _w_layout(cin0, channels, out_dim)
    frames = 27                                          # receptive field of filter_widths [3,3,3]

    def kernel(x_ref, y_ref, w_ref, p_ref, pred_ref, loss_ref):
        batch = x_ref.shape[0]

        def getw(off, rows, cout):
            w = w_ref[off:off + rows, :]
            return w if cout == width else w[:, :cout]

        def getp(row, cout):
            v = p_ref[row:row + 1, :]
            return v if cout == width else v[:, :cout]

        def conv(h, off, k, d, cin, cout):
            # h: (B, T, cin) f32.  One im2col MXU dot: batch folded into M, taps folded into K.
            t_out = h.shape[1] - (k - 1) * d
            if k == 1:
                cols = h
            else:
                cols = jnp.concatenate(
                    [h[:, j * d: j * d + t_out, :] for j in range(k)], axis=-1)
            out = jnp.dot(cols.reshape(batch * t_out, k * cin), getw(off, k * cin, cout),
                          preferred_element_type=jnp.float32)
            return out.reshape(batch, t_out, cout)

        def bn_relu(v, g_row, res=None):
            # Training-mode BatchNorm1d over all B*T rows, single-pass statistics
            # (biased variance, eps=1e-5), then affine + ReLU (+ optional residual add).
            c = v.shape[-1]
            inv_n = 1.0 / float(v.shape[0] * v.shape[1])
            s = jnp.sum(jnp.sum(v, axis=1, keepdims=True), axis=0, keepdims=True)
            ss = jnp.sum(jnp.sum(v * v, axis=1, keepdims=True), axis=0, keepdims=True)
            mean = s * inv_n
            var = ss * inv_n - mean * mean
            scale = getp(g_row, c) * jax.lax.rsqrt(var + _BN_EPS)
            shift = getp(g_row + 1, c) - mean * scale
            out = jnp.maximum(v * scale + shift, 0.0)
            if res is not None:
                out = out + res
            return out

        h = x_ref[...]                                                    # (B, 27, cin0)

        # expand conv (k=3, d=1) + BN + ReLU            -> (B, 25, C)
        h = bn_relu(conv(h, o_exp, 3, 1, cin0, channels), 0)
        # residual block 1: k=3 d=3 conv, then 1x1; residual = center crop of block input
        res = h[:, 3:h.shape[1] - 3, :]
        h = bn_relu(conv(h, o_1a, 3, 3, channels, channels), 2)           # (B, 19, C)
        h = bn_relu(conv(h, o_1b, 1, 1, channels, channels), 4, res=res)
        # residual block 2: k=3 d=9 conv, then 1x1
        res = h[:, 9:h.shape[1] - 9, :]
        h = bn_relu(conv(h, o_2a, 3, 9, channels, channels), 6)           # (B, 1, C)
        h = bn_relu(conv(h, o_2b, 1, 1, channels, channels), 8, res=res)
        # shrink 1x1 conv -> out_dim (no BN/ReLU, bias kept)
        h = conv(h, o_shr, 1, 1, channels, out_dim) + getp(10, out_dim)   # (B, 1, out_dim)

        # final = Linear(out_dim, cls) applied to ReLU(features); T_out == 1
        feats = jnp.maximum(h.reshape(batch, out_dim), 0.0)
        z = jnp.dot(feats, getw(o_fin, out_dim, cls),
                    preferred_element_type=jnp.float32) + getp(11, cls)   # (B, cls)

        # Head: argmax (first max index, matches torch.max CPU tie behavior) + mean CE.
        col = jax.lax.broadcasted_iota(jnp.int32, (batch, cls), 1)
        row_max = jnp.max(z, axis=1, keepdims=True)
        pred = jnp.min(jnp.where(z == row_max, col, cls), axis=1, keepdims=True)
        pred = jnp.minimum(pred, cls - 1)                # NaN-row guard: keep index in range
        lse = row_max + jnp.log(jnp.sum(jnp.exp(z - row_max), axis=1, keepdims=True))
        sel = jnp.sum(jnp.where(col == y_ref[...], z, 0.0), axis=1, keepdims=True)
        pred_ref[...] = pred.astype(jnp.int32)
        loss_ref[...] = jnp.reshape(jnp.mean(lse - sel), (1, 1))

    def _full_spec(shape):
        nd = len(shape)
        return pl.BlockSpec(shape, lambda i, _nd=nd: (0,) * _nd)

    def forward(params, x, y):
        b, f, p_, c = x.shape
        if p_ * c != cin0:
            raise ValueError(f"expected kp*feature_dim == {cin0}, got {p_ * c}")
        # The PyTorch head (x.view(b, -1) + cross_entropy) is only well-defined when T_out == 1,
        # i.e. f equals the receptive field of filter_widths [3,3,3].
        if f != frames:
            raise ValueError(f"forward expects f == {frames}, got {f}")

        x3 = x.reshape(b, f, cin0).astype(jnp.float32)
        y2 = jnp.reshape(y, (b, 1)).astype(jnp.int32)
        w_pack = params["w_pack"]
        p_pack = params["p_pack"]

        pred, loss = pl.pallas_call(
            kernel,
            out_shape=(jax.ShapeDtypeStruct((b, 1), jnp.int32),
                       jax.ShapeDtypeStruct((1, 1), jnp.float32)),
            grid=(1,),
            in_specs=[_full_spec(x3.shape), _full_spec(y2.shape),
                      _full_spec(w_pack.shape), _full_spec(p_pack.shape)],
            out_specs=(pl.BlockSpec((b, 1), lambda i: (0, 0)),
                       pl.BlockSpec((1, 1), lambda i: (0, 0))),
        )(x3, y2, w_pack, p_pack)
        return pred[:, 0], loss[0, 0]

    return forward


# --------------------------------------------------------------------------------------
# Parameters (deterministic, PyTorch-default-like uniform init, packed layouts)
# --------------------------------------------------------------------------------------

def init_params(key, kp=34, feature_dim=3, channels=64, out_dim=64, cls=7):
    """Returns {"w_pack": (rows, W) f32, "p_pack": (12, W) f32} matching build_forward's layout.

    Conv weights are stored pre-transposed / im2col-reshaped as (k*Cin, Cout), rows ordered
    tap-major (rows [j*Cin:(j+1)*Cin] correspond to W_torch[:, :, j].T).  Biases of the five
    BN-followed convs are omitted (cancelled exactly by training-mode BatchNorm).
    """
    cin0 = kp * feature_dim
    width = max(channels, out_dim, cls)
    keys = jax.random.split(key, 7)

    def conv_w(k, cout, cin, kw):
        bound = 1.0 / (cin * kw) ** 0.5
        w = jax.random.uniform(k, (kw * cin, cout), jnp.float32, -bound, bound)
        return _pad_cols(w, width)

    def conv_wb(k, cout, cin, kw):
        bound = 1.0 / (cin * kw) ** 0.5
        k1, k2 = jax.random.split(k)
        w = jax.random.uniform(k1, (kw * cin, cout), jnp.float32, -bound, bound)
        b = jax.random.uniform(k2, (1, cout), jnp.float32, -bound, bound)
        return _pad_cols(w, width), _pad_cols(b, width)

    # Weight slab (order must match _w_layout)
    blocks = [
        conv_w(keys[0], channels, cin0, 3),       # expand
        conv_w(keys[1], channels, channels, 3),   # layer1a
        conv_w(keys[2], channels, channels, 1),   # layer1b
        conv_w(keys[3], channels, channels, 3),   # layer2a
        conv_w(keys[4], channels, channels, 1),   # layer2b
    ]
    shr_w, shr_b = conv_wb(keys[5], out_dim, channels, 1)     # shrink (keeps its bias)
    fin_w, fin_b = conv_wb(keys[6], cls, out_dim, 1)          # final Linear (keeps its bias)
    blocks += [shr_w, fin_w]
    w_pack = jnp.concatenate(blocks, axis=0)

    # Per-channel-vector slab: 5x (BN gamma, BN beta), shrink bias, final bias
    p_rows = []
    for _ in range(5):
        p_rows.append(_pad_cols(jnp.ones((1, channels), jnp.float32), width))
        p_rows.append(_pad_cols(jnp.zeros((1, channels), jnp.float32), width))
    p_rows += [shr_b, fin_b]
    p_pack = jnp.concatenate(p_rows, axis=0)
    assert p_pack.shape[0] == _P_ROWS

    return {"w_pack": w_pack, "p_pack": p_pack}


# --------------------------------------------------------------------------------------

if __name__ == "__main__":
    key = jax.random.PRNGKey(0)
    kx, ky, kparams = jax.random.split(key, 3)

    B, F, KP, C = 2, 27, 34, 3     # F=27 = receptive field of filter_widths [3,3,3]
    CLS, CHANNELS, OUT_DIM = 7, 64, 64

    x = jax.random.normal(kx, (B, F, KP, C), jnp.float32)
    y = jax.random.randint(ky, (B, 1), 0, CLS)

    params = init_params(kparams, kp=KP, feature_dim=C,
                         channels=CHANNELS, out_dim=OUT_DIM, cls=CLS)
    forward = build_forward(kp=KP, feature_dim=C,
                            channels=CHANNELS, out_dim=OUT_DIM, cls=CLS)

    fwd = jax.jit(forward)
    pred, loss = fwd(params, x, y)
    jax.block_until_ready((pred, loss))
    print("KERNEL_OK")
</pallas_src>

<mosaic_0001>
module attributes {stable_mosaic.version = 11 : i64} {
  func.func @kernel(%arg0: i32, %arg1: memref<2x27x102xf32, #tpu.memory_space<vmem>>, %arg2: memref<2x1xi32, #tpu.memory_space<vmem>>, %arg3: memref<946x64xf32, #tpu.memory_space<vmem>>, %arg4: memref<12x64xf32, #tpu.memory_space<vmem>>, %arg5: memref<2x1xi32, #tpu.memory_space<vmem>>, %arg6: memref<1x1xf32, #tpu.memory_space<vmem>>) attributes {dimension_semantics = [#tpu.dimension_semantics<arbitrary>], iteration_bounds = array<i64: 1>, scalar_prefetch = 0 : i64, scratch_operands = 0 : i64, tpu.core_type = #tpu.core_type<tc>, window_params = [{pipeline_mode = #tpu.pipeline_mode<synchronous>, transform_indices = @transform_0, window_bounds = array<i64: 2, 27, 102>}, {pipeline_mode = #tpu.pipeline_mode<synchronous>, transform_indices = @transform_1, window_bounds = array<i64: 2, 1>}, {pipeline_mode = #tpu.pipeline_mode<synchronous>, transform_indices = @transform_2, window_bounds = array<i64: 946, 64>}, {pipeline_mode = #tpu.pipeline_mode<synchronous>, transform_indices = @transform_3, window_bounds = array<i64: 12, 64>}, {pipeline_mode = #tpu.pipeline_mode<synchronous>, transform_indices = @transform_4, window_bounds = array<i64: 2, 1>}, {pipeline_mode = #tpu.pipeline_mode<synchronous>, transform_indices = @transform_5, window_bounds = array<i64: 1, 1>}]} {
    %c0 = arith.constant 0 : index
    %c0_0 = arith.constant 0 : index
    %c0_1 = arith.constant 0 : index
    %0 = vector.load %arg1[%c0, %c0_0, %c0_1] : memref<2x27x102xf32, #tpu.memory_space<vmem>>, vector<2x27x102xf32>
    %1 = vector.extract_strided_slice %0 {offsets = [0, 0, 0], sizes = [2, 25, 102], strides = [1, 1, 1]} : vector<2x27x102xf32> to vector<2x25x102xf32>
    %2 = vector.extract_strided_slice %0 {offsets = [0, 1, 0], sizes = [2, 25, 102], strides = [1, 1, 1]} : vector<2x27x102xf32> to vector<2x25x102xf32>
    %3 = vector.extract_strided_slice %0 {offsets = [0, 2, 0], sizes = [2, 25, 102], strides = [1, 1, 1]} : vector<2x27x102xf32> to vector<2x25x102xf32>
    %4 = tpu.concatenate %1, %2, %3 in 2 : vector<2x25x102xf32>, vector<2x25x102xf32>, vector<2x25x102xf32> -> vector<2x25x306xf32>
    %5 = vector.shape_cast %4 : vector<2x25x306xf32> to vector<50x306xf32>
    %c0_2 = arith.constant 0 : index
    %c0_3 = arith.constant 0 : index
    %6 = vector.load %arg3[%c0_2, %c0_3] : memref<946x64xf32, #tpu.memory_space<vmem>>, vector<306x64xf32>
    %cst = arith.constant dense<0.000000e+00> : vector<50x64xf32>
    %7 = tpu.matmul %5, %6, %cst {dimension_numbers = #tpu.dot_dimension_numbers<[1], [0], [0], [1], [0, 0, 1, 1], [], []>} : vector<50x306xf32>, vector<306x64xf32>, vector<50x64xf32> -> vector<50x64xf32>
    %8 = vector.shape_cast %7 : vector<50x64xf32> to vector<2x25x64xf32>
    %cst_4 = arith.constant dense<0.000000e+00> : vector<2x64xf32>
    %9 = vector.multi_reduction <add>, %8, %cst_4 [1] : vector<2x25x64xf32> to vector<2x64xf32>
    %10 = vector.shape_cast %9 : vector<2x64xf32> to vector<2x1x64xf32>
    %cst_5 = arith.constant dense<0.000000e+00> : vector<1x64xf32>
    %11 = vector.multi_reduction <add>, %10, %cst_5 [0] : vector<2x1x64xf32> to vector<1x64xf32>
    %12 = vector.shape_cast %11 : vector<1x64xf32> to vector<1x1x64xf32>
    %13 = arith.mulf %8, %8 : vector<2x25x64xf32>
    %cst_6 = arith.constant dense<0.000000e+00> : vector<2x64xf32>
    %14 = vector.multi_reduction <add>, %13, %cst_6 [1] : vector<2x25x64xf32> to vector<2x64xf32>
    %15 = vector.shape_cast %14 : vector<2x64xf32> to vector<2x1x64xf32>
    %cst_7 = arith.constant dense<0.000000e+00> : vector<1x64xf32>
    %16 = vector.multi_reduction <add>, %15, %cst_7 [0] : vector<2x1x64xf32> to vector<1x64xf32>
    %17 = vector.shape_cast %16 : vector<1x64xf32> to vector<1x1x64xf32>
    %cst_8 = arith.constant 2.000000e-02 : f32
    %18 = vector.broadcast %cst_8 : f32 to vector<1x1x64xf32>
    %19 = arith.mulf %12, %18 : vector<1x1x64xf32>
    %cst_9 = arith.constant 2.000000e-02 : f32
    %20 = vector.broadcast %cst_9 : f32 to vector<1x1x64xf32>
    %21 = arith.mulf %17, %20 : vector<1x1x64xf32>
    %22 = arith.mulf %19, %19 : vector<1x1x64xf32>
    %23 = arith.subf %21, %22 : vector<1x1x64xf32>
    %c0_10 = arith.constant 0 : index
    %c0_11 = arith.constant 0 : index
    %24 = vector.load %arg4[%c0_10, %c0_11] : memref<12x64xf32, #tpu.memory_space<vmem>>, vector<1x64xf32>
    %cst_12 = arith.constant 9.99999974E-6 : f32
    %25 = vector.broadcast %cst_12 : f32 to vector<1x1x64xf32>
    %26 = arith.addf %23, %25 : vector<1x1x64xf32>
    %27 = math.rsqrt %26 : vector<1x1x64xf32>
    %28 = vector.shape_cast %24 : vector<1x64xf32> to vector<1x1x64xf32>
    %29 = arith.mulf %28, %27 : vector<1x1x64xf32>
    %c1 = arith.constant 1 : index
    %c0_13 = arith.constant 0 : index
    %30 = vector.load %arg4[%c1, %c0_13] : memref<12x64xf32, #tpu.memory_space<vmem>>, vector<1x64xf32>
    %31 = arith.mulf %19, %29 : vector<1x1x64xf32>
    %32 = vector.shape_cast %30 : vector<1x64xf32> to vector<1x1x64xf32>
    %33 = arith.subf %32, %31 : vector<1x1x64xf32>
    %34 = vector.broadcast %29 : vector<1x1x64xf32> to vector<2x25x64xf32>
    %35 = arith.mulf %8, %34 : vector<2x25x64xf32>
    %36 = vector.broadcast %33 : vector<1x1x64xf32> to vector<2x25x64xf32>
    %37 = arith.addf %35, %36 : vector<2x25x64xf32>
    %cst_14 = arith.constant 0.000000e+00 : f32
    %38 = vector.broadcast %cst_14 : f32 to vector<2x25x64xf32>
    %39 = arith.maximumf %37, %38 : vector<2x25x64xf32>
    %40 = vector.extract_strided_slice %39 {offsets = [0, 3, 0], sizes = [2, 19, 64], strides = [1, 1, 1]} : vector<2x25x64xf32> to vector<2x19x64xf32>
    %41 = vector.extract_strided_slice %39 {offsets = [0, 0, 0], sizes = [2, 19, 64], strides = [1, 1, 1]} : vector<2x25x64xf32> to vector<2x19x64xf32>
    %42 = vector.extract_strided_slice %39 {offsets = [0, 3, 0], sizes = [2, 19, 64], strides = [1, 1, 1]} : vector<2x25x64xf32> to vector<2x19x64xf32>
    %43 = vector.extract_strided_slice %39 {offsets = [0, 6, 0], sizes = [2, 19, 64], strides = [1, 1, 1]} : vector<2x25x64xf32> to vector<2x19x64xf32>
    %44 = tpu.concatenate %41, %42, %43 in 2 : vector<2x19x64xf32>, vector<2x19x64xf32>, vector<2x19x64xf32> -> vector<2x19x192xf32>
    %45 = vector.shape_cast %44 : vector<2x19x192xf32> to vector<38x192xf32>
    %c306 = arith.constant 306 : index
    %c0_15 = arith.constant 0 : index
    %46 = vector.load %arg3[%c306, %c0_15] : memref<946x64xf32, #tpu.memory_space<vmem>>, vector<192x64xf32>
    %cst_16 = arith.constant dense<0.000000e+00> : vector<38x64xf32>
    %47 = tpu.matmul %45, %46, %cst_16 {dimension_numbers = #tpu.dot_dimension_numbers<[1], [0], [0], [1], [0, 0, 1, 1], [], []>} : vector<38x192xf32>, vector<192x64xf32>, vector<38x64xf32> -> vector<38x64xf32>
    %48 = vector.shape_cast %47 : vector<38x64xf32> to vector<2x19x64xf32>
    %cst_17 = arith.constant dense<0.000000e+00> : vector<2x64xf32>
    %49 = vector.multi_reduction <add>, %48, %cst_17 [1] : vector<2x19x64xf32> to vector<2x64xf32>
    %50 = vector.shape_cast %49 : vector<2x64xf32> to vector<2x1x64xf32>
    %cst_18 = arith.constant dense<0.000000e+00> : vector<1x64xf32>
    %51 = vector.multi_reduction <add>, %50, %cst_18 [0] : vector<2x1x64xf32> to vector<1x64xf32>
    %52 = vector.shape_cast %51 : vector<1x64xf32> to vector<1x1x64xf32>
    %53 = arith.mulf %48, %48 : vector<2x19x64xf32>
    %cst_19 = arith.constant dense<0.000000e+00> : vector<2x64xf32>
    %54 = vector.multi_reduction <add>, %53, %cst_19 [1] : vector<2x19x64xf32> to vector<2x64xf32>
    %55 = vector.shape_cast %54 : vector<2x64xf32> to vector<2x1x64xf32>
    %cst_20 = arith.constant dense<0.000000e+00> : vector<1x64xf32>
    %56 = vector.multi_reduction <add>, %55, %cst_20 [0] : vector<2x1x64xf32> to vector<1x64xf32>
    %57 = vector.shape_cast %56 : vector<1x64xf32> to vector<1x1x64xf32>
    %cst_21 = arith.constant 0.0263157897 : f32
    %58 = vector.broadcast %cst_21 : f32 to vector<1x1x64xf32>
    %59 = arith.mulf %52, %58 : vector<1x1x64xf32>
    %cst_22 = arith.constant 0.0263157897 : f32
    %60 = vector.broadcast %cst_22 : f32 to vector<1x1x64xf32>
    %61 = arith.mulf %57, %60 : vector<1x1x64xf32>
    %62 = arith.mulf %59, %59 : vector<1x1x64xf32>
    %63 = arith.subf %61, %62 : vector<1x1x64xf32>
    %c2 = arith.constant 2 : index
    %c0_23 = arith.constant 0 : index
    %64 = vector.load %arg4[%c2, %c0_23] : memref<12x64xf32, #tpu.memory_space<vmem>>, vector<1x64xf32>
    %cst_24 = arith.constant 9.99999974E-6 : f32
    %65 = vector.broadcast %cst_24 : f32 to vector<1x1x64xf32>
    %66 = arith.addf %63, %65 : vector<1x1x64xf32>
    %67 = math.rsqrt %66 : vector<1x1x64xf32>
    %68 = vector.shape_cast %64 : vector<1x64xf32> to vector<1x1x64xf32>
    %69 = arith.mulf %68, %67 : vector<1x1x64xf32>
    %c3 = arith.constant 3 : index
    %c0_25 = arith.constant 0 : index
    %70 = vector.load %arg4[%c3, %c0_25] : memref<12x64xf32, #tpu.memory_space<vmem>>, vector<1x64xf32>
    %71 = arith.mulf %59, %69 : vector<1x1x64xf32>
    %72 = vector.shape_cast %70 : vector<1x64xf32> to vector<1x1x64xf32>
    %73 = arith.subf %72, %71 : vector<1x1x64xf32>
    %74 = vector.broadcast %69 : vector<1x1x64xf32> to vector<2x19x64xf32>
    %75 = arith.mulf %48, %74 : vector<2x19x64xf32>
    %76 = vector.broadcast %73 : vector<1x1x64xf32> to vector<2x19x64xf32>
    %77 = arith.addf %75, %76 : vector<2x19x64xf32>
    %cst_26 = arith.constant 0.000000e+00 : f32
    %78 = vector.broadcast %cst_26 : f32 to vector<2x19x64xf32>
    %79 = arith.maximumf %77, %78 : vector<2x19x64xf32>
    %80 = vector.shape_cast %79 : vector<2x19x64xf32> to vector<38x64xf32>
    %c498 = arith.constant 498 : index
    %c0_27 = arith.constant 0 : index
    %81 = vector.load %arg3[%c498, %c0_27] : memref<946x64xf32, #tpu.memory_space<vmem>>, vector<64x64xf32>
    %cst_28 = arith.constant dense<0.000000e+00> : vector<38x64xf32>
    %82 = tpu.matmul %80, %81, %cst_28 {dimension_numbers = #tpu.dot_dimension_numbers<[1], [0], [0], [1], [0, 0, 1, 1], [], []>} : vector<38x64xf32>, vector<64x64xf32>, vector<38x64xf32> -> vector<38x64xf32>
    %83 = vector.shape_cast %82 : vector<38x64xf32> to vector<2x19x64xf32>
    %cst_29 = arith.constant dense<0.000000e+00> : vector<2x64xf32>
    %84 = vector.multi_reduction <add>, %83, %cst_29 [1] : vector<2x19x64xf32> to vector<2x64xf32>
    %85 = vector.shape_cast %84 : vector<2x64xf32> to vector<2x1x64xf32>
    %cst_30 = arith.constant dense<0.000000e+00> : vector<1x64xf32>
    %86 = vector.multi_reduction <add>, %85, %cst_30 [0] : vector<2x1x64xf32> to vector<1x64xf32>
    %87 = vector.shape_cast %86 : vector<1x64xf32> to vector<1x1x64xf32>
    %88 = arith.mulf %83, %83 : vector<2x19x64xf32>
    %cst_31 = arith.constant dense<0.000000e+00> : vector<2x64xf32>
    %89 = vector.multi_reduction <add>, %88, %cst_31 [1] : vector<2x19x64xf32> to vector<2x64xf32>
    %90 = vector.shape_cast %89 : vector<2x64xf32> to vector<2x1x64xf32>
    %cst_32 = arith.constant dense<0.000000e+00> : vector<1x64xf32>
    %91 = vector.multi_reduction <add>, %90, %cst_32 [0] : vector<2x1x64xf32> to vector<1x64xf32>
    %92 = vector.shape_cast %91 : vector<1x64xf32> to vector<1x1x64xf32>
    %cst_33 = arith.constant 0.0263157897 : f32
    %93 = vector.broadcast %cst_33 : f32 to vector<1x1x64xf32>
    %94 = arith.mulf %87, %93 : vector<1x1x64xf32>
    %cst_34 = arith.constant 0.0263157897 : f32
    %95 = vector.broadcast %cst_34 : f32 to vector<1x1x64xf32>
    %96 = arith.mulf %92, %95 : vector<1x1x64xf32>
    %97 = arith.mulf %94, %94 : vector<1x1x64xf32>
    %98 = arith.subf %96, %97 : vector<1x1x64xf32>
    %c4 = arith.constant 4 : index
    %c0_35 = arith.constant 0 : index
    %99 = vector.load %arg4[%c4, %c0_35] : memref<12x64xf32, #tpu.memory_space<vmem>>, vector<1x64xf32>
    %cst_36 = arith.constant 9.99999974E-6 : f32
    %100 = vector.broadcast %cst_36 : f32 to vector<1x1x64xf32>
    %101 = arith.addf %98, %100 : vector<1x1x64xf32>
    %102 = math.rsqrt %101 : vector<1x1x64xf32>
    %103 = vector.shape_cast %99 : vector<1x64xf32> to vector<1x1x64xf32>
    %104 = arith.mulf %103, %102 : vector<1x1x64xf32>
    %c5 = arith.constant 5 : index
    %c0_37 = arith.constant 0 : index
    %105 = vector.load %arg4[%c5, %c0_37] : memref<12x64xf32, #tpu.memory_space<vmem>>, vector<1x64xf32>
    %106 = arith.mulf %94, %104 : vector<1x1x64xf32>
    %107 = vector.shape_cast %105 : vector<1x64xf32> to vector<1x1x64xf32>
    %108 = arith.subf %107, %106 : vector<1x1x64xf32>
    %109 = vector.broadcast %104 : vector<1x1x64xf32> to vector<2x19x64xf32>
    %110 = arith.mulf %83, %109 : vector<2x19x64xf32>
    %111 = vector.broadcast %108 : vector<1x1x64xf32> to vector<2x19x64xf32>
    %112 = arith.addf %110, %111 : vector<2x19x64xf32>
    %cst_38 = arith.constant 0.000000e+00 : f32
    %113 = vector.broadcast %cst_38 : f32 to vector<2x19x64xf32>
    %114 = arith.maximumf %112, %113 : vector<2x19x64xf32>
    %115 = arith.addf %114, %40 : vector<2x19x64xf32>
    %116 = vector.extract_strided_slice %115 {offsets = [0, 9, 0], sizes = [2, 1, 64], strides = [1, 1, 1]} : vector<2x19x64xf32> to vector<2x1x64xf32>
    %117 = vector.extract_strided_slice %115 {offsets = [0, 0, 0], sizes = [2, 1, 64], strides = [1, 1, 1]} : vector<2x19x64xf32> to vector<2x1x64xf32>
    %118 = vector.extract_strided_slice %115 {offsets = [0, 9, 0], sizes = [2, 1, 64], strides = [1, 1, 1]} : vector<2x19x64xf32> to vector<2x1x64xf32>
    %119 = vector.extract_strided_slice %115 {offsets = [0, 18, 0], sizes = [2, 1, 64], strides = [1, 1, 1]} : vector<2x19x64xf32> to vector<2x1x64xf32>
    %120 = tpu.concatenate %117, %118, %119 in 2 : vector<2x1x64xf32>, vector<2x1x64xf32>, vector<2x1x64xf32> -> vector<2x1x192xf32>
    %121 = vector.shape_cast %120 : vector<2x1x192xf32> to vector<2x192xf32>
    %c562 = arith.constant 562 : index
    %c0_39 = arith.constant 0 : index
    %122 = vector.load %arg3[%c562, %c0_39] : memref<946x64xf32, #tpu.memory_space<vmem>>, vector<192x64xf32>
    %cst_40 = arith.constant dense<0.000000e+00> : vector<2x64xf32>
    %123 = tpu.matmul %121, %122, %cst_40 {dimension_numbers = #tpu.dot_dimension_numbers<[1], [0], [0], [1], [0, 0, 1, 1], [], []>} : vector<2x192xf32>, vector<192x64xf32>, vector<2x64xf32> -> vector<2x64xf32>
    %124 = vector.shape_cast %123 : vector<2x64xf32> to vector<2x1x64xf32>
    %cst_41 = arith.constant dense<0.000000e+00> : vector<2x64xf32>
    %125 = vector.multi_reduction <add>, %124, %cst_41 [1] : vector<2x1x64xf32> to vector<2x64xf32>
    %126 = vector.shape_cast %125 : vector<2x64xf32> to vector<2x1x64xf32>
    %cst_42 = arith.constant dense<0.000000e+00> : vector<1x64xf32>
    %127 = vector.multi_reduction <add>, %126, %cst_42 [0] : vector<2x1x64xf32> to vector<1x64xf32>
    %128 = vector.shape_cast %127 : vector<1x64xf32> to vector<1x1x64xf32>
    %129 = arith.mulf %124, %124 : vector<2x1x64xf32>
    %cst_43 = arith.constant dense<0.000000e+00> : vector<2x64xf32>
    %130 = vector.multi_reduction <add>, %129, %cst_43 [1] : vector<2x1x64xf32> to vector<2x64xf32>
    %131 = vector.shape_cast %130 : vector<2x64xf32> to vector<2x1x64xf32>
    %cst_44 = arith.constant dense<0.000000e+00> : vector<1x64xf32>
    %132 = vector.multi_reduction <add>, %131, %cst_44 [0] : vector<2x1x64xf32> to vector<1x64xf32>
    %133 = vector.shape_cast %132 : vector<1x64xf32> to vector<1x1x64xf32>
    %cst_45 = arith.constant 5.000000e-01 : f32
    %134 = vector.broadcast %cst_45 : f32 to vector<1x1x64xf32>
    %135 = arith.mulf %128, %134 : vector<1x1x64xf32>
    %cst_46 = arith.constant 5.000000e-01 : f32
    %136 = vector.broadcast %cst_46 : f32 to vector<1x1x64xf32>
    %137 = arith.mulf %133, %136 : vector<1x1x64xf32>
    %138 = arith.mulf %135, %135 : vector<1x1x64xf32>
    %139 = arith.subf %137, %138 : vector<1x1x64xf32>
    %c6 = arith.constant 6 : index
    %c0_47 = arith.constant 0 : index
    %140 = vector.load %arg4[%c6, %c0_47] : memref<12x64xf32, #tpu.memory_space<vmem>>, vector<1x64xf32>
    %cst_48 = arith.constant 9.99999974E-6 : f32
    %141 = vector.broadcast %cst_48 : f32 to vector<1x1x64xf32>
    %142 = arith.addf %139, %141 : vector<1x1x64xf32>
    %143 = math.rsqrt %142 : vector<1x1x64xf32>
    %144 = vector.shape_cast %140 : vector<1x64xf32> to vector<1x1x64xf32>
    %145 = arith.mulf %144, %143 : vector<1x1x64xf32>
    %c7 = arith.constant 7 : index
    %c0_49 = arith.constant 0 : index
    %146 = vector.load %arg4[%c7, %c0_49] : memref<12x64xf32, #tpu.memory_space<vmem>>, vector<1x64xf32>
    %147 = arith.mulf %135, %145 : vector<1x1x64xf32>
    %148 = vector.shape_cast %146 : vector<1x64xf32> to vector<1x1x64xf32>
    %149 = arith.subf %148, %147 : vector<1x1x64xf32>
    %150 = vector.broadcast %145 : vector<1x1x64xf32> to vector<2x1x64xf32>
    %151 = arith.mulf %124, %150 : vector<2x1x64xf32>
    %152 = vector.broadcast %149 : vector<1x1x64xf32> to vector<2x1x64xf32>
    %153 = arith.addf %151, %152 : vector<2x1x64xf32>
    %cst_50 = arith.constant 0.000000e+00 : f32
    %154 = vector.broadcast %cst_50 : f32 to vector<2x1x64xf32>
    %155 = arith.maximumf %153, %154 : vector<2x1x64xf32>
    %156 = vector.shape_cast %155 : vector<2x1x64xf32> to vector<2x64xf32>
    %c754 = arith.constant 754 : index
    %c0_51 = arith.constant 0 : index
    %157 = vector.load %arg3[%c754, %c0_51] : memref<946x64xf32, #tpu.memory_space<vmem>>, vector<64x64xf32>
    %cst_52 = arith.constant dense<0.000000e+00> : vector<2x64xf32>
    %158 = tpu.matmul %156, %157, %cst_52 {dimension_numbers = #tpu.dot_dimension_numbers<[1], [0], [0], [1], [0, 0, 1, 1], [], []>} : vector<2x64xf32>, vector<64x64xf32>, vector<2x64xf32> -> vector<2x64xf32>
    %159 = vector.shape_cast %158 : vector<2x64xf32> to vector<2x1x64xf32>
    %cst_53 = arith.constant dense<0.000000e+00> : vector<2x64xf32>
    %160 = vector.multi_reduction <add>, %159, %cst_53 [1] : vector<2x1x64xf32> to vector<2x64xf32>
    %161 = vector.shape_cast %160 : vector<2x64xf32> to vector<2x1x64xf32>
    %cst_54 = arith.constant dense<0.000000e+00> : vector<1x64xf32>
    %162 = vector.multi_reduction <add>, %161, %cst_54 [0] : vector<2x1x64xf32> to vector<1x64xf32>
    %163 = vector.shape_cast %162 : vector<1x64xf32> to vector<1x1x64xf32>
    %164 = arith.mulf %159, %159 : vector<2x1x64xf32>
    %cst_55 = arith.constant dense<0.000000e+00> : vector<2x64xf32>
    %165 = vector.multi_reduction <add>, %164, %cst_55 [1] : vector<2x1x64xf32> to vector<2x64xf32>
    %166 = vector.shape_cast %165 : vector<2x64xf32> to vector<2x1x64xf32>
    %cst_56 = arith.constant dense<0.000000e+00> : vector<1x64xf32>
    %167 = vector.multi_reduction <add>, %166, %cst_56 [0] : vector<2x1x64xf32> to vector<1x64xf32>
    %168 = vector.shape_cast %167 : vector<1x64xf32> to vector<1x1x64xf32>
    %cst_57 = arith.constant 5.000000e-01 : f32
    %169 = vector.broadcast %cst_57 : f32 to vector<1x1x64xf32>
    %170 = arith.mulf %163, %169 : vector<1x1x64xf32>
    %cst_58 = arith.constant 5.000000e-01 : f32
    %171 = vector.broadcast %cst_58 : f32 to vector<1x1x64xf32>
    %172 = arith.mulf %168, %171 : vector<1x1x64xf32>
    %173 = arith.mulf %170, %170 : vector<1x1x64xf32>
    %174 = arith.subf %172, %173 : vector<1x1x64xf32>
    %c8 = arith.constant 8 : index
    %c0_59 = arith.constant 0 : index
    %175 = vector.load %arg4[%c8, %c0_59] : memref<12x64xf32, #tpu.memory_space<vmem>>, vector<1x64xf32>
    %cst_60 = arith.constant 9.99999974E-6 : f32
    %176 = vector.broadcast %cst_60 : f32 to vector<1x1x64xf32>
    %177 = arith.addf %174, %176 : vector<1x1x64xf32>
    %178 = math.rsqrt %177 : vector<1x1x64xf32>
    %179 = vector.shape_cast %175 : vector<1x64xf32> to vector<1x1x64xf32>
    %180 = arith.mulf %179, %178 : vector<1x1x64xf32>
    %c9 = arith.constant 9 : index
    %c0_61 = arith.constant 0 : index
    %181 = vector.load %arg4[%c9, %c0_61] : memref<12x64xf32, #tpu.memory_space<vmem>>, vector<1x64xf32>
    %182 = arith.mulf %170, %180 : vector<1x1x64xf32>
    %183 = vector.shape_cast %181 : vector<1x64xf32> to vector<1x1x64xf32>
    %184 = arith.subf %183, %182 : vector<1x1x64xf32>
    %185 = vector.broadcast %180 : vector<1x1x64xf32> to vector<2x1x64xf32>
    %186 = arith.mulf %159, %185 : vector<2x1x64xf32>
    %187 = vector.broadcast %184 : vector<1x1x64xf32> to vector<2x1x64xf32>
    %188 = arith.addf %186, %187 : vector<2x1x64xf32>
    %cst_62 = arith.constant 0.000000e+00 : f32
    %189 = vector.broadcast %cst_62 : f32 to vector<2x1x64xf32>
    %190 = arith.maximumf %188, %189 : vector<2x1x64xf32>
    %191 = arith.addf %190, %116 : vector<2x1x64xf32>
    %192 = vector.shape_cast %191 : vector<2x1x64xf32> to vector<2x64xf32>
    %c818 = arith.constant 818 : index
    %c0_63 = arith.constant 0 : index
    %193 = vector.load %arg3[%c818, %c0_63] : memref<946x64xf32, #tpu.memory_space<vmem>>, vector<64x64xf32>
    %cst_64 = arith.constant dense<0.000000e+00> : vector<2x64xf32>
    %194 = tpu.matmul %192, %193, %cst_64 {dimension_numbers = #tpu.dot_dimension_numbers<[1], [0], [0], [1], [0, 0, 1, 1], [], []>} : vector<2x64xf32>, vector<64x64xf32>, vector<2x64xf32> -> vector<2x64xf32>
    %195 = vector.shape_cast %194 : vector<2x64xf32> to vector<2x1x64xf32>
    %c10 = arith.constant 10 : index
    %c0_65 = arith.constant 0 : index
    %196 = vector.load %arg4[%c10, %c0_65] : memref<12x64xf32, #tpu.memory_space<vmem>>, vector<1x64xf32>
    %197 = vector.shape_cast %196 : vector<1x64xf32> to vector<1x1x64xf32>
    %198 = vector.broadcast %197 : vector<1x1x64xf32> to vector<2x1x64xf32>
    %199 = arith.addf %195, %198 : vector<2x1x64xf32>
    %200 = vector.shape_cast %199 : vector<2x1x64xf32> to vector<2x64xf32>
    %cst_66 = arith.constant 0.000000e+00 : f32
    %201 = vector.broadcast %cst_66 : f32 to vector<2x64xf32>
    %202 = arith.maximumf %200, %201 : vector<2x64xf32>
    %c882 = arith.constant 882 : index
    %c0_67 = arith.constant 0 : index
    %203 = vector.load %arg3[%c882, %c0_67] : memref<946x64xf32, #tpu.memory_space<vmem>>, vector<64x64xf32>
    %204 = vector.extract_strided_slice %203 {offsets = [0, 0], sizes = [64, 7], strides = [1, 1]} : vector<64x64xf32> to vector<64x7xf32>
    %cst_68 = arith.constant dense<0.000000e+00> : vector<2x7xf32>
    %205 = tpu.matmul %202, %204, %cst_68 {dimension_numbers = #tpu.dot_dimension_numbers<[1], [0], [0], [1], [0, 0, 1, 1], [], []>} : vector<2x64xf32>, vector<64x7xf32>, vector<2x7xf32> -> vector<2x7xf32>
    %c11 = arith.constant 11 : index
    %c0_69 = arith.constant 0 : index
    %206 = vector.load %arg4[%c11, %c0_69] : memref<12x64xf32, #tpu.memory_space<vmem>>, vector<1x64xf32>
    %207 = vector.extract_strided_slice %206 {offsets = [0, 0], sizes = [1, 7], strides = [1, 1]} : vector<1x64xf32> to vector<1x7xf32>
    %208 = vector.broadcast %207 : vector<1x7xf32> to vector<2x7xf32>
    %209 = arith.addf %205, %208 : vector<2x7xf32>
    %210 = tpu.iota {dimensions = array<i32: 1>} : vector<2x7xi32>
    %cst_70 = arith.constant dense<0xFF800000> : vector<2xf32>
    %211 = vector.multi_reduction <maximumf>, %209, %cst_70 [1] : vector<2x7xf32> to vector<2xf32>
    %212 = vector.shape_cast %211 : vector<2xf32> to vector<2x1xf32>
    %213 = vector.broadcast %212 : vector<2x1xf32> to vector<2x7xf32>
    %214 = arith.cmpf oeq, %209, %213 : vector<2x7xf32>
    %c7_i32 = arith.constant 7 : i32
    %215 = vector.broadcast %c7_i32 : i32 to vector<2x7xi32>
    %216 = arith.select %214, %210, %215 : vector<2x7xi1>, vector<2x7xi32>
    %cst_71 = arith.constant dense<2147483647> : vector<2xi32>
    %217 = vector.multi_reduction <minsi>, %216, %cst_71 [1] : vector<2x7xi32> to vector<2xi32>
    %218 = vector.shape_cast %217 : vector<2xi32> to vector<2x1xi32>
    %c6_i32 = arith.constant 6 : i32
    %219 = vector.broadcast %c6_i32 : i32 to vector<2x1xi32>
    %220 = arith.minsi %218, %219 : vector<2x1xi32>
    %221 = vector.broadcast %212 : vector<2x1xf32> to vector<2x7xf32>
    %222 = arith.subf %209, %221 : vector<2x7xf32>
    %223 = math.exp %222 : vector<2x7xf32>
    %cst_72 = arith.constant dense<0.000000e+00> : vector<2xf32>
    %224 = vector.multi_reduction <add>, %223, %cst_72 [1] : vector<2x7xf32> to vector<2xf32>
    %225 = vector.shape_cast %224 : vector<2xf32> to vector<2x1xf32>
    %226 = math.log %225 : vector<2x1xf32>
    %227 = arith.addf %212, %226 : vector<2x1xf32>
    %c0_73 = arith.constant 0 : index
    %c0_74 = arith.constant 0 : index
    %228 = vector.load %arg2[%c0_73, %c0_74] : memref<2x1xi32, #tpu.memory_space<vmem>>, vector<2x1xi32>
    %229 = vector.broadcast %228 : vector<2x1xi32> to vector<2x7xi32>
    %230 = arith.cmpi eq, %210, %229 : vector<2x7xi32>
    %cst_75 = arith.constant 0.000000e+00 : f32
    %231 = vector.broadcast %cst_75 : f32 to vector<2x7xf32>
    %232 = arith.select %230, %209, %231 : vector<2x7xi1>, vector<2x7xf32>
    %cst_76 = arith.constant dense<0.000000e+00> : vector<2xf32>
    %233 = vector.multi_reduction <add>, %232, %cst_76 [1] : vector<2x7xf32> to vector<2xf32>
    %234 = vector.shape_cast %233 : vector<2xf32> to vector<2x1xf32>
    %c0_77 = arith.constant 0 : index
    %c0_78 = arith.constant 0 : index
    %235 = vector.load %arg5[%c0_77, %c0_78] : memref<2x1xi32, #tpu.memory_space<vmem>>, vector<2x1xi32>
    tpu.vector_store %arg5[%c0_77, %c0_78], %220 {strides = array<i32>} : memref<2x1xi32, #tpu.memory_space<vmem>>, vector<2x1xi32>,
    %236 = arith.subf %227, %234 : vector<2x1xf32>
    %237 = vector.shape_cast %236 : vector<2x1xf32> to vector<1x2x1xf32>
    %cst_79 = arith.constant dense<0.000000e+00> : vector<1xf32>
    %238 = vector.multi_reduction <add>, %237, %cst_79 [1, 2] : vector<1x2x1xf32> to vector<1xf32>
    %239 = vector.shape_cast %238 : vector<1xf32> to vector<1x1x1xf32>
    %240 = vector.extract %239[0, 0, 0] : f32 from vector<1x1x1xf32>
    %cst_80 = arith.constant 2.000000e+00 : f32
    %241 = arith.divf %240, %cst_80 : f32
    %242 = vector.broadcast %241 : f32 to vector<1x1xf32>
    %c0_81 = arith.constant 0 : index
    %c0_82 = arith.constant 0 : index
    %243 = vector.load %arg6[%c0_81, %c0_82] : memref<1x1xf32, #tpu.memory_space<vmem>>, vector<1x1xf32>
    tpu.vector_store %arg6[%c0_81, %c0_82], %242 {strides = array<i32>} : memref<1x1xf32, #tpu.memory_space<vmem>>, vector<1x1xf32>,
    return
  }
  func.func @transform_0(%arg0: i32) -> (i32, i32, i32) {
    %c0_i32 = arith.constant 0 : i32
    %c0_i32_0 = arith.constant 0 : i32
    %c0_i32_1 = arith.constant 0 : i32
    %c0_i32_2 = arith.constant 0 : i32
    return %c0_i32, %c0_i32_0, %c0_i32_1 : i32, i32, i32
  }
  func.func @transform_1(%arg0: i32) -> (i32, i32) {
    %c0_i32 = arith.constant 0 : i32
    %c0_i32_0 = arith.constant 0 : i32
    %c0_i32_1 = arith.constant 0 : i32
    return %c0_i32, %c0_i32_0 : i32, i32
  }
  func.func @transform_2(%arg0: i32) -> (i32, i32) {
    %c0_i32 = arith.constant 0 : i32
    %c0_i32_0 = arith.constant 0 : i32
    %c0_i32_1 = arith.constant 0 : i32
    return %c0_i32, %c0_i32_0 : i32, i32
  }
  func.func @transform_3(%arg0: i32) -> (i32, i32) {
    %c0_i32 = arith.constant 0 : i32
    %c0_i32_0 = arith.constant 0 : i32
    %c0_i32_1 = arith.constant 0 : i32
    return %c0_i32, %c0_i32_0 : i32, i32
  }
  func.func @transform_4(%arg0: i32) -> (i32, i32) {
    %c0_i32 = arith.constant 0 : i32
    %c0_i32_0 = arith.constant 0 : i32
    %c0_i32_1 = arith.constant 0 : i32
    return %c0_i32, %c0_i32_0 : i32, i32
  }
  func.func @transform_5(%arg0: i32) -> (i32, i32) {
    %c0_i32 = arith.constant 0 : i32
    %c0_i32_0 = arith.constant 0 : i32
    %c0_i32_1 = arith.constant 0 : i32
    return %c0_i32, %c0_i32_0 : i32, i32
  }
}

</mosaic_0001>

<llo_original>
// kernel: forward.1
$region0: #{forward.1}
  #allocation0 [shape = 'u32[]', space=smem, size = 0x4, offset = 0x4, fixed_abs, tag = 'smem constant byte address 0x4 - core index']
  #allocation1 [shape = 'u32[72,128]{1,0:T(1,128)}', space=vmem, size = 0x9000, scoped, tag = 'internal scratch']
  %s0 = inlined_call_operand.vmem [shape: f32[2,27,102], index: 0, kind: input, shape index: {}]
  %s1 = inlined_call_operand.vmem [shape: s32[2,1], index: 1, kind: input, shape index: {}]
  %s2 = inlined_call_operand.vmem [shape: f32[946,64], index: 2, kind: input, shape index: {}]
  %s3 = inlined_call_operand.vmem [shape: f32[12,64], index: 3, kind: input, shape index: {}]
  %s4 = inlined_call_operand.vmem [shape: s32[2,1], index: 4, kind: output, shape index: {0}]
  %s5 = inlined_call_operand.hbm [shape: f32[1,1], index: 5, kind: output, shape index: {1}]
  %6 = xla_tuple %s4, %s5
  %s7 = sld [smem:[#allocation0]]
  $region34: #{forward.1} parent=0
    _
  %s9 = ssub.s32 1, %s7
  %s10 = scalar_select 0, %s9, %s7
  $region1: #{forward.1} parent=0
    #allocation2 [shape = 'u8[512]{0}', space=vmem, size = 0x400, scoped, tag = 'output window, operand 1, single buffered']
    #allocation3 [shape = 's32[1]{0}', space=sflag, size = 0x4, scoped, tag = 'scoped memory for forward.1']
    %11 = vsyncpa [#allocation3], 0
    // Predicated region
    $region2: #{forward.1} parent=1 // pred_check
      _
    $region3: #{forward.1} parent=1 // pred_check_branch
      %13 = sbr.rel (0) target = $region5
    $region4: #{forward.1} parent=1 // pred_region
      _
    $region5: #{forward.1} parent=1 // pred_fallthru
      _
    // Predicated region
    $region6: #{forward.1} parent=1 // pred_check
      _
    $region7: #{forward.1} parent=1 // pred_check_branch
      %15 = sbr.rel (0) target = $region9
    $region8: #{forward.1} parent=1 // pred_region
      _
    $region9: #{forward.1} parent=1 // pred_fallthru
      _
    // Predicated region
    $region10: #{forward.1} parent=1 // pred_check
      _
    $region11: #{forward.1} parent=1 // pred_check_branch
      %17 = sbr.rel (0) target = $region13
    $region12: #{forward.1} parent=1 // pred_region
      _
    $region13: #{forward.1} parent=1 // pred_fallthru
      _
    // Predicated region
    $region14: #{forward.1} parent=1 // pred_check
      _
    $region15: #{forward.1} parent=1 // pred_check_branch
      %19 = sbr.rel (0) target = $region17
    $region16: #{forward.1} parent=1 // pred_region
      _
    $region17: #{forward.1} parent=1 // pred_fallthru
      _
    %v20 = vld [vmem:[%s0] sm:$0xff]
    %v21 = vld [vmem:[%s0 + $0x8] sm:$0xff]
    %v22 = vld [vmem:[%s0 + $0x10] sm:$0xff]
    %v23 = vld [vmem:[%s0 + $0x18] sm:$0x7]
    %v24 = vld [vmem:[%s0 + $0x20] sm:$0xff]
    %v25 = vld [vmem:[%s0 + $0x28] sm:$0xff]
    %v26 = vld [vmem:[%s0 + $0x30] sm:$0xff]
    %v27 = vld [vmem:[%s0 + $0x38] sm:$0x7]
    %vm36 = vcmask 1046528
    %v37 = vrot.slane %v20, 1
    %v38 = vrot.slane %v21, 1
    %v39 = vsel %vm36, %v37, %v38
    %v40 = vrot.slane %v22, 1
    %v41 = vsel %vm36, %v38, %v40
    %v42 = vrot.slane %v23, 1
    %v43 = vsel %vm36, %v40, %v42
    %v44 = vrot.slane %v24, 1
    %v45 = vrot.slane %v25, 1
    %v46 = vsel %vm36, %v44, %v45
    %v47 = vrot.slane %v26, 1
    %v48 = vsel %vm36, %v45, %v47
    %v49 = vrot.slane %v27, 1
    %v50 = vsel %vm36, %v47, %v49
    %51 = vrot.lane.b32.xlu0 %v39, 102
    %v52 = vpop.permute.xlu0 %51
    %53 = vrot.lane.b32.xlu0 %v41, 102
    %v54 = vpop.permute.xlu0 %53
    %55 = vrot.lane.b32.xlu0 %v43, 102
    %v56 = vpop.permute.xlu0 %55
    %57 = vrot.lane.b32.xlu0 %v42, 102
    %v58 = vpop.permute.xlu0 %57
    %59 = vrot.lane.b32.xlu0 %v46, 102
    %v60 = vpop.permute.xlu0 %59
    %61 = vrot.lane.b32.xlu0 %v48, 102
    %v62 = vpop.permute.xlu0 %61
    %63 = vrot.lane.b32.xlu0 %v50, 102
    %v64 = vpop.permute.xlu0 %63
    %65 = vrot.lane.b32.xlu0 %v49, 102
    %v66 = vpop.permute.xlu0 %65
    %vm75 = vcmask 1045504
    %v76 = vrot.slane %v20, 2
    %v77 = vrot.slane %v21, 2
    %v78 = vsel %vm75, %v76, %v77
    %v79 = vrot.slane %v22, 2
    %v80 = vsel %vm75, %v77, %v79
    %v81 = vrot.slane %v23, 2
    %v82 = vsel %vm75, %v79, %v81
    %v83 = vrot.slane %v24, 2
    %v84 = vrot.slane %v25, 2
    %v85 = vsel %vm75, %v83, %v84
    %v86 = vrot.slane %v26, 2
    %v87 = vsel %vm75, %v84, %v86
    %v88 = vrot.slane %v27, 2
    %v89 = vsel %vm75, %v86, %v88
    %90 = vrot.lane.b32.xlu0 %v78, 76
    %v91 = vpop.permute.xlu0 %90
    %92 = vrot.lane.b32.xlu0 %v80, 76
    %v93 = vpop.permute.xlu0 %92
    %94 = vrot.lane.b32.xlu0 %v82, 76
    %v95 = vpop.permute.xlu0 %94
    %96 = vrot.lane.b32.xlu0 %v81, 76
    %v97 = vpop.permute.xlu0 %96
    %98 = vrot.lane.b32.xlu0 %v85, 76
    %v99 = vpop.permute.xlu0 %98
    %100 = vrot.lane.b32.xlu0 %v87, 76
    %v101 = vpop.permute.xlu0 %100
    %102 = vrot.lane.b32.xlu0 %v89, 76
    %v103 = vpop.permute.xlu0 %102
    %104 = vrot.lane.b32.xlu0 %v88, 76
    %v105 = vpop.permute.xlu0 %104
    %vm114 = vcmask 834560
    %v115 = vsel %vm114, %v20, %v52
    %v116 = vsel %vm114, %v21, %v54
    %v117 = vsel %vm114, %v22, %v56
    %v118 = vsel %vm114, %v23, %v58
    %v119 = vsel %vm114, %v24, %v60
    %v120 = vsel %vm114, %v25, %v62
    %v121 = vsel %vm114, %v26, %v64
    %v122 = vsel %vm114, %v27, %v66
    %vm123 = vcmask 621568
    %v124 = vsel %vm123, %v52, %v91
    %v125 = vsel %vm123, %v54, %v93
    %v126 = vsel %vm123, %v56, %v95
    %v127 = vsel %vm123, %v58, %v97
    %v128 = vsel %vm123, %v60, %v99
    %v129 = vsel %vm123, %v62, %v101
    %v130 = vsel %vm123, %v64, %v103
    %v131 = vsel %vm123, %v66, %v105
    %v148 = vrot.slane %v124, 7
    %v149 = vrot.slane %v91, 6
    %v150 = vrot.slane %v125, 7
    %v151 = vrot.slane %v93, 6
    %v152 = vrot.slane %v126, 7
    %v153 = vrot.slane %v95, 6
    %v154 = vrot.slane %v127, 7
    %v155 = vrot.slane %v97, 6
    %v156 = vrot.slane %v128, 7
    %v157 = vrot.slane %v99, 6
    %v158 = vrot.slane %v129, 7
    %v159 = vrot.slane %v101, 6
    %v160 = vrot.slane %v130, 7
    %v161 = vrot.slane %v103, 6
    %v162 = vrot.slane %v131, 7
    %v163 = vrot.slane %v105, 6
    %vm164 = vcmask 1040384
    %v165 = vsel %vm164, %v115, %v148
    %vm166 = vcmask 1041408
    %v167 = vsel %vm166, %v165, %v149
    %vm168 = vcmask 1041409
    %v169 = vsel %vm168, %v115, %v148
    %vm170 = vcmask 1042433
    %v171 = vsel %vm170, %v169, %v149
    %v172 = vrot.slane %v171, 1
    %vm173 = vcmask 1042434
    %v174 = vsel %vm173, %v115, %v148
    %vm175 = vcmask 1043458
    %v176 = vsel %vm175, %v174, %v149
    %v177 = vrot.slane %v176, 2
    %vm178 = vcmask 1043459
    %v179 = vsel %vm178, %v115, %v148
    %vm180 = vcmask 1044483
    %v181 = vsel %vm180, %v179, %v149
    %v182 = vrot.slane %v181, 3
    %vm183 = vcmask 1044484
    %v184 = vsel %vm183, %v115, %v148
    %vm185 = vcmask 1045508
    %v186 = vsel %vm185, %v184, %v149
    %v187 = vrot.slane %v186, 4
    %vm188 = vcmask 1045509
    %v189 = vsel %vm188, %v115, %v148
    %vm190 = vcmask 1046533
    %v191 = vsel %vm190, %v189, %v149
    %v192 = vrot.slane %v191, 5
    %vm193 = vcmask 1046534
    %v194 = vsel %vm193, %v115, %v148
    %v195 = vsel %vm75, %v149, %v194
    %v196 = vrot.slane %v195, 6
    %v197 = vsel %vm36, %v148, %v115
    %vm198 = vcmask 1046529
    %v199 = vsel %vm198, %v149, %v197
    %v200 = vrot.slane %v199, 7
    %v201 = vsel %vm164, %v116, %v150
    %v202 = vsel %vm166, %v201, %v151
    %v203 = vsel %vm168, %v116, %v150
    %v204 = vsel %vm170, %v203, %v151
    %v205 = vrot.slane %v204, 1
    %v206 = vsel %vm173, %v116, %v150
    %v207 = vsel %vm175, %v206, %v151
    %v208 = vrot.slane %v207, 2
    %v209 = vsel %vm178, %v116, %v150
    %v210 = vsel %vm180, %v209, %v151
    %v211 = vrot.slane %v210, 3
    %v212 = vsel %vm183, %v116, %v150
    %v213 = vsel %vm185, %v212, %v151
    %v214 = vrot.slane %v213, 4
    %v215 = vsel %vm188, %v116, %v150
    %v216 = vsel %vm190, %v215, %v151
    %v217 = vrot.slane %v216, 5
    %v218 = vsel %vm193, %v116, %v150
    %v219 = vsel %vm75, %v151, %v218
    %v220 = vrot.slane %v219, 6
    %v221 = vsel %vm36, %v150, %v116
    %v222 = vsel %vm198, %v151, %v221
    %v223 = vrot.slane %v222, 7
    %v224 = vsel %vm164, %v117, %v152
    %v225 = vsel %vm166, %v224, %v153
    %v226 = vsel %vm168, %v117, %v152
    %v227 = vsel %vm170, %v226, %v153
    %v228 = vrot.slane %v227, 1
    %v229 = vsel %vm173, %v117, %v152
    %v230 = vsel %vm175, %v229, %v153
    %v231 = vrot.slane %v230, 2
    %v232 = vsel %vm178, %v117, %v152
    %v233 = vsel %vm180, %v232, %v153
    %v234 = vrot.slane %v233, 3
    %v235 = vsel %vm183, %v117, %v152
    %v236 = vsel %vm185, %v235, %v153
    %v237 = vrot.slane %v236, 4
    %v238 = vsel %vm188, %v117, %v152
    %v239 = vsel %vm190, %v238, %v153
    %v240 = vrot.slane %v239, 5
    %v241 = vsel %vm193, %v117, %v152
    %v242 = vsel %vm75, %v153, %v241
    %v243 = vrot.slane %v242, 6
    %v244 = vsel %vm36, %v152, %v117
    %v245 = vsel %vm198, %v153, %v244
    %v246 = vrot.slane %v245, 7
    %v247 = vsel %vm164, %v118, %v154
    %v248 = vsel %vm166, %v247, %v155
    %v249 = vsel %vm164, %v119, %v156
    %v250 = vsel %vm166, %v249, %v157
    %v251 = vsel %vm168, %v119, %v156
    %v252 = vsel %vm170, %v251, %v157
    %v253 = vrot.slane %v252, 1
    %v254 = vsel %vm173, %v119, %v156
    %v255 = vsel %vm175, %v254, %v157
    %v256 = vrot.slane %v255, 2
    %v257 = vsel %vm178, %v119, %v156
    %v258 = vsel %vm180, %v257, %v157
    %v259 = vrot.slane %v258, 3
    %v260 = vsel %vm183, %v119, %v156
    %v261 = vsel %vm185, %v260, %v157
    %v262 = vrot.slane %v261, 4
    %v263 = vsel %vm188, %v119, %v156
    %v264 = vsel %vm190, %v263, %v157
    %v265 = vrot.slane %v264, 5
    %v266 = vsel %vm193, %v119, %v156
    %v267 = vsel %vm75, %v157, %v266
    %v268 = vrot.slane %v267, 6
    %v269 = vsel %vm36, %v156, %v119
    %v270 = vsel %vm198, %v157, %v269
    %v271 = vrot.slane %v270, 7
    %v272 = vsel %vm164, %v120, %v158
    %v273 = vsel %vm166, %v272, %v159
    %v274 = vsel %vm168, %v120, %v158
    %v275 = vsel %vm170, %v274, %v159
    %v276 = vrot.slane %v275, 1
    %v277 = vsel %vm173, %v120, %v158
    %v278 = vsel %vm175, %v277, %v159
    %v279 = vrot.slane %v278, 2
    %v280 = vsel %vm178, %v120, %v158
    %v281 = vsel %vm180, %v280, %v159
    %v282 = vrot.slane %v281, 3
    %v283 = vsel %vm183, %v120, %v158
    %v284 = vsel %vm185, %v283, %v159
    %v285 = vrot.slane %v284, 4
    %v286 = vsel %vm188, %v120, %v158
    %v287 = vsel %vm190, %v286, %v159
    %v288 = vrot.slane %v287, 5
    %v289 = vsel %vm193, %v120, %v158
    %v290 = vsel %vm75, %v159, %v289
    %v291 = vrot.slane %v290, 6
    %v292 = vsel %vm36, %v158, %v120
    %v293 = vsel %vm198, %v159, %v292
    %v294 = vrot.slane %v293, 7
    %v295 = vsel %vm164, %v121, %v160
    %v296 = vsel %vm166, %v295, %v161
    %v297 = vsel %vm168, %v121, %v160
    %v298 = vsel %vm170, %v297, %v161
    %v299 = vrot.slane %v298, 1
    %v300 = vsel %vm173, %v121, %v160
    %v301 = vsel %vm175, %v300, %v161
    %v302 = vrot.slane %v301, 2
    %v303 = vsel %vm178, %v121, %v160
    %v304 = vsel %vm180, %v303, %v161
    %v305 = vrot.slane %v304, 3
    %v306 = vsel %vm183, %v121, %v160
    %v307 = vsel %vm185, %v306, %v161
    %v308 = vrot.slane %v307, 4
    %v309 = vsel %vm188, %v121, %v160
    %v310 = vsel %vm190, %v309, %v161
    %v311 = vrot.slane %v310, 5
    %v312 = vsel %vm193, %v121, %v160
    %v313 = vsel %vm75, %v161, %v312
    %v314 = vrot.slane %v313, 6
    %v315 = vsel %vm36, %v160, %v121
    %v316 = vsel %vm198, %v161, %v315
    %v317 = vrot.slane %v316, 7
    %v318 = vsel %vm164, %v122, %v162
    %v319 = vsel %vm166, %v318, %v163
    %v320 = vld [vmem:[%s2] sm:$0xff]
    %v321 = vld [vmem:[%s2 + $0x8] sm:$0xff]
    %v322 = vld [vmem:[%s2 + $0x10] sm:$0xff]
    %v323 = vld [vmem:[%s2 + $0x18] sm:$0xff]
    %v324 = vld [vmem:[%s2 + $0x20] sm:$0xff]
    %v325 = vld [vmem:[%s2 + $0x28] sm:$0xff]
    %v326 = vld [vmem:[%s2 + $0x30] sm:$0xff]
    %v327 = vld [vmem:[%s2 + $0x38] sm:$0xff]
    %v328 = vld [vmem:[%s2 + $0x40] sm:$0xff]
    %v329 = vld [vmem:[%s2 + $0x48] sm:$0xff]
    %v330 = vld [vmem:[%s2 + $0x50] sm:$0xff]
    %v331 = vld [vmem:[%s2 + $0x58] sm:$0xff]
    %v332 = vld [vmem:[%s2 + $0x60] sm:$0xff]
    %v333 = vld [vmem:[%s2 + $0x68] sm:$0xff]
    %v334 = vld [vmem:[%s2 + $0x70] sm:$0xff]
    %v335 = vld [vmem:[%s2 + $0x78] sm:$0xff]
    %v336 = vld [vmem:[%s2 + $0x80] sm:$0xff]
    %v337 = vld [vmem:[%s2 + $0x88] sm:$0xff]
    %v338 = vld [vmem:[%s2 + $0x90] sm:$0xff]
    %v339 = vld [vmem:[%s2 + $0x98] sm:$0xff]
    %v340 = vld [vmem:[%s2 + $0xa0] sm:$0xff]
    %v341 = vld [vmem:[%s2 + $0xa8] sm:$0xff]
    %v342 = vld [vmem:[%s2 + $0xb0] sm:$0xff]
    %v343 = vld [vmem:[%s2 + $0xb8] sm:$0xff]
    %v344 = vld [vmem:[%s2 + $0xc0] sm:$0xff]
    %v345 = vld [vmem:[%s2 + $0xc8] sm:$0xff]
    %v346 = vld [vmem:[%s2 + $0xd0] sm:$0xff]
    %v347 = vld [vmem:[%s2 + $0xd8] sm:$0xff]
    %v348 = vld [vmem:[%s2 + $0xe0] sm:$0xff]
    %v349 = vld [vmem:[%s2 + $0xe8] sm:$0xff]
    %v350 = vld [vmem:[%s2 + $0xf0] sm:$0xff]
    %v351 = vld [vmem:[%s2 + $0xf8] sm:$0xff]
    %v352 = vld [vmem:[%s2 + $0x100] sm:$0xff]
    %v353 = vld [vmem:[%s2 + $0x108] sm:$0xff]
    %v354 = vld [vmem:[%s2 + $0x110] sm:$0xff]
    %v355 = vld [vmem:[%s2 + $0x118] sm:$0xff]
    %v356 = vld [vmem:[%s2 + $0x120] sm:$0xff]
    %v357 = vld [vmem:[%s2 + $0x128] sm:$0xff]
    %v358 = vld [vmem:[%s2 + $0x130] sm:$0x3]
    %359 = vst [vmem:[#allocation1] ss:$9 sm:$0xff] %v167
    %s360 = scalar_lea.vmem [#allocation1], 1
    %361 = vst [vmem:[%s360] ss:$9 sm:$0xff] %v172
    %s362 = scalar_lea.vmem [#allocation1], 2
    %363 = vst [vmem:[%s362] ss:$9 sm:$0xff] %v177
    %s364 = scalar_lea.vmem [#allocation1], 3
    %365 = vst [vmem:[%s364] ss:$9 sm:$0xff] %v182
    %s366 = scalar_lea.vmem [#allocation1], 4
    %367 = vst [vmem:[%s366] ss:$9 sm:$0xff] %v187
    %s368 = scalar_lea.vmem [#allocation1], 5
    %369 = vst [vmem:[%s368] ss:$9 sm:$0xff] %v192
    %s370 = scalar_lea.vmem [#allocation1], 6
    %371 = vst [vmem:[%s370] ss:$9 sm:$0xff] %v196
    %s372 = scalar_lea.vmem [#allocation1], 7
    %373 = vst [vmem:[%s372] ss:$9 sm:$0xff] %v200
    %v374 = vld [vmem:[#allocation1] sm:$0xff]
    %v375 = vld [vmem:[#allocation1 + $0x9] sm:$0xff]
    %v376 = vld [vmem:[#allocation1 + $0x12] sm:$0xff]
    %377 = vst [vmem:[#allocation1] ss:$9 sm:$0xff] %v202
    %378 = vst [vmem:[%s360] ss:$9 sm:$0xff] %v205
    %379 = vst [vmem:[%s362] ss:$9 sm:$0xff] %v208
    %380 = vst [vmem:[%s364] ss:$9 sm:$0xff] %v211
    %381 = vst [vmem:[%s366] ss:$9 sm:$0xff] %v214
    %382 = vst [vmem:[%s368] ss:$9 sm:$0xff] %v217
    %383 = vst [vmem:[%s370] ss:$9 sm:$0xff] %v220
    %384 = vst [vmem:[%s372] ss:$9 sm:$0xff] %v223
    %v385 = vld [vmem:[#allocation1] sm:$0xff]
    %v386 = vld [vmem:[#allocation1 + $0x9] sm:$0xff]
    %v387 = vld [vmem:[#allocation1 + $0x12] sm:$0xff]
    %388 = vst [vmem:[#allocation1] ss:$9 sm:$0xff] %v225
    %389 = vst [vmem:[%s360] ss:$9 sm:$0xff] %v228
    %390 = vst [vmem:[%s362] ss:$9 sm:$0xff] %v231
    %391 = vst [vmem:[%s364] ss:$9 sm:$0xff] %v234
    %392 = vst [vmem:[%s366] ss:$9 sm:$0xff] %v237
    %393 = vst [vmem:[%s368] ss:$9 sm:$0xff] %v240
    %394 = vst [vmem:[%s370] ss:$9 sm:$0xff] %v243
    %395 = vst [vmem:[%s372] ss:$9 sm:$0xff] %v246
    %v396 = vld [vmem:[#allocation1] sm:$0xff]
    %v397 = vld [vmem:[#allocation1 + $0x9] sm:$0xff]
    %v398 = vld [vmem:[#allocation1 + $0x12] sm:$0xff]
    %399 = vst [vmem:[#allocation1] ss:$9 sm:$0xff] %v248
    %400 = vst [vmem:[%s360] ss:$9 sm:$0xff] %v250
    %401 = vst [vmem:[%s362] ss:$9 sm:$0xff] %v253
    %402 = vst [vmem:[%s364] ss:$9 sm:$0xff] %v256
    %403 = vst [vmem:[%s366] ss:$9 sm:$0xff] %v259
    %404 = vst [vmem:[%s368] ss:$9 sm:$0xff] %v262
    %405 = vst [vmem:[%s370] ss:$9 sm:$0xff] %v265
    %406 = vst [vmem:[%s372] ss:$9 sm:$0xff] %v268
    %v407 = vld [vmem:[#allocation1] sm:$0xff]
    %v408 = vld [vmem:[#allocation1 + $0x9] sm:$0xff]
    %v409 = vld [vmem:[#allocation1 + $0x12] sm:$0xff]
    %410 = vst [vmem:[#allocation1] ss:$9 sm:$0xff] %v271
    %411 = vst [vmem:[%s360] ss:$9 sm:$0xff] %v273
    %412 = vst [vmem:[%s362] ss:$9 sm:$0xff] %v276
    %413 = vst [vmem:[%s364] ss:$9 sm:$0xff] %v279
    %414 = vst [vmem:[%s366] ss:$9 sm:$0xff] %v282
    %415 = vst [vmem:[%s368] ss:$9 sm:$0xff] %v285
    %416 = vst [vmem:[%s370] ss:$9 sm:$0xff] %v288
    %417 = vst [vmem:[%s372] ss:$9 sm:$0xff] %v291
    %v418 = vld [vmem:[#allocation1] sm:$0xff]
    %v419 = vld [vmem:[#allocation1 + $0x9] sm:$0xff]
    %v420 = vld [vmem:[#allocation1 + $0x12] sm:$0xff]
    %421 = vst [vmem:[#allocation1] ss:$9 sm:$0xff] %v294
    %422 = vst [vmem:[%s360] ss:$9 sm:$0xff] %v296
    %423 = vst [vmem:[%s362] ss:$9 sm:$0xff] %v299
    %424 = vst [vmem:[%s364] ss:$9 sm:$0xff] %v302
    %425 = vst [vmem:[%s366] ss:$9 sm:$0xff] %v305
    %426 = vst [vmem:[%s368] ss:$9 sm:$0xff] %v308
    %427 = vst [vmem:[%s370] ss:$9 sm:$0xff] %v311
    %428 = vst [vmem:[%s372] ss:$9 sm:$0xff] %v314
    %v429 = vld [vmem:[#allocation1] sm:$0xff]
    %v430 = vld [vmem:[#allocation1 + $0x9] sm:$0xff]
    %v431 = vld [vmem:[#allocation1 + $0x12] sm:$0xff]
    %432 = vst [vmem:[#allocation1] ss:$9 sm:$0xff] %v317
    %433 = vst [vmem:[%s360] ss:$9 sm:$0xff] %v319
    %v434 = vld [vmem:[#allocation1] sm:$0xff]
    %v435 = vld [vmem:[#allocation1 + $0x9] sm:$0xff]
    %v436 = vld [vmem:[#allocation1 + $0x12] sm:$0xff]
    %vm451 = vcmask 408576
    %v452 = vsel %vm451, %v376, 0
    %v454 = vsel %vm451, %v387, 0
    %v456 = vsel %vm451, %v398, 0
    %v458 = vsel %vm451, %v409, 0
    %v460 = vsel %vm451, %v420, 0
    %v462 = vsel %vm451, %v431, 0
    %v464 = vsel %vm451, %v436, 0
    %v467 = vsel %vm166, %v358, 0
    %469 = vmatpush.msra.mxu0 %v335
    %470 = vmatpush.msra.mxu0 %v334
    %471 = vmatpush.msra.mxu0 %v333
    %472 = vmatpush.msra.mxu0 %v332
    %473 = vmatpush.msra.mxu0 %v331
    %474 = vmatpush.msra.mxu0 %v330
    %475 = vmatpush.msra.mxu0 %v329
    %476 = vmatpush.msra.mxu0 %v328
    %477 = vmatpush.msra.mxu0 %v327
    %478 = vmatpush.msra.mxu0 %v326
    %479 = vmatpush.msra.mxu0 %v325
    %480 = vmatpush.msra.mxu0 %v324
    %481 = vmatpush.msra.mxu0 %v323
    %482 = vmatpush.msra.mxu0 %v322
    %483 = vmatpush.msra.mxu0 %v321
    %484 = vmatpush.msra.mxu0 %v320
    %485 = vmatmul.f32.gmra.mxu0 %v374
    %v486 = vpop.f32.mrf.mxu0
    %v487 = vadd.f32 0.0, %v486
    %488 = vmatmul.f32.gmra.mxu0 %v385
    %v489 = vpop.f32.mrf.mxu0
    %v490 = vadd.f32 0.0, %v489
    %491 = vmatmul.f32.gmra.mxu0 %v396
    %v492 = vpop.f32.mrf.mxu0
    %v493 = vadd.f32 0.0, %v492
    %494 = vmatmul.f32.gmra.mxu0 %v407
    %v495 = vpop.f32.mrf.mxu0
    %v496 = vadd.f32 0.0, %v495
    %497 = vmatmul.f32.gmra.mxu0 %v418
    %v498 = vpop.f32.mrf.mxu0
    %v499 = vadd.f32 0.0, %v498
    %500 = vmatmul.f32.gmra.mxu0 %v429
    %v501 = vpop.f32.mrf.mxu0
    %v502 = vadd.f32 0.0, %v501
    %503 = vmatmul.f32.gmra.mxu0 %v434
    %v504 = vpop.f32.mrf.mxu0
    %v505 = vadd.f32 0.0, %v504
    %506 = vdwg.mxu0
    %507 = vmatpush.msra.mxu0 %v351
    %508 = vmatpush.msra.mxu0 %v350
    %509 = vmatpush.msra.mxu0 %v349
    %510 = vmatpush.msra.mxu0 %v348
    %511 = vmatpush.msra.mxu0 %v347
    %512 = vmatpush.msra.mxu0 %v346
    %513 = vmatpush.msra.mxu0 %v345
    %514 = vmatpush.msra.mxu0 %v344
    %515 = vmatpush.msra.mxu0 %v343
    %516 = vmatpush.msra.mxu0 %v342
    %517 = vmatpush.msra.mxu0 %v341
    %518 = vmatpush.msra.mxu0 %v340
    %519 = vmatpush.msra.mxu0 %v339
    %520 = vmatpush.msra.mxu0 %v338
    %521 = vmatpush.msra.mxu0 %v337
    %522 = vmatpush.msra.mxu0 %v336
    %523 = vmatmul.f32.gmra.mxu0 %v375
    %v524 = vpop.f32.mrf.mxu0
    %v525 = vadd.f32 %v487, %v524
    %526 = vmatmul.f32.gmra.mxu0 %v386
    %v527 = vpop.f32.mrf.mxu0
    %v528 = vadd.f32 %v490, %v527
    %529 = vmatmul.f32.gmra.mxu0 %v397
    %v530 = vpop.f32.mrf.mxu0
    %v531 = vadd.f32 %v493, %v530
    %532 = vmatmul.f32.gmra.mxu0 %v408
    %v533 = vpop.f32.mrf.mxu0
    %v534 = vadd.f32 %v496, %v533
    %535 = vmatmul.f32.gmra.mxu0 %v419
    %v536 = vpop.f32.mrf.mxu0
    %v537 = vadd.f32 %v499, %v536
    %538 = vmatmul.f32.gmra.mxu0 %v430
    %v539 = vpop.f32.mrf.mxu0
    %v540 = vadd.f32 %v502, %v539
    %541 = vmatmul.f32.gmra.mxu0 %v435
    %v542 = vpop.f32.mrf.mxu0
    %v543 = vadd.f32 %v505, %v542
    %544 = vdwg.mxu0
    %545 = vmatpush.msra.mxu0 0.0
    %546 = vmatpush.msra.mxu0 0.0
    %547 = vmatpush.msra.mxu0 0.0
    %548 = vmatpush.msra.mxu0 0.0
    %549 = vmatpush.msra.mxu0 0.0
    %550 = vmatpush.msra.mxu0 0.0
    %551 = vmatpush.msra.mxu0 0.0
    %552 = vmatpush.msra.mxu0 0.0
    %553 = vmatpush.msra.mxu0 0.0
    %554 = vmatpush.msra.mxu0 %v467
    %555 = vmatpush.msra.mxu0 %v357
    %556 = vmatpush.msra.mxu0 %v356
    %557 = vmatpush.msra.mxu0 %v355
    %558 = vmatpush.msra.mxu0 %v354
    %559 = vmatpush.msra.mxu0 %v353
    %560 = vmatpush.msra.mxu0 %v352
    %561 = vmatmul.f32.gmra.mxu0 %v452
    %v562 = vpop.f32.mrf.mxu0
    %v563 = vadd.f32 %v525, %v562
    %564 = vmatmul.f32.gmra.mxu0 %v454
    %v565 = vpop.f32.mrf.mxu0
    %v566 = vadd.f32 %v528, %v565
    %567 = vmatmul.f32.gmra.mxu0 %v456
    %v568 = vpop.f32.mrf.mxu0
    %v569 = vadd.f32 %v531, %v568
    %570 = vmatmul.f32.gmra.mxu0 %v458
    %v571 = vpop.f32.mrf.mxu0
    %v572 = vadd.f32 %v534, %v571
    %573 = vmatmul.f32.gmra.mxu0 %v460
    %v574 = vpop.f32.mrf.mxu0
    %v575 = vadd.f32 %v537, %v574
    %576 = vmatmul.f32.gmra.mxu0 %v462
    %v577 = vpop.f32.mrf.mxu0
    %v578 = vadd.f32 %v540, %v577
    %579 = vmatmul.f32.gmra.mxu0 %v464
    %v580 = vpop.f32.mrf.mxu0
    %v581 = vadd.f32 %v543, %v580
    %582 = vdwg.mxu0
    %v590 = vrot.slane %v563, 1
    %v591 = vrot.slane %v563, 2
    %v592 = vrot.slane %v563, 3
    %v593 = vrot.slane %v563, 4
    %v594 = vrot.slane %v563, 5
    %v595 = vrot.slane %v563, 6
    %v596 = vrot.slane %v563, 7
    %v597 = vrot.slane %v566, 1
    %v598 = vrot.slane %v566, 2
    %v599 = vrot.slane %v566, 3
    %v600 = vrot.slane %v566, 4
    %v601 = vrot.slane %v566, 5
    %v602 = vrot.slane %v566, 6
    %v603 = vrot.slane %v566, 7
    %v604 = vrot.slane %v569, 1
    %v605 = vrot.slane %v569, 2
    %v606 = vrot.slane %v569, 3
    %v607 = vrot.slane %v569, 4
    %v608 = vrot.slane %v569, 5
    %v609 = vrot.slane %v569, 6
    %v610 = vrot.slane %v569, 7
    %v611 = vrot.slane %v572, 1
    %v612 = vrot.slane %v572, 2
    %v613 = vrot.slane %v572, 3
    %v614 = vrot.slane %v572, 4
    %v615 = vrot.slane %v572, 5
    %v616 = vrot.slane %v572, 6
    %v617 = vrot.slane %v572, 7
    %v618 = vrot.slane %v575, 1
    %v619 = vrot.slane %v575, 2
    %v620 = vrot.slane %v575, 3
    %v621 = vrot.slane %v575, 4
    %v622 = vrot.slane %v575, 5
    %v623 = vrot.slane %v575, 6
    %v624 = vrot.slane %v575, 7
    %v625 = vrot.slane %v578, 1
    %v626 = vrot.slane %v578, 2
    %v627 = vrot.slane %v578, 3
    %v628 = vrot.slane %v578, 4
    %v629 = vrot.slane %v578, 5
    %v630 = vrot.slane %v578, 6
    %v631 = vrot.slane %v578, 7
    %v632 = vrot.slane %v581, 1
    %676 = vst [vmem:[#allocation1] ss:$9 sm:$0xff] %v563
    %s677 = scalar_lea.vmem [#allocation1], 1
    %678 = vst [vmem:[%s677] ss:$9 sm:$0xff] %v590
    %s679 = scalar_lea.vmem [#allocation1], 2
    %680 = vst [vmem:[%s679] ss:$9 sm:$0xff] %v591
    %s681 = scalar_lea.vmem [#allocation1], 3
    %682 = vst [vmem:[%s681] ss:$9 sm:$0xff] %v592
    %s683 = scalar_lea.vmem [#allocation1], 4
    %684 = vst [vmem:[%s683] ss:$9 sm:$0xff] %v593
    %s685 = scalar_lea.vmem [#allocation1], 5
    %686 = vst [vmem:[%s685] ss:$9 sm:$0xff] %v594
    %s687 = scalar_lea.vmem [#allocation1], 6
    %688 = vst [vmem:[%s687] ss:$9 sm:$0xff] %v595
    %s689 = scalar_lea.vmem [#allocation1], 7
    %690 = vst [vmem:[%s689] ss:$9 sm:$0xff] %v596
    %v691 = vld [vmem:[#allocation1] sm:$0xff]
    %692 = vst [vmem:[#allocation1] ss:$9 sm:$0xff] %v566
    %693 = vst [vmem:[%s677] ss:$9 sm:$0xff] %v597
    %694 = vst [vmem:[%s679] ss:$9 sm:$0xff] %v598
    %695 = vst [vmem:[%s681] ss:$9 sm:$0xff] %v599
    %696 = vst [vmem:[%s683] ss:$9 sm:$0xff] %v600
    %697 = vst [vmem:[%s685] ss:$9 sm:$0xff] %v601
    %698 = vst [vmem:[%s687] ss:$9 sm:$0xff] %v602
    %699 = vst [vmem:[%s689] ss:$9 sm:$0xff] %v603
    %v700 = vld [vmem:[#allocation1] sm:$0xff]
    %701 = vst [vmem:[#allocation1] ss:$9 sm:$0xff] %v569
    %702 = vst [vmem:[%s677] ss:$9 sm:$0xff] %v604
    %703 = vst [vmem:[%s679] ss:$9 sm:$0xff] %v605
    %704 = vst [vmem:[%s681] ss:$9 sm:$0xff] %v606
    %705 = vst [vmem:[%s683] ss:$9 sm:$0xff] %v607
    %706 = vst [vmem:[%s685] ss:$9 sm:$0xff] %v608
    %707 = vst [vmem:[%s687] ss:$9 sm:$0xff] %v609
    %708 = vst [vmem:[%s689] ss:$9 sm:$0xff] %v610
    %v709 = vld [vmem:[#allocation1] sm:$0xff]
    %710 = vst [vmem:[#allocation1] ss:$9 sm:$0xff] %v572
    %v711 = vld [vmem:[#allocation1] sm:$0xff]
    %712 = vst [vmem:[#allocation1] ss:$9 sm:$0xff] %v611
    %713 = vst [vmem:[%s677] ss:$9 sm:$0xff] %v612
    %714 = vst [vmem:[%s679] ss:$9 sm:$0xff] %v613
    %715 = vst [vmem:[%s681] ss:$9 sm:$0xff] %v614
    %716 = vst [vmem:[%s683] ss:$9 sm:$0xff] %v615
    %717 = vst [vmem:[%s685] ss:$9 sm:$0xff] %v616
    %718 = vst [vmem:[%s687] ss:$9 sm:$0xff] %v617
    %719 = vst [vmem:[%s689] ss:$9 sm:$0xff] %v575
    %v720 = vld [vmem:[#allocation1] sm:$0xff]
    %721 = vst [vmem:[#allocation1] ss:$9 sm:$0xff] %v618
    %722 = vst [vmem:[%s677] ss:$9 sm:$0xff] %v619
    %723 = vst [vmem:[%s679] ss:$9 sm:$0xff] %v620
    %724 = vst [vmem:[%s681] ss:$9 sm:$0xff] %v621
    %725 = vst [vmem:[%s683] ss:$9 sm:$0xff] %v622
    %726 = vst [vmem:[%s685] ss:$9 sm:$0xff] %v623
    %727 = vst [vmem:[%s687] ss:$9 sm:$0xff] %v624
    %728 = vst [vmem:[%s689] ss:$9 sm:$0xff] %v578
    %v729 = vld [vmem:[#allocation1] sm:$0xff]
    %730 = vst [vmem:[#allocation1] ss:$9 sm:$0xff] %v625
    %731 = vst [vmem:[%s677] ss:$9 sm:$0xff] %v626
    %732 = vst [vmem:[%s679] ss:$9 sm:$0xff] %v627
    %733 = vst [vmem:[%s681] ss:$9 sm:$0xff] %v628
    %734 = vst [vmem:[%s683] ss:$9 sm:$0xff] %v629
    %735 = vst [vmem:[%s685] ss:$9 sm:$0xff] %v630
    %736 = vst [vmem:[%s687] ss:$9 sm:$0xff] %v631
    %737 = vst [vmem:[%s689] ss:$9 sm:$0xff] %v581
    %v738 = vld [vmem:[#allocation1] sm:$0xff]
    %739 = vst [vmem:[#allocation1] ss:$9 sm:$0xff] %v632
    %v740 = vld [vmem:[#allocation1] sm:$0xff]
    %vm749 = vcmask 523264
    %v750 = vsel %vm749, %v691, 0.0
    %v751 = vsel %vm749, %v700, 0.0
    %v752 = vadd.f32 %v750, %v751
    %v753 = vsel %vm749, %v709, 0.0
    %v754 = vadd.f32 %v752, %v753
    %vm755 = vcmask 516096
    %v756 = vsel %vm755, %v711, 0.0
    %v757 = vadd.f32 %v754, %v756
    %v758 = vrot.slane %v757, 4
    %v759 = vadd.f32 %v757, %v758
    %v760 = vrot.slane %v759, 2
    %v761 = vadd.f32 %v759, %v760
    %v762 = vrot.slane %v761, 1
    %v763 = vadd.f32 %v761, %v762
    %v764 = vsel %vm749, %v720, 0.0
    %v765 = vsel %vm749, %v729, 0.0
    %v766 = vadd.f32 %v764, %v765
    %v767 = vsel %vm749, %v738, 0.0
    %v768 = vadd.f32 %v766, %v767
    %v769 = vsel %vm755, %v740, 0.0
    %v770 = vadd.f32 %v768, %v769
    %v771 = vrot.slane %v770, 4
    %v772 = vadd.f32 %v770, %v771
    %v773 = vrot.slane %v772, 2
    %v774 = vadd.f32 %v772, %v773
    %v775 = vrot.slane %v774, 1
    %v776 = vadd.f32 %v774, %v775
    %v777 = vsel %vm749, %v763, 0.0
    %v778 = vsel %vm749, %v776, 0.0
    %v779 = vadd.f32 %v777, %v778
    %v780 = vmul.f32 %v563, %v563
    %v781 = vmul.f32 %v590, %v590
    %v782 = vmul.f32 %v591, %v591
    %v783 = vmul.f32 %v592, %v592
    %v784 = vmul.f32 %v593, %v593
    %v785 = vmul.f32 %v594, %v594
    %v786 = vmul.f32 %v595, %v595
    %v787 = vmul.f32 %v596, %v596
    %v788 = vmul.f32 %v566, %v566
    %v789 = vmul.f32 %v597, %v597
    %v790 = vmul.f32 %v598, %v598
    %v791 = vmul.f32 %v599, %v599
    %v792 = vmul.f32 %v600, %v600
    %v793 = vmul.f32 %v601, %v601
    %v794 = vmul.f32 %v602, %v602
    %v795 = vmul.f32 %v603, %v603
    %v796 = vmul.f32 %v569, %v569
    %v797 = vmul.f32 %v604, %v604
    %v798 = vmul.f32 %v605, %v605
    %v799 = vmul.f32 %v606, %v606
    %v800 = vmul.f32 %v607, %v607
    %v801 = vmul.f32 %v608, %v608
    %v802 = vmul.f32 %v609, %v609
    %v803 = vmul.f32 %v610, %v610
    %v804 = vmul.f32 %v572, %v572
    %v805 = vmul.f32 %v611, %v611
    %v806 = vmul.f32 %v612, %v612
    %v807 = vmul.f32 %v613, %v613
    %v808 = vmul.f32 %v614, %v614
    %v809 = vmul.f32 %v615, %v615
    %v810 = vmul.f32 %v616, %v616
    %v811 = vmul.f32 %v617, %v617
    %v812 = vmul.f32 %v575, %v575
    %v813 = vmul.f32 %v618, %v618
    %v814 = vmul.f32 %v619, %v619
    %v815 = vmul.f32 %v620, %v620
    %v816 = vmul.f32 %v621, %v621
    %v817 = vmul.f32 %v622, %v622
    %v818 = vmul.f32 %v623, %v623
    %v819 = vmul.f32 %v624, %v624
    %v820 = vmul.f32 %v578, %v578
    %v821 = vmul.f32 %v625, %v625
    %v822 = vmul.f32 %v626, %v626
    %v823 = vmul.f32 %v627, %v627
    %v824 = vmul.f32 %v628, %v628
    %v825 = vmul.f32 %v629, %v629
    %v826 = vmul.f32 %v630, %v630
    %v827 = vmul.f32 %v631, %v631
    %v828 = vmul.f32 %v581, %v581
    %v829 = vmul.f32 %v632, %v632
    %880 = vst [vmem:[#allocation1] ss:$9 sm:$0xff] %v780
    %s881 = scalar_lea.vmem [#allocation1], 1
    %882 = vst [vmem:[%s881] ss:$9 sm:$0xff] %v781
    %s883 = scalar_lea.vmem [#allocation1], 2
    %884 = vst [vmem:[%s883] ss:$9 sm:$0xff] %v782
    %s885 = scalar_lea.vmem [#allocation1], 3
    %886 = vst [vmem:[%s885] ss:$9 sm:$0xff] %v783
    %s887 = scalar_lea.vmem [#allocation1], 4
    %888 = vst [vmem:[%s887] ss:$9 sm:$0xff] %v784
    %s889 = scalar_lea.vmem [#allocation1], 5
    %890 = vst [vmem:[%s889] ss:$9 sm:$0xff] %v785
    %s891 = scalar_lea.vmem [#allocation1], 6
    %892 = vst [vmem:[%s891] ss:$9 sm:$0xff] %v786
    %s893 = scalar_lea.vmem [#allocation1], 7
    %894 = vst [vmem:[%s893] ss:$9 sm:$0xff] %v787
    %v895 = vld [vmem:[#allocation1] sm:$0xff]
    %896 = vst [vmem:[#allocation1] ss:$9 sm:$0xff] %v788
    %897 = vst [vmem:[%s881] ss:$9 sm:$0xff] %v789
    %898 = vst [vmem:[%s883] ss:$9 sm:$0xff] %v790
    %899 = vst [vmem:[%s885] ss:$9 sm:$0xff] %v791
    %900 = vst [vmem:[%s887] ss:$9 sm:$0xff] %v792
    %901 = vst [vmem:[%s889] ss:$9 sm:$0xff] %v793
    %902 = vst [vmem:[%s891] ss:$9 sm:$0xff] %v794
    %903 = vst [vmem:[%s893] ss:$9 sm:$0xff] %v795
    %v904 = vld [vmem:[#allocation1] sm:$0xff]
    %905 = vst [vmem:[#allocation1] ss:$9 sm:$0xff] %v796
    %906 = vst [vmem:[%s881] ss:$9 sm:$0xff] %v797
    %907 = vst [vmem:[%s883] ss:$9 sm:$0xff] %v798
    %908 = vst [vmem:[%s885] ss:$9 sm:$0xff] %v799
    %909 = vst [vmem:[%s887] ss:$9 sm:$0xff] %v800
    %910 = vst [vmem:[%s889] ss:$9 sm:$0xff] %v801
    %911 = vst [vmem:[%s891] ss:$9 sm:$0xff] %v802
    %912 = vst [vmem:[%s893] ss:$9 sm:$0xff] %v803
    %v913 = vld [vmem:[#allocation1] sm:$0xff]
    %914 = vst [vmem:[#allocation1] ss:$9 sm:$0xff] %v804
    %v915 = vld [vmem:[#allocation1] sm:$0xff]
    %916 = vst [vmem:[#allocation1] ss:$9 sm:$0xff] %v805
    %917 = vst [vmem:[%s881] ss:$9 sm:$0xff] %v806
    %918 = vst [vmem:[%s883] ss:$9 sm:$0xff] %v807
    %919 = vst [vmem:[%s885] ss:$9 sm:$0xff] %v808
    %920 = vst [vmem:[%s887] ss:$9 sm:$0xff] %v809
    %921 = vst [vmem:[%s889] ss:$9 sm:$0xff] %v810
    %922 = vst [vmem:[%s891] ss:$9 sm:$0xff] %v811
    %923 = vst [vmem:[%s893] ss:$9 sm:$0xff] %v812
    %v924 = vld [vmem:[#allocation1] sm:$0xff]
    %925 = vst [vmem:[#allocation1] ss:$9 sm:$0xff] %v813
    %926 = vst [vmem:[%s881] ss:$9 sm:$0xff] %v814
    %927 = vst [vmem:[%s883] ss:$9 sm:$0xff] %v815
    %928 = vst [vmem:[%s885] ss:$9 sm:$0xff] %v816
    %929 = vst [vmem:[%s887] ss:$9 sm:$0xff] %v817
    %930 = vst [vmem:[%s889] ss:$9 sm:$0xff] %v818
    %931 = vst [vmem:[%s891] ss:$9 sm:$0xff] %v819
    %932 = vst [vmem:[%s893] ss:$9 sm:$0xff] %v820
    %v933 = vld [vmem:[#allocation1] sm:$0xff]
    %934 = vst [vmem:[#allocation1] ss:$9 sm:$0xff] %v821
    %935 = vst [vmem:[%s881] ss:$9 sm:$0xff] %v822
    %936 = vst [vmem:[%s883] ss:$9 sm:$0xff] %v823
    %937 = vst [vmem:[%s885] ss:$9 sm:$0xff] %v824
    %938 = vst [vmem:[%s887] ss:$9 sm:$0xff] %v825
    %939 = vst [vmem:[%s889] ss:$9 sm:$0xff] %v826
    %940 = vst [vmem:[%s891] ss:$9 sm:$0xff] %v827
    %941 = vst [vmem:[%s893] ss:$9 sm:$0xff] %v828
    %v942 = vld [vmem:[#allocation1] sm:$0xff]
    %943 = vst [vmem:[#allocation1] ss:$9 sm:$0xff] %v829
    %v944 = vld [vmem:[#allocation1] sm:$0xff]
    %v953 = vsel %vm749, %v895, 0.0
    %v954 = vsel %vm749, %v904, 0.0
    %v955 = vadd.f32 %v953, %v954
    %v956 = vsel %vm749, %v913, 0.0
    %v957 = vadd.f32 %v955, %v956
    %v958 = vsel %vm755, %v915, 0.0
    %v959 = vadd.f32 %v957, %v958
    %v960 = vrot.slane %v959, 4
    %v961 = vadd.f32 %v959, %v960
    %v962 = vrot.slane %v961, 2
    %v963 = vadd.f32 %v961, %v962
    %v964 = vrot.slane %v963, 1
    %v965 = vadd.f32 %v963, %v964
    %v966 = vsel %vm749, %v924, 0.0
    %v967 = vsel %vm749, %v933, 0.0
    %v968 = vadd.f32 %v966, %v967
    %v969 = vsel %vm749, %v942, 0.0
    %v970 = vadd.f32 %v968, %v969
    %v971 = vsel %vm755, %v944, 0.0
    %v972 = vadd.f32 %v970, %v971
    %v973 = vrot.slane %v972, 4
    %v974 = vadd.f32 %v972, %v973
    %v975 = vrot.slane %v974, 2
    %v976 = vadd.f32 %v974, %v975
    %v977 = vrot.slane %v976, 1
    %v978 = vadd.f32 %v976, %v977
    %v979 = vsel %vm749, %v965, 0.0
    %v980 = vsel %vm749, %v978, 0.0
    %v981 = vadd.f32 %v979, %v980
    %v982 = vmul.f32 %v779, 0.02
    %v983 = vmul.f32 %v981, 0.02
    %v984 = vmul.f32 %v982, %v982
    %v985 = vsub.f32 %v983, %v984
    %v986 = vld [vmem:[%s3] sm:$0x1]
    %v987 = vadd.f32 %v985, 1e-05
    %v988 = vrsqrt.pop %v987
    %v989 = vmul.f32 %v988, %v987
    %v990 = vmul.f32 %v989, %v988
    %v991 = vmul.f32 0.5, %v990
    %v992 = vsub.f32 1.5, %v991
    %v993 = vmul.f32 %v988, %v992
    %vm994 = vweird.f32 %v987
    %vm995 = vweird.f32 %v988
    %vm996 = vmor %vm994, %vm995
    %v997 = vsel %vm996, %v988, %v993
    %v998 = vmul.f32 %v986, %v997
    %v999 = vld [vmem:[%s3 + $0x1] sm:$0x1]
    %v1000 = vmul.f32 %v982, %v998
    %v1001 = vsub.f32 %v999, %v1000
    %v1002 = vperm.slane %v998, 0
    %v1004 = vrot.slane %v1002, 1
    %v1005 = vrot.slane %v1002, 2
    %v1006 = vrot.slane %v1002, 3
    %v1007 = vrot.slane %v1002, 4
    %v1008 = vrot.slane %v1002, 5
    %v1009 = vrot.slane %v1002, 6
    %v1010 = vrot.slane %v1002, 7
    %v1018 = vmul.f32 %v563, %v1002
    %v1019 = vmul.f32 %v590, %v1004
    %v1020 = vmul.f32 %v591, %v1005
    %v1021 = vmul.f32 %v592, %v1006
    %v1022 = vmul.f32 %v593, %v1007
    %v1023 = vmul.f32 %v594, %v1008
    %v1024 = vmul.f32 %v595, %v1009
    %v1025 = vmul.f32 %v596, %v1010
    %v1026 = vmul.f32 %v566, %v1002
    %v1027 = vmul.f32 %v597, %v1004
    %v1028 = vmul.f32 %v598, %v1005
    %v1029 = vmul.f32 %v599, %v1006
    %v1030 = vmul.f32 %v600, %v1007
    %v1031 = vmul.f32 %v601, %v1008
    %v1032 = vmul.f32 %v602, %v1009
    %v1033 = vmul.f32 %v603, %v1010
    %v1034 = vmul.f32 %v569, %v1002
    %v1035 = vmul.f32 %v604, %v1004
    %v1036 = vmul.f32 %v605, %v1005
    %v1037 = vmul.f32 %v606, %v1006
    %v1038 = vmul.f32 %v607, %v1007
    %v1039 = vmul.f32 %v608, %v1008
    %v1040 = vmul.f32 %v609, %v1009
    %v1041 = vmul.f32 %v610, %v1010
    %v1042 = vmul.f32 %v572, %v1002
    %v1043 = vmul.f32 %v611, %v1002
    %v1044 = vmul.f32 %v612, %v1004
    %v1045 = vmul.f32 %v613, %v1005
    %v1046 = vmul.f32 %v614, %v1006
    %v1047 = vmul.f32 %v615, %v1007
    %v1048 = vmul.f32 %v616, %v1008
    %v1049 = vmul.f32 %v617, %v1009
    %v1050 = vmul.f32 %v575, %v1010
    %v1051 = vmul.f32 %v618, %v1002
    %v1052 = vmul.f32 %v619, %v1004
    %v1053 = vmul.f32 %v620, %v1005
    %v1054 = vmul.f32 %v621, %v1006
    %v1055 = vmul.f32 %v622, %v1007
    %v1056 = vmul.f32 %v623, %v1008
    %v1057 = vmul.f32 %v624, %v1009
    %v1058 = vmul.f32 %v578, %v1010
    %v1059 = vmul.f32 %v625, %v1002
    %v1060 = vmul.f32 %v626, %v1004
    %v1061 = vmul.f32 %v627, %v1005
    %v1062 = vmul.f32 %v628, %v1006
    %v1063 = vmul.f32 %v629, %v1007
    %v1064 = vmul.f32 %v630, %v1008
    %v1065 = vmul.f32 %v631, %v1009
    %v1066 = vmul.f32 %v581, %v1010
    %v1067 = vmul.f32 %v632, %v1002
    %v1068 = vperm.slane %v1001, 0
    %v1070 = vrot.slane %v1068, 1
    %v1071 = vrot.slane %v1068, 2
    %v1072 = vrot.slane %v1068, 3
    %v1073 = vrot.slane %v1068, 4
    %v1074 = vrot.slane %v1068, 5
    %v1075 = vrot.slane %v1068, 6
    %v1076 = vrot.slane %v1068, 7
    %v1084 = vadd.f32 %v1018, %v1068
    %v1085 = vadd.f32 %v1019, %v1070
    %v1086 = vadd.f32 %v1020, %v1071
    %v1087 = vadd.f32 %v1021, %v1072
    %v1088 = vadd.f32 %v1022, %v1073
    %v1089 = vadd.f32 %v1023, %v1074
    %v1090 = vadd.f32 %v1024, %v1075
    %v1091 = vadd.f32 %v1025, %v1076
    %v1092 = vadd.f32 %v1026, %v1068
    %v1093 = vadd.f32 %v1027, %v1070
    %v1094 = vadd.f32 %v1028, %v1071
    %v1095 = vadd.f32 %v1029, %v1072
    %v1096 = vadd.f32 %v1030, %v1073
    %v1097 = vadd.f32 %v1031, %v1074
    %v1098 = vadd.f32 %v1032, %v1075
    %v1099 = vadd.f32 %v1033, %v1076
    %v1100 = vadd.f32 %v1034, %v1068
    %v1101 = vadd.f32 %v1035, %v1070
    %v1102 = vadd.f32 %v1036, %v1071
    %v1103 = vadd.f32 %v1037, %v1072
    %v1104 = vadd.f32 %v1038, %v1073
    %v1105 = vadd.f32 %v1039, %v1074
    %v1106 = vadd.f32 %v1040, %v1075
    %v1107 = vadd.f32 %v1041, %v1076
    %v1108 = vadd.f32 %v1042, %v1068
    %v1109 = vadd.f32 %v1043, %v1068
    %v1110 = vadd.f32 %v1044, %v1070
    %v1111 = vadd.f32 %v1045, %v1071
    %v1112 = vadd.f32 %v1046, %v1072
    %v1113 = vadd.f32 %v1047, %v1073
    %v1114 = vadd.f32 %v1048, %v1074
    %v1115 = vadd.f32 %v1049, %v1075
    %v1116 = vadd.f32 %v1050, %v1076
    %v1117 = vadd.f32 %v1051, %v1068
    %v1118 = vadd.f32 %v1052, %v1070
    %v1119 = vadd.f32 %v1053, %v1071
    %v1120 = vadd.f32 %v1054, %v1072
    %v1121 = vadd.f32 %v1055, %v1073
    %v1122 = vadd.f32 %v1056, %v1074
    %v1123 = vadd.f32 %v1057, %v1075
    %v1124 = vadd.f32 %v1058, %v1076
    %v1125 = vadd.f32 %v1059, %v1068
    %v1126 = vadd.f32 %v1060, %v1070
    %v1127 = vadd.f32 %v1061, %v1071
    %v1128 = vadd.f32 %v1062, %v1072
    %v1129 = vadd.f32 %v1063, %v1073
    %v1130 = vadd.f32 %v1064, %v1074
    %v1131 = vadd.f32 %v1065, %v1075
    %v1132 = vadd.f32 %v1066, %v1076
    %v1133 = vadd.f32 %v1067, %v1068
    %v1134 = vmax.f32 %v1084, 0.0
    %v1135 = vmax.f32 %v1085, 0.0
    %v1136 = vmax.f32 %v1086, 0.0
    %v1137 = vmax.f32 %v1087, 0.0
    %v1138 = vmax.f32 %v1088, 0.0
    %v1139 = vmax.f32 %v1089, 0.0
    %v1140 = vmax.f32 %v1090, 0.0
    %v1141 = vmax.f32 %v1091, 0.0
    %v1142 = vmax.f32 %v1092, 0.0
    %v1143 = vmax.f32 %v1093, 0.0
    %v1144 = vmax.f32 %v1094, 0.0
    %v1145 = vmax.f32 %v1095, 0.0
    %v1146 = vmax.f32 %v1096, 0.0
    %v1147 = vmax.f32 %v1097, 0.0
    %v1148 = vmax.f32 %v1098, 0.0
    %v1149 = vmax.f32 %v1099, 0.0
    %v1150 = vmax.f32 %v1100, 0.0
    %v1151 = vmax.f32 %v1101, 0.0
    %v1152 = vmax.f32 %v1102, 0.0
    %v1153 = vmax.f32 %v1103, 0.0
    %v1154 = vmax.f32 %v1104, 0.0
    %v1155 = vmax.f32 %v1105, 0.0
    %v1156 = vmax.f32 %v1106, 0.0
    %v1157 = vmax.f32 %v1107, 0.0
    %v1158 = vmax.f32 %v1108, 0.0
    %v1159 = vmax.f32 %v1109, 0.0
    %v1160 = vmax.f32 %v1110, 0.0
    %v1161 = vmax.f32 %v1111, 0.0
    %v1162 = vmax.f32 %v1112, 0.0
    %v1163 = vmax.f32 %v1113, 0.0
    %v1164 = vmax.f32 %v1114, 0.0
    %v1165 = vmax.f32 %v1115, 0.0
    %v1166 = vmax.f32 %v1116, 0.0
    %v1167 = vmax.f32 %v1117, 0.0
    %v1168 = vmax.f32 %v1118, 0.0
    %v1169 = vmax.f32 %v1119, 0.0
    %v1170 = vmax.f32 %v1120, 0.0
    %v1171 = vmax.f32 %v1121, 0.0
    %v1172 = vmax.f32 %v1122, 0.0
    %v1173 = vmax.f32 %v1123, 0.0
    %v1174 = vmax.f32 %v1124, 0.0
    %v1175 = vmax.f32 %v1125, 0.0
    %v1176 = vmax.f32 %v1126, 0.0
    %v1177 = vmax.f32 %v1127, 0.0
    %v1178 = vmax.f32 %v1128, 0.0
    %v1179 = vmax.f32 %v1129, 0.0
    %v1180 = vmax.f32 %v1130, 0.0
    %v1181 = vmax.f32 %v1131, 0.0
    %v1182 = vmax.f32 %v1132, 0.0
    %v1183 = vmax.f32 %v1133, 0.0
    %1222 = vst [vmem:[#allocation1] ss:$9 sm:$0xff] %v1134
    %s1223 = scalar_lea.vmem [#allocation1], 1
    %1224 = vst [vmem:[%s1223] ss:$9 sm:$0xff] %v1135
    %s1225 = scalar_lea.vmem [#allocation1], 2
    %1226 = vst [vmem:[%s1225] ss:$9 sm:$0xff] %v1136
    %s1227 = scalar_lea.vmem [#allocation1], 3
    %1228 = vst [vmem:[%s1227] ss:$9 sm:$0xff] %v1137
    %s1229 = scalar_lea.vmem [#allocation1], 4
    %1230 = vst [vmem:[%s1229] ss:$9 sm:$0xff] %v1138
    %s1231 = scalar_lea.vmem [#allocation1], 5
    %1232 = vst [vmem:[%s1231] ss:$9 sm:$0xff] %v1139
    %s1233 = scalar_lea.vmem [#allocation1], 6
    %1234 = vst [vmem:[%s1233] ss:$9 sm:$0xff] %v1140
    %s1235 = scalar_lea.vmem [#allocation1], 7
    %1236 = vst [vmem:[%s1235] ss:$9 sm:$0xff] %v1141
    %v1237 = vld [vmem:[#allocation1] sm:$0xff]
    %1238 = vst [vmem:[#allocation1] ss:$9 sm:$0xff] %v1142
    %1239 = vst [vmem:[%s1223] ss:$9 sm:$0xff] %v1143
    %1240 = vst [vmem:[%s1225] ss:$9 sm:$0xff] %v1144
    %1241 = vst [vmem:[%s1227] ss:$9 sm:$0xff] %v1145
    %1242 = vst [vmem:[%s1229] ss:$9 sm:$0xff] %v1146
    %1243 = vst [vmem:[%s1231] ss:$9 sm:$0xff] %v1147
    %1244 = vst [vmem:[%s1233] ss:$9 sm:$0xff] %v1148
    %1245 = vst [vmem:[%s1235] ss:$9 sm:$0xff] %v1149
    %v1246 = vld [vmem:[#allocation1] sm:$0xff]
    %1247 = vst [vmem:[#allocation1] ss:$9 sm:$0xff] %v1150
    %1248 = vst [vmem:[%s1223] ss:$9 sm:$0xff] %v1151
    %1249 = vst [vmem:[%s1225] ss:$9 sm:$0xff] %v1152
    %v1250 = vld [vmem:[#allocation1] sm:$0xff]
    %1251 = vst [vmem:[#allocation1] ss:$9 sm:$0xff] %v1159
    %1252 = vst [vmem:[%s1223] ss:$9 sm:$0xff] %v1160
    %1253 = vst [vmem:[%s1225] ss:$9 sm:$0xff] %v1161
    %1254 = vst [vmem:[%s1227] ss:$9 sm:$0xff] %v1162
    %1255 = vst [vmem:[%s1229] ss:$9 sm:$0xff] %v1163
    %1256 = vst [vmem:[%s1231] ss:$9 sm:$0xff] %v1164
    %1257 = vst [vmem:[%s1233] ss:$9 sm:$0xff] %v1165
    %1258 = vst [vmem:[%s1235] ss:$9 sm:$0xff] %v1166
    %v1259 = vld [vmem:[#allocation1] sm:$0xff]
    %1260 = vst [vmem:[#allocation1] ss:$9 sm:$0xff] %v1167
    %1261 = vst [vmem:[%s1223] ss:$9 sm:$0xff] %v1168
    %1262 = vst [vmem:[%s1225] ss:$9 sm:$0xff] %v1169
    %1263 = vst [vmem:[%s1227] ss:$9 sm:$0xff] %v1170
    %1264 = vst [vmem:[%s1229] ss:$9 sm:$0xff] %v1171
    %1265 = vst [vmem:[%s1231] ss:$9 sm:$0xff] %v1172
    %1266 = vst [vmem:[%s1233] ss:$9 sm:$0xff] %v1173
    %1267 = vst [vmem:[%s1235] ss:$9 sm:$0xff] %v1174
    %v1268 = vld [vmem:[#allocation1] sm:$0xff]
    %1269 = vst [vmem:[#allocation1] ss:$9 sm:$0xff] %v1175
    %1270 = vst [vmem:[%s1223] ss:$9 sm:$0xff] %v1176
    %1271 = vst [vmem:[%s1225] ss:$9 sm:$0xff] %v1177
    %v1272 = vld [vmem:[#allocation1] sm:$0xff]
    %1285 = vst [vmem:[#allocation1] ss:$9 sm:$0xff] %v1137
    %s1286 = scalar_lea.vmem [#allocation1], 1
    %1287 = vst [vmem:[%s1286] ss:$9 sm:$0xff] %v1138
    %s1288 = scalar_lea.vmem [#allocation1], 2
    %1289 = vst [vmem:[%s1288] ss:$9 sm:$0xff] %v1139
    %s1290 = scalar_lea.vmem [#allocation1], 3
    %1291 = vst [vmem:[%s1290] ss:$9 sm:$0xff] %v1140
    %s1292 = scalar_lea.vmem [#allocation1], 4
    %1293 = vst [vmem:[%s1292] ss:$9 sm:$0xff] %v1141
    %s1294 = scalar_lea.vmem [#allocation1], 5
    %1295 = vst [vmem:[%s1294] ss:$9 sm:$0xff] %v1142
    %s1296 = scalar_lea.vmem [#allocation1], 6
    %1297 = vst [vmem:[%s1296] ss:$9 sm:$0xff] %v1143
    %s1298 = scalar_lea.vmem [#allocation1], 7
    %1299 = vst [vmem:[%s1298] ss:$9 sm:$0xff] %v1144
    %v1300 = vld [vmem:[#allocation1] sm:$0xff]
    %1301 = vst [vmem:[#allocation1] ss:$9 sm:$0xff] %v1145
    %1302 = vst [vmem:[%s1286] ss:$9 sm:$0xff] %v1146
    %1303 = vst [vmem:[%s1288] ss:$9 sm:$0xff] %v1147
    %1304 = vst [vmem:[%s1290] ss:$9 sm:$0xff] %v1148
    %1305 = vst [vmem:[%s1292] ss:$9 sm:$0xff] %v1149
    %1306 = vst [vmem:[%s1294] ss:$9 sm:$0xff] %v1150
    %1307 = vst [vmem:[%s1296] ss:$9 sm:$0xff] %v1151
    %1308 = vst [vmem:[%s1298] ss:$9 sm:$0xff] %v1152
    %v1309 = vld [vmem:[#allocation1] sm:$0xff]
    %1310 = vst [vmem:[#allocation1] ss:$9 sm:$0xff] %v1153
    %1311 = vst [vmem:[%s1286] ss:$9 sm:$0xff] %v1154
    %1312 = vst [vmem:[%s1288] ss:$9 sm:$0xff] %v1155
    %v1313 = vld [vmem:[#allocation1] sm:$0xff]
    %1314 = vst [vmem:[#allocation1] ss:$9 sm:$0xff] %v1162
    %1315 = vst [vmem:[%s1286] ss:$9 sm:$0xff] %v1163
    %1316 = vst [vmem:[%s1288] ss:$9 sm:$0xff] %v1164
    %1317 = vst [vmem:[%s1290] ss:$9 sm:$0xff] %v1165
    %1318 = vst [vmem:[%s1292] ss:$9 sm:$0xff] %v1166
    %1319 = vst [vmem:[%s1294] ss:$9 sm:$0xff] %v1167
    %1320 = vst [vmem:[%s1296] ss:$9 sm:$0xff] %v1168
    %1321 = vst [vmem:[%s1298] ss:$9 sm:$0xff] %v1169
    %v1322 = vld [vmem:[#allocation1] sm:$0xff]
    %1323 = vst [vmem:[#allocation1] ss:$9 sm:$0xff] %v1170
    %1324 = vst [vmem:[%s1286] ss:$9 sm:$0xff] %v1171
    %1325 = vst [vmem:[%s1288] ss:$9 sm:$0xff] %v1172
    %1326 = vst [vmem:[%s1290] ss:$9 sm:$0xff] %v1173
    %1327 = vst [vmem:[%s1292] ss:$9 sm:$0xff] %v1174
    %1328 = vst [vmem:[%s1294] ss:$9 sm:$0xff] %v1175
    %1329 = vst [vmem:[%s1296] ss:$9 sm:$0xff] %v1176
    %1330 = vst [vmem:[%s1298] ss:$9 sm:$0xff] %v1177
    %v1331 = vld [vmem:[#allocation1] sm:$0xff]
    %1332 = vst [vmem:[#allocation1] ss:$9 sm:$0xff] %v1178
    %1333 = vst [vmem:[%s1286] ss:$9 sm:$0xff] %v1179
    %1334 = vst [vmem:[%s1288] ss:$9 sm:$0xff] %v1180
    %v1335 = vld [vmem:[#allocation1] sm:$0xff]
    %1336 = vrot.lane.b32.xlu0 %v1300, 64
    %v1337 = vpop.permute.xlu0 %1336
    %1338 = vrot.lane.b32.xlu0 %v1309, 64
    %v1339 = vpop.permute.xlu0 %1338
    %1340 = vrot.lane.b32.xlu0 %v1313, 64
    %v1341 = vpop.permute.xlu0 %1340
    %1342 = vrot.lane.b32.xlu0 %v1322, 64
    %v1343 = vpop.permute.xlu0 %1342
    %1344 = vrot.lane.b32.xlu0 %v1331, 64
    %v1345 = vpop.permute.xlu0 %1344
    %1346 = vrot.lane.b32.xlu0 %v1335, 64
    %v1347 = vpop.permute.xlu0 %1346
    %1360 = vst [vmem:[#allocation1] ss:$9 sm:$0xff] %v1140
    %s1361 = scalar_lea.vmem [#allocation1], 1
    %1362 = vst [vmem:[%s1361] ss:$9 sm:$0xff] %v1141
    %s1363 = scalar_lea.vmem [#allocation1], 2
    %1364 = vst [vmem:[%s1363] ss:$9 sm:$0xff] %v1142
    %s1365 = scalar_lea.vmem [#allocation1], 3
    %1366 = vst [vmem:[%s1365] ss:$9 sm:$0xff] %v1143
    %s1367 = scalar_lea.vmem [#allocation1], 4
    %1368 = vst [vmem:[%s1367] ss:$9 sm:$0xff] %v1144
    %s1369 = scalar_lea.vmem [#allocation1], 5
    %1370 = vst [vmem:[%s1369] ss:$9 sm:$0xff] %v1145
    %s1371 = scalar_lea.vmem [#allocation1], 6
    %1372 = vst [vmem:[%s1371] ss:$9 sm:$0xff] %v1146
    %s1373 = scalar_lea.vmem [#allocation1], 7
    %1374 = vst [vmem:[%s1373] ss:$9 sm:$0xff] %v1147
    %v1375 = vld [vmem:[#allocation1] sm:$0xff]
    %1376 = vst [vmem:[#allocation1] ss:$9 sm:$0xff] %v1148
    %1377 = vst [vmem:[%s1361] ss:$9 sm:$0xff] %v1149
    %1378 = vst [vmem:[%s1363] ss:$9 sm:$0xff] %v1150
    %1379 = vst [vmem:[%s1365] ss:$9 sm:$0xff] %v1151
    %1380 = vst [vmem:[%s1367] ss:$9 sm:$0xff] %v1152
    %1381 = vst [vmem:[%s1369] ss:$9 sm:$0xff] %v1153
    %1382 = vst [vmem:[%s1371] ss:$9 sm:$0xff] %v1154
    %1383 = vst [vmem:[%s1373] ss:$9 sm:$0xff] %v1155
    %v1384 = vld [vmem:[#allocation1] sm:$0xff]
    %1385 = vst [vmem:[#allocation1] ss:$9 sm:$0xff] %v1156
    %1386 = vst [vmem:[%s1361] ss:$9 sm:$0xff] %v1157
    %1387 = vst [vmem:[%s1363] ss:$9 sm:$0xff] %v1158
    %v1388 = vld [vmem:[#allocation1] sm:$0xff]
    %1389 = vst [vmem:[#allocation1] ss:$9 sm:$0xff] %v1165
    %1390 = vst [vmem:[%s1361] ss:$9 sm:$0xff] %v1166
    %1391 = vst [vmem:[%s1363] ss:$9 sm:$0xff] %v1167
    %1392 = vst [vmem:[%s1365] ss:$9 sm:$0xff] %v1168
    %1393 = vst [vmem:[%s1367] ss:$9 sm:$0xff] %v1169
    %1394 = vst [vmem:[%s1369] ss:$9 sm:$0xff] %v1170
    %1395 = vst [vmem:[%s1371] ss:$9 sm:$0xff] %v1171
    %1396 = vst [vmem:[%s1373] ss:$9 sm:$0xff] %v1172
    %v1397 = vld [vmem:[#allocation1] sm:$0xff]
    %1398 = vst [vmem:[#allocation1] ss:$9 sm:$0xff] %v1173
    %1399 = vst [vmem:[%s1361] ss:$9 sm:$0xff] %v1174
    %1400 = vst [vmem:[%s1363] ss:$9 sm:$0xff] %v1175
    %1401 = vst [vmem:[%s1365] ss:$9 sm:$0xff] %v1176
    %1402 = vst [vmem:[%s1367] ss:$9 sm:$0xff] %v1177
    %1403 = vst [vmem:[%s1369] ss:$9 sm:$0xff] %v1178
    %1404 = vst [vmem:[%s1371] ss:$9 sm:$0xff] %v1179
    %1405 = vst [vmem:[%s1373] ss:$9 sm:$0xff] %v1180
    %v1406 = vld [vmem:[#allocation1] sm:$0xff]
    %1407 = vst [vmem:[#allocation1] ss:$9 sm:$0xff] %v1181
    %1408 = vst [vmem:[%s1361] ss:$9 sm:$0xff] %v1182
    %1409 = vst [vmem:[%s1363] ss:$9 sm:$0xff] %v1183
    %v1410 = vld [vmem:[#allocation1] sm:$0xff]
    %v1411 = vsel %vm749, %v1237, %v1337
    %v1412 = vsel %vm749, %v1246, %v1339
    %v1413 = vsel %vm749, %v1250, %v1341
    %v1414 = vsel %vm749, %v1259, %v1343
    %v1415 = vsel %vm749, %v1268, %v1345
    %v1416 = vsel %vm749, %v1272, %v1347
    %v1423 = vrot.slane %v1375, 7
    %v1424 = vrot.slane %v1384, 7
    %v1425 = vrot.slane %v1388, 7
    %v1426 = vrot.slane %v1397, 7
    %v1427 = vrot.slane %v1406, 7
    %v1428 = vrot.slane %v1410, 7
    %v1429 = vsel %vm164, %v1411, %v1423
    %v1430 = vsel %vm168, %v1411, %v1423
    %v1431 = vrot.slane %v1430, 1
    %v1432 = vsel %vm173, %v1411, %v1423
    %v1433 = vrot.slane %v1432, 2
    %v1434 = vsel %vm178, %v1411, %v1423
    %v1435 = vrot.slane %v1434, 3
    %v1436 = vsel %vm183, %v1411, %v1423
    %v1437 = vrot.slane %v1436, 4
    %v1438 = vsel %vm188, %v1411, %v1423
    %v1439 = vrot.slane %v1438, 5
    %v1440 = vsel %vm193, %v1411, %v1423
    %v1441 = vrot.slane %v1440, 6
    %v1442 = vsel %vm36, %v1423, %v1411
    %v1443 = vrot.slane %v1442, 7
    %v1444 = vsel %vm164, %v1412, %v1424
    %v1445 = vsel %vm168, %v1412, %v1424
    %v1446 = vrot.slane %v1445, 1
    %v1447 = vsel %vm173, %v1412, %v1424
    %v1448 = vrot.slane %v1447, 2
    %v1449 = vsel %vm178, %v1412, %v1424
    %v1450 = vrot.slane %v1449, 3
    %v1451 = vsel %vm183, %v1412, %v1424
    %v1452 = vrot.slane %v1451, 4
    %v1453 = vsel %vm188, %v1412, %v1424
    %v1454 = vrot.slane %v1453, 5
    %v1455 = vsel %vm193, %v1412, %v1424
    %v1456 = vrot.slane %v1455, 6
    %v1457 = vsel %vm36, %v1424, %v1412
    %v1458 = vrot.slane %v1457, 7
    %v1459 = vsel %vm164, %v1413, %v1425
    %v1460 = vsel %vm168, %v1413, %v1425
    %v1461 = vrot.slane %v1460, 1
    %v1462 = vsel %vm173, %v1413, %v1425
    %v1463 = vrot.slane %v1462, 2
    %v1464 = vsel %vm164, %v1414, %v1426
    %v1465 = vsel %vm168, %v1414, %v1426
    %v1466 = vrot.slane %v1465, 1
    %v1467 = vsel %vm173, %v1414, %v1426
    %v1468 = vrot.slane %v1467, 2
    %v1469 = vsel %vm178, %v1414, %v1426
    %v1470 = vrot.slane %v1469, 3
    %v1471 = vsel %vm183, %v1414, %v1426
    %v1472 = vrot.slane %v1471, 4
    %v1473 = vsel %vm188, %v1414, %v1426
    %v1474 = vrot.slane %v1473, 5
    %v1475 = vsel %vm193, %v1414, %v1426
    %v1476 = vrot.slane %v1475, 6
    %v1477 = vsel %vm36, %v1426, %v1414
    %v1478 = vrot.slane %v1477, 7
    %v1479 = vsel %vm164, %v1415, %v1427
    %v1480 = vsel %vm168, %v1415, %v1427
    %v1481 = vrot.slane %v1480, 1
    %v1482 = vsel %vm173, %v1415, %v1427
    %v1483 = vrot.slane %v1482, 2
    %v1484 = vsel %vm178, %v1415, %v1427
    %v1485 = vrot.slane %v1484, 3
    %v1486 = vsel %vm183, %v1415, %v1427
    %v1487 = vrot.slane %v1486, 4
    %v1488 = vsel %vm188, %v1415, %v1427
    %v1489 = vrot.slane %v1488, 5
    %v1490 = vsel %vm193, %v1415, %v1427
    %v1491 = vrot.slane %v1490, 6
    %v1492 = vsel %vm36, %v1427, %v1415
    %v1493 = vrot.slane %v1492, 7
    %v1494 = vsel %vm164, %v1416, %v1428
    %v1495 = vsel %vm168, %v1416, %v1428
    %v1496 = vrot.slane %v1495, 1
    %v1497 = vsel %vm173, %v1416, %v1428
    %v1498 = vrot.slane %v1497, 2
    %v1499 = vld [vmem:[%s2 + $0x132] sm:$0xff]
    %v1500 = vld [vmem:[%s2 + $0x13a] sm:$0xff]
    %v1501 = vld [vmem:[%s2 + $0x142] sm:$0xff]
    %v1502 = vld [vmem:[%s2 + $0x14a] sm:$0xff]
    %v1503 = vld [vmem:[%s2 + $0x152] sm:$0xff]
    %v1504 = vld [vmem:[%s2 + $0x15a] sm:$0xff]
    %v1505 = vld [vmem:[%s2 + $0x162] sm:$0xff]
    %v1506 = vld [vmem:[%s2 + $0x16a] sm:$0xff]
    %v1507 = vld [vmem:[%s2 + $0x172] sm:$0xff]
    %v1508 = vld [vmem:[%s2 + $0x17a] sm:$0xff]
    %v1509 = vld [vmem:[%s2 + $0x182] sm:$0xff]
    %v1510 = vld [vmem:[%s2 + $0x18a] sm:$0xff]
    %v1511 = vld [vmem:[%s2 + $0x192] sm:$0xff]
    %v1512 = vld [vmem:[%s2 + $0x19a] sm:$0xff]
    %v1513 = vld [vmem:[%s2 + $0x1a2] sm:$0xff]
    %v1514 = vld [vmem:[%s2 + $0x1aa] sm:$0xff]
    %v1515 = vld [vmem:[%s2 + $0x1b2] sm:$0xff]
    %v1516 = vld [vmem:[%s2 + $0x1ba] sm:$0xff]
    %v1517 = vld [vmem:[%s2 + $0x1c2] sm:$0xff]
    %v1518 = vld [vmem:[%s2 + $0x1ca] sm:$0xff]
    %v1519 = vld [vmem:[%s2 + $0x1d2] sm:$0xff]
    %v1520 = vld [vmem:[%s2 + $0x1da] sm:$0xff]
    %v1521 = vld [vmem:[%s2 + $0x1e2] sm:$0xff]
    %v1522 = vld [vmem:[%s2 + $0x1ea] sm:$0xff]
    %1523 = vst [vmem:[#allocation1] ss:$9 sm:$0xff] %v1429
    %s1524 = scalar_lea.vmem [#allocation1], 1
    %1525 = vst [vmem:[%s1524] ss:$9 sm:$0xff] %v1431
    %s1526 = scalar_lea.vmem [#allocation1], 2
    %1527 = vst [vmem:[%s1526] ss:$9 sm:$0xff] %v1433
    %s1528 = scalar_lea.vmem [#allocation1], 3
    %1529 = vst [vmem:[%s1528] ss:$9 sm:$0xff] %v1435
    %s1530 = scalar_lea.vmem [#allocation1], 4
    %1531 = vst [vmem:[%s1530] ss:$9 sm:$0xff] %v1437
    %s1532 = scalar_lea.vmem [#allocation1], 5
    %1533 = vst [vmem:[%s1532] ss:$9 sm:$0xff] %v1439
    %s1534 = scalar_lea.vmem [#allocation1], 6
    %1535 = vst [vmem:[%s1534] ss:$9 sm:$0xff] %v1441
    %s1536 = scalar_lea.vmem [#allocation1], 7
    %1537 = vst [vmem:[%s1536] ss:$9 sm:$0xff] %v1443
    %v1538 = vld [vmem:[#allocation1] sm:$0xff]
    %v1539 = vld [vmem:[#allocation1 + $0x9] sm:$0xff]
    %1540 = vst [vmem:[#allocation1] ss:$9 sm:$0xff] %v1444
    %1541 = vst [vmem:[%s1524] ss:$9 sm:$0xff] %v1446
    %1542 = vst [vmem:[%s1526] ss:$9 sm:$0xff] %v1448
    %1543 = vst [vmem:[%s1528] ss:$9 sm:$0xff] %v1450
    %1544 = vst [vmem:[%s1530] ss:$9 sm:$0xff] %v1452
    %1545 = vst [vmem:[%s1532] ss:$9 sm:$0xff] %v1454
    %1546 = vst [vmem:[%s1534] ss:$9 sm:$0xff] %v1456
    %1547 = vst [vmem:[%s1536] ss:$9 sm:$0xff] %v1458
    %v1548 = vld [vmem:[#allocation1] sm:$0xff]
    %v1549 = vld [vmem:[#allocation1 + $0x9] sm:$0xff]
    %1550 = vst [vmem:[#allocation1] ss:$9 sm:$0xff] %v1459
    %1551 = vst [vmem:[%s1524] ss:$9 sm:$0xff] %v1461
    %1552 = vst [vmem:[%s1526] ss:$9 sm:$0xff] %v1463
    %1553 = vst [vmem:[%s1528] ss:$9 sm:$0xff] %v1464
    %1554 = vst [vmem:[%s1530] ss:$9 sm:$0xff] %v1466
    %1555 = vst [vmem:[%s1532] ss:$9 sm:$0xff] %v1468
    %1556 = vst [vmem:[%s1534] ss:$9 sm:$0xff] %v1470
    %1557 = vst [vmem:[%s1536] ss:$9 sm:$0xff] %v1472
    %v1558 = vld [vmem:[#allocation1] sm:$0xff]
    %v1559 = vld [vmem:[#allocation1 + $0x9] sm:$0xff]
    %1560 = vst [vmem:[#allocation1] ss:$9 sm:$0xff] %v1474
    %1561 = vst [vmem:[%s1524] ss:$9 sm:$0xff] %v1476
    %1562 = vst [vmem:[%s1526] ss:$9 sm:$0xff] %v1478
    %1563 = vst [vmem:[%s1528] ss:$9 sm:$0xff] %v1479
    %1564 = vst [vmem:[%s1530] ss:$9 sm:$0xff] %v1481
    %1565 = vst [vmem:[%s1532] ss:$9 sm:$0xff] %v1483
    %1566 = vst [vmem:[%s1534] ss:$9 sm:$0xff] %v1485
    %1567 = vst [vmem:[%s1536] ss:$9 sm:$0xff] %v1487
    %v1568 = vld [vmem:[#allocation1] sm:$0xff]
    %v1569 = vld [vmem:[#allocation1 + $0x9] sm:$0xff]
    %1570 = vst [vmem:[#allocation1] ss:$9 sm:$0xff] %v1489
    %1571 = vst [vmem:[%s1524] ss:$9 sm:$0xff] %v1491
    %1572 = vst [vmem:[%s1526] ss:$9 sm:$0xff] %v1493
    %1573 = vst [vmem:[%s1528] ss:$9 sm:$0xff] %v1494
    %1574 = vst [vmem:[%s1530] ss:$9 sm:$0xff] %v1496
    %1575 = vst [vmem:[%s1532] ss:$9 sm:$0xff] %v1498
    %v1576 = vld [vmem:[#allocation1] sm:$0xff]
    %v1577 = vld [vmem:[#allocation1 + $0x9] sm:$0xff]
    %v1583 = vsel %vm749, %v1539, 0
    %v1585 = vsel %vm749, %v1549, 0
    %v1587 = vsel %vm749, %v1559, 0
    %v1589 = vsel %vm749, %v1569, 0
    %v1591 = vsel %vm749, %v1577, 0
    %1593 = vmatpush.msra.mxu0 %v1514
    %1594 = vmatpush.msra.mxu0 %v1513
    %1595 = vmatpush.msra.mxu0 %v1512
    %1596 = vmatpush.msra.mxu0 %v1511
    %1597 = vmatpush.msra.mxu0 %v1510
    %1598 = vmatpush.msra.mxu0 %v1509
    %1599 = vmatpush.msra.mxu0 %v1508
    %1600 = vmatpush.msra.mxu0 %v1507
    %1601 = vmatpush.msra.mxu0 %v1506
    %1602 = vmatpush.msra.mxu0 %v1505
    %1603 = vmatpush.msra.mxu0 %v1504
    %1604 = vmatpush.msra.mxu0 %v1503
    %1605 = vmatpush.msra.mxu0 %v1502
    %1606 = vmatpush.msra.mxu0 %v1501
    %1607 = vmatpush.msra.mxu0 %v1500
    %1608 = vmatpush.msra.mxu0 %v1499
    %1609 = vmatmul.f32.gmra.mxu0 %v1538
    %v1610 = vpop.f32.mrf.mxu0
    %v1611 = vadd.f32 0.0, %v1610
    %1612 = vmatmul.f32.gmra.mxu0 %v1548
    %v1613 = vpop.f32.mrf.mxu0
    %v1614 = vadd.f32 0.0, %v1613
    %1615 = vmatmul.f32.gmra.mxu0 %v1558
    %v1616 = vpop.f32.mrf.mxu0
    %v1617 = vadd.f32 0.0, %v1616
    %1618 = vmatmul.f32.gmra.mxu0 %v1568
    %v1619 = vpop.f32.mrf.mxu0
    %v1620 = vadd.f32 0.0, %v1619
    %1621 = vmatmul.f32.gmra.mxu0 %v1576
    %v1622 = vpop.f32.mrf.mxu0
    %v1623 = vadd.f32 0.0, %v1622
    %1624 = vdwg.mxu0
    %1625 = vmatpush.msra.mxu0 0.0
    %1626 = vmatpush.msra.mxu0 0.0
    %1627 = vmatpush.msra.mxu0 0.0
    %1628 = vmatpush.msra.mxu0 0.0
    %1629 = vmatpush.msra.mxu0 0.0
    %1630 = vmatpush.msra.mxu0 0.0
    %1631 = vmatpush.msra.mxu0 0.0
    %1632 = vmatpush.msra.mxu0 0.0
    %1633 = vmatpush.msra.mxu0 %v1522
    %1634 = vmatpush.msra.mxu0 %v1521
    %1635 = vmatpush.msra.mxu0 %v1520
    %1636 = vmatpush.msra.mxu0 %v1519
    %1637 = vmatpush.msra.mxu0 %v1518
    %1638 = vmatpush.msra.mxu0 %v1517
    %1639 = vmatpush.msra.mxu0 %v1516
    %1640 = vmatpush.msra.mxu0 %v1515
    %1641 = vmatmul.f32.gmra.mxu0 %v1583
    %v1642 = vpop.f32.mrf.mxu0
    %v1643 = vadd.f32 %v1611, %v1642
    %1644 = vmatmul.f32.gmra.mxu0 %v1585
    %v1645 = vpop.f32.mrf.mxu0
    %v1646 = vadd.f32 %v1614, %v1645
    %1647 = vmatmul.f32.gmra.mxu0 %v1587
    %v1648 = vpop.f32.mrf.mxu0
    %v1649 = vadd.f32 %v1617, %v1648
    %1650 = vmatmul.f32.gmra.mxu0 %v1589
    %v1651 = vpop.f32.mrf.mxu0
    %v1652 = vadd.f32 %v1620, %v1651
    %1653 = vmatmul.f32.gmra.mxu0 %v1591
    %v1654 = vpop.f32.mrf.mxu0
    %v1655 = vadd.f32 %v1623, %v1654
    %1656 = vdwg.mxu0
    %v1662 = vrot.slane %v1643, 1
    %v1663 = vrot.slane %v1643, 2
    %v1664 = vrot.slane %v1643, 3
    %v1665 = vrot.slane %v1643, 4
    %v1666 = vrot.slane %v1643, 5
    %v1667 = vrot.slane %v1643, 6
    %v1668 = vrot.slane %v1643, 7
    %v1669 = vrot.slane %v1646, 1
    %v1670 = vrot.slane %v1646, 2
    %v1671 = vrot.slane %v1646, 3
    %v1672 = vrot.slane %v1646, 4
    %v1673 = vrot.slane %v1646, 5
    %v1674 = vrot.slane %v1646, 6
    %v1675 = vrot.slane %v1646, 7
    %v1676 = vrot.slane %v1649, 1
    %v1677 = vrot.slane %v1649, 2
    %v1678 = vrot.slane %v1649, 3
    %v1679 = vrot.slane %v1649, 4
    %v1680 = vrot.slane %v1649, 5
    %v1681 = vrot.slane %v1649, 6
    %v1682 = vrot.slane %v1649, 7
    %v1683 = vrot.slane %v1652, 1
    %v1684 = vrot.slane %v1652, 2
    %v1685 = vrot.slane %v1652, 3
    %v1686 = vrot.slane %v1652, 4
    %v1687 = vrot.slane %v1652, 5
    %v1688 = vrot.slane %v1652, 6
    %v1689 = vrot.slane %v1652, 7
    %v1690 = vrot.slane %v1655, 1
    %v1691 = vrot.slane %v1655, 2
    %v1692 = vrot.slane %v1655, 3
    %v1693 = vrot.slane %v1655, 4
    %v1694 = vrot.slane %v1655, 5
    %1728 = vst [vmem:[#allocation1] ss:$9 sm:$0xff] %v1643
    %s1729 = scalar_lea.vmem [#allocation1], 1
    %1730 = vst [vmem:[%s1729] ss:$9 sm:$0xff] %v1662
    %s1731 = scalar_lea.vmem [#allocation1], 2
    %1732 = vst [vmem:[%s1731] ss:$9 sm:$0xff] %v1663
    %s1733 = scalar_lea.vmem [#allocation1], 3
    %1734 = vst [vmem:[%s1733] ss:$9 sm:$0xff] %v1664
    %s1735 = scalar_lea.vmem [#allocation1], 4
    %1736 = vst [vmem:[%s1735] ss:$9 sm:$0xff] %v1665
    %s1737 = scalar_lea.vmem [#allocation1], 5
    %1738 = vst [vmem:[%s1737] ss:$9 sm:$0xff] %v1666
    %s1739 = scalar_lea.vmem [#allocation1], 6
    %1740 = vst [vmem:[%s1739] ss:$9 sm:$0xff] %v1667
    %s1741 = scalar_lea.vmem [#allocation1], 7
    %1742 = vst [vmem:[%s1741] ss:$9 sm:$0xff] %v1668
    %v1743 = vld [vmem:[#allocation1] sm:$0xff]
    %1744 = vst [vmem:[#allocation1] ss:$9 sm:$0xff] %v1646
    %1745 = vst [vmem:[%s1729] ss:$9 sm:$0xff] %v1669
    %1746 = vst [vmem:[%s1731] ss:$9 sm:$0xff] %v1670
    %1747 = vst [vmem:[%s1733] ss:$9 sm:$0xff] %v1671
    %1748 = vst [vmem:[%s1735] ss:$9 sm:$0xff] %v1672
    %1749 = vst [vmem:[%s1737] ss:$9 sm:$0xff] %v1673
    %1750 = vst [vmem:[%s1739] ss:$9 sm:$0xff] %v1674
    %1751 = vst [vmem:[%s1741] ss:$9 sm:$0xff] %v1675
    %v1752 = vld [vmem:[#allocation1] sm:$0xff]
    %1753 = vst [vmem:[#allocation1] ss:$9 sm:$0xff] %v1649
    %1754 = vst [vmem:[%s1729] ss:$9 sm:$0xff] %v1676
    %1755 = vst [vmem:[%s1731] ss:$9 sm:$0xff] %v1677
    %v1756 = vld [vmem:[#allocation1] sm:$0xff]
    %1757 = vst [vmem:[#allocation1] ss:$9 sm:$0xff] %v1678
    %1758 = vst [vmem:[%s1729] ss:$9 sm:$0xff] %v1679
    %1759 = vst [vmem:[%s1731] ss:$9 sm:$0xff] %v1680
    %1760 = vst [vmem:[%s1733] ss:$9 sm:$0xff] %v1681
    %1761 = vst [vmem:[%s1735] ss:$9 sm:$0xff] %v1682
    %1762 = vst [vmem:[%s1737] ss:$9 sm:$0xff] %v1652
    %1763 = vst [vmem:[%s1739] ss:$9 sm:$0xff] %v1683
    %1764 = vst [vmem:[%s1741] ss:$9 sm:$0xff] %v1684
    %v1765 = vld [vmem:[#allocation1] sm:$0xff]
    %1766 = vst [vmem:[#allocation1] ss:$9 sm:$0xff] %v1685
    %1767 = vst [vmem:[%s1729] ss:$9 sm:$0xff] %v1686
    %1768 = vst [vmem:[%s1731] ss:$9 sm:$0xff] %v1687
    %1769 = vst [vmem:[%s1733] ss:$9 sm:$0xff] %v1688
    %1770 = vst [vmem:[%s1735] ss:$9 sm:$0xff] %v1689
    %1771 = vst [vmem:[%s1737] ss:$9 sm:$0xff] %v1655
    %1772 = vst [vmem:[%s1739] ss:$9 sm:$0xff] %v1690
    %1773 = vst [vmem:[%s1741] ss:$9 sm:$0xff] %v1691
    %v1774 = vld [vmem:[#allocation1] sm:$0xff]
    %1775 = vst [vmem:[#allocation1] ss:$9 sm:$0xff] %v1692
    %1776 = vst [vmem:[%s1729] ss:$9 sm:$0xff] %v1693
    %1777 = vst [vmem:[%s1731] ss:$9 sm:$0xff] %v1694
    %v1778 = vld [vmem:[#allocation1] sm:$0xff]
    %v1785 = vsel %vm749, %v1743, 0.0
    %v1786 = vsel %vm749, %v1752, 0.0
    %v1787 = vadd.f32 %v1785, %v1786
    %vm1788 = vcmask 518144
    %v1789 = vsel %vm1788, %v1756, 0.0
    %v1790 = vadd.f32 %v1787, %v1789
    %v1791 = vrot.slane %v1790, 4
    %v1792 = vadd.f32 %v1790, %v1791
    %v1793 = vrot.slane %v1792, 2
    %v1794 = vadd.f32 %v1792, %v1793
    %v1795 = vrot.slane %v1794, 1
    %v1796 = vadd.f32 %v1794, %v1795
    %v1797 = vsel %vm749, %v1765, 0.0
    %v1798 = vsel %vm749, %v1774, 0.0
    %v1799 = vadd.f32 %v1797, %v1798
    %v1800 = vsel %vm1788, %v1778, 0.0
    %v1801 = vadd.f32 %v1799, %v1800
    %v1802 = vrot.slane %v1801, 4
    %v1803 = vadd.f32 %v1801, %v1802
    %v1804 = vrot.slane %v1803, 2
    %v1805 = vadd.f32 %v1803, %v1804
    %v1806 = vrot.slane %v1805, 1
    %v1807 = vadd.f32 %v1805, %v1806
    %v1808 = vsel %vm749, %v1796, 0.0
    %v1809 = vsel %vm749, %v1807, 0.0
    %v1810 = vadd.f32 %v1808, %v1809
    %v1811 = vmul.f32 %v1643, %v1643
    %v1812 = vmul.f32 %v1662, %v1662
    %v1813 = vmul.f32 %v1663, %v1663
    %v1814 = vmul.f32 %v1664, %v1664
    %v1815 = vmul.f32 %v1665, %v1665
    %v1816 = vmul.f32 %v1666, %v1666
    %v1817 = vmul.f32 %v1667, %v1667
    %v1818 = vmul.f32 %v1668, %v1668
    %v1819 = vmul.f32 %v1646, %v1646
    %v1820 = vmul.f32 %v1669, %v1669
    %v1821 = vmul.f32 %v1670, %v1670
    %v1822 = vmul.f32 %v1671, %v1671
    %v1823 = vmul.f32 %v1672, %v1672
    %v1824 = vmul.f32 %v1673, %v1673
    %v1825 = vmul.f32 %v1674, %v1674
    %v1826 = vmul.f32 %v1675, %v1675
    %v1827 = vmul.f32 %v1649, %v1649
    %v1828 = vmul.f32 %v1676, %v1676
    %v1829 = vmul.f32 %v1677, %v1677
    %v1830 = vmul.f32 %v1678, %v1678
    %v1831 = vmul.f32 %v1679, %v1679
    %v1832 = vmul.f32 %v1680, %v1680
    %v1833 = vmul.f32 %v1681, %v1681
    %v1834 = vmul.f32 %v1682, %v1682
    %v1835 = vmul.f32 %v1652, %v1652
    %v1836 = vmul.f32 %v1683, %v1683
    %v1837 = vmul.f32 %v1684, %v1684
    %v1838 = vmul.f32 %v1685, %v1685
    %v1839 = vmul.f32 %v1686, %v1686
    %v1840 = vmul.f32 %v1687, %v1687
    %v1841 = vmul.f32 %v1688, %v1688
    %v1842 = vmul.f32 %v1689, %v1689
    %v1843 = vmul.f32 %v1655, %v1655
    %v1844 = vmul.f32 %v1690, %v1690
    %v1845 = vmul.f32 %v1691, %v1691
    %v1846 = vmul.f32 %v1692, %v1692
    %v1847 = vmul.f32 %v1693, %v1693
    %v1848 = vmul.f32 %v1694, %v1694
    %1887 = vst [vmem:[#allocation1] ss:$9 sm:$0xff] %v1811
    %s1888 = scalar_lea.vmem [#allocation1], 1
    %1889 = vst [vmem:[%s1888] ss:$9 sm:$0xff] %v1812
    %s1890 = scalar_lea.vmem [#allocation1], 2
    %1891 = vst [vmem:[%s1890] ss:$9 sm:$0xff] %v1813
    %s1892 = scalar_lea.vmem [#allocation1], 3
    %1893 = vst [vmem:[%s1892] ss:$9 sm:$0xff] %v1814
    %s1894 = scalar_lea.vmem [#allocation1], 4
    %1895 = vst [vmem:[%s1894] ss:$9 sm:$0xff] %v1815
    %s1896 = scalar_lea.vmem [#allocation1], 5
    %1897 = vst [vmem:[%s1896] ss:$9 sm:$0xff] %v1816
    %s1898 = scalar_lea.vmem [#allocation1], 6
    %1899 = vst [vmem:[%s1898] ss:$9 sm:$0xff] %v1817
    %s1900 = scalar_lea.vmem [#allocation1], 7
    %1901 = vst [vmem:[%s1900] ss:$9 sm:$0xff] %v1818
    %v1902 = vld [vmem:[#allocation1] sm:$0xff]
    %1903 = vst [vmem:[#allocation1] ss:$9 sm:$0xff] %v1819
    %1904 = vst [vmem:[%s1888] ss:$9 sm:$0xff] %v1820
    %1905 = vst [vmem:[%s1890] ss:$9 sm:$0xff] %v1821
    %1906 = vst [vmem:[%s1892] ss:$9 sm:$0xff] %v1822
    %1907 = vst [vmem:[%s1894] ss:$9 sm:$0xff] %v1823
    %1908 = vst [vmem:[%s1896] ss:$9 sm:$0xff] %v1824
    %1909 = vst [vmem:[%s1898] ss:$9 sm:$0xff] %v1825
    %1910 = vst [vmem:[%s1900] ss:$9 sm:$0xff] %v1826
    %v1911 = vld [vmem:[#allocation1] sm:$0xff]
    %1912 = vst [vmem:[#allocation1] ss:$9 sm:$0xff] %v1827
    %1913 = vst [vmem:[%s1888] ss:$9 sm:$0xff] %v1828
    %1914 = vst [vmem:[%s1890] ss:$9 sm:$0xff] %v1829
    %v1915 = vld [vmem:[#allocation1] sm:$0xff]
    %1916 = vst [vmem:[#allocation1] ss:$9 sm:$0xff] %v1830
    %1917 = vst [vmem:[%s1888] ss:$9 sm:$0xff] %v1831
    %1918 = vst [vmem:[%s1890] ss:$9 sm:$0xff] %v1832
    %1919 = vst [vmem:[%s1892] ss:$9 sm:$0xff] %v1833
    %1920 = vst [vmem:[%s1894] ss:$9 sm:$0xff] %v1834
    %1921 = vst [vmem:[%s1896] ss:$9 sm:$0xff] %v1835
    %1922 = vst [vmem:[%s1898] ss:$9 sm:$0xff] %v1836
    %1923 = vst [vmem:[%s1900] ss:$9 sm:$0xff] %v1837
    %v1924 = vld [vmem:[#allocation1] sm:$0xff]
    %1925 = vst [vmem:[#allocation1] ss:$9 sm:$0xff] %v1838
    %1926 = vst [vmem:[%s1888] ss:$9 sm:$0xff] %v1839
    %1927 = vst [vmem:[%s1890] ss:$9 sm:$0xff] %v1840
    %1928 = vst [vmem:[%s1892] ss:$9 sm:$0xff] %v1841
    %1929 = vst [vmem:[%s1894] ss:$9 sm:$0xff] %v1842
    %1930 = vst [vmem:[%s1896] ss:$9 sm:$0xff] %v1843
    %1931 = vst [vmem:[%s1898] ss:$9 sm:$0xff] %v1844
    %1932 = vst [vmem:[%s1900] ss:$9 sm:$0xff] %v1845
    %v1933 = vld [vmem:[#allocation1] sm:$0xff]
    %1934 = vst [vmem:[#allocation1] ss:$9 sm:$0xff] %v1846
    %1935 = vst [vmem:[%s1888] ss:$9 sm:$0xff] %v1847
    %1936 = vst [vmem:[%s1890] ss:$9 sm:$0xff] %v1848
    %v1937 = vld [vmem:[#allocation1] sm:$0xff]
    %v1944 = vsel %vm749, %v1902, 0.0
    %v1945 = vsel %vm749, %v1911, 0.0
    %v1946 = vadd.f32 %v1944, %v1945
    %v1947 = vsel %vm1788, %v1915, 0.0
    %v1948 = vadd.f32 %v1946, %v1947
    %v1949 = vrot.slane %v1948, 4
    %v1950 = vadd.f32 %v1948, %v1949
    %v1951 = vrot.slane %v1950, 2
    %v1952 = vadd.f32 %v1950, %v1951
    %v1953 = vrot.slane %v1952, 1
    %v1954 = vadd.f32 %v1952, %v1953
    %v1955 = vsel %vm749, %v1924, 0.0
    %v1956 = vsel %vm749, %v1933, 0.0
    %v1957 = vadd.f32 %v1955, %v1956
    %v1958 = vsel %vm1788, %v1937, 0.0
    %v1959 = vadd.f32 %v1957, %v1958
    %v1960 = vrot.slane %v1959, 4
    %v1961 = vadd.f32 %v1959, %v1960
    %v1962 = vrot.slane %v1961, 2
    %v1963 = vadd.f32 %v1961, %v1962
    %v1964 = vrot.slane %v1963, 1
    %v1965 = vadd.f32 %v1963, %v1964
    %v1966 = vsel %vm749, %v1954, 0.0
    %v1967 = vsel %vm749, %v1965, 0.0
    %v1968 = vadd.f32 %v1966, %v1967
    %v1969 = vmul.f32 %v1810, 0.02631579
    %v1970 = vmul.f32 %v1968, 0.02631579
    %v1971 = vmul.f32 %v1969, %v1969
    %v1972 = vsub.f32 %v1970, %v1971
    %v1973 = vld [vmem:[%s3 + $0x2] sm:$0x1]
    %v1974 = vadd.f32 %v1972, 1e-05
    %v1975 = vrsqrt.pop %v1974
    %v1976 = vmul.f32 %v1975, %v1974
    %v1977 = vmul.f32 %v1976, %v1975
    %v1978 = vmul.f32 0.5, %v1977
    %v1979 = vsub.f32 1.5, %v1978
    %v1980 = vmul.f32 %v1975, %v1979
    %vm1981 = vweird.f32 %v1974
    %vm1982 = vweird.f32 %v1975
    %vm1983 = vmor %vm1981, %vm1982
    %v1984 = vsel %vm1983, %v1975, %v1980
    %v1985 = vmul.f32 %v1973, %v1984
    %v1986 = vld [vmem:[%s3 + $0x3] sm:$0x1]
    %v1987 = vmul.f32 %v1969, %v1985
    %v1988 = vsub.f32 %v1986, %v1987
    %v1989 = vperm.slane %v1985, 0
    %v1991 = vrot.slane %v1989, 1
    %v1992 = vrot.slane %v1989, 2
    %v1993 = vrot.slane %v1989, 3
    %v1994 = vrot.slane %v1989, 4
    %v1995 = vrot.slane %v1989, 5
    %v1996 = vrot.slane %v1989, 6
    %v1997 = vrot.slane %v1989, 7
    %v2005 = vmul.f32 %v1643, %v1989
    %v2006 = vmul.f32 %v1662, %v1991
    %v2007 = vmul.f32 %v1663, %v1992
    %v2008 = vmul.f32 %v1664, %v1993
    %v2009 = vmul.f32 %v1665, %v1994
    %v2010 = vmul.f32 %v1666, %v1995
    %v2011 = vmul.f32 %v1667, %v1996
    %v2012 = vmul.f32 %v1668, %v1997
    %v2013 = vmul.f32 %v1646, %v1989
    %v2014 = vmul.f32 %v1669, %v1991
    %v2015 = vmul.f32 %v1670, %v1992
    %v2016 = vmul.f32 %v1671, %v1993
    %v2017 = vmul.f32 %v1672, %v1994
    %v2018 = vmul.f32 %v1673, %v1995
    %v2019 = vmul.f32 %v1674, %v1996
    %v2020 = vmul.f32 %v1675, %v1997
    %v2021 = vmul.f32 %v1649, %v1989
    %v2022 = vmul.f32 %v1676, %v1991
    %v2023 = vmul.f32 %v1677, %v1992
    %v2024 = vmul.f32 %v1678, %v1989
    %v2025 = vmul.f32 %v1679, %v1991
    %v2026 = vmul.f32 %v1680, %v1992
    %v2027 = vmul.f32 %v1681, %v1993
    %v2028 = vmul.f32 %v1682, %v1994
    %v2029 = vmul.f32 %v1652, %v1995
    %v2030 = vmul.f32 %v1683, %v1996
    %v2031 = vmul.f32 %v1684, %v1997
    %v2032 = vmul.f32 %v1685, %v1989
    %v2033 = vmul.f32 %v1686, %v1991
    %v2034 = vmul.f32 %v1687, %v1992
    %v2035 = vmul.f32 %v1688, %v1993
    %v2036 = vmul.f32 %v1689, %v1994
    %v2037 = vmul.f32 %v1655, %v1995
    %v2038 = vmul.f32 %v1690, %v1996
    %v2039 = vmul.f32 %v1691, %v1997
    %v2040 = vmul.f32 %v1692, %v1989
    %v2041 = vmul.f32 %v1693, %v1991
    %v2042 = vmul.f32 %v1694, %v1992
    %v2043 = vperm.slane %v1988, 0
    %v2045 = vrot.slane %v2043, 1
    %v2046 = vrot.slane %v2043, 2
    %v2047 = vrot.slane %v2043, 3
    %v2048 = vrot.slane %v2043, 4
    %v2049 = vrot.slane %v2043, 5
    %v2050 = vrot.slane %v2043, 6
    %v2051 = vrot.slane %v2043, 7
    %v2059 = vadd.f32 %v2005, %v2043
    %v2060 = vadd.f32 %v2006, %v2045
    %v2061 = vadd.f32 %v2007, %v2046
    %v2062 = vadd.f32 %v2008, %v2047
    %v2063 = vadd.f32 %v2009, %v2048
    %v2064 = vadd.f32 %v2010, %v2049
    %v2065 = vadd.f32 %v2011, %v2050
    %v2066 = vadd.f32 %v2012, %v2051
    %v2067 = vadd.f32 %v2013, %v2043
    %v2068 = vadd.f32 %v2014, %v2045
    %v2069 = vadd.f32 %v2015, %v2046
    %v2070 = vadd.f32 %v2016, %v2047
    %v2071 = vadd.f32 %v2017, %v2048
    %v2072 = vadd.f32 %v2018, %v2049
    %v2073 = vadd.f32 %v2019, %v2050
    %v2074 = vadd.f32 %v2020, %v2051
    %v2075 = vadd.f32 %v2021, %v2043
    %v2076 = vadd.f32 %v2022, %v2045
    %v2077 = vadd.f32 %v2023, %v2046
    %v2078 = vadd.f32 %v2024, %v2043
    %v2079 = vadd.f32 %v2025, %v2045
    %v2080 = vadd.f32 %v2026, %v2046
    %v2081 = vadd.f32 %v2027, %v2047
    %v2082 = vadd.f32 %v2028, %v2048
    %v2083 = vadd.f32 %v2029, %v2049
    %v2084 = vadd.f32 %v2030, %v2050
    %v2085 = vadd.f32 %v2031, %v2051
    %v2086 = vadd.f32 %v2032, %v2043
    %v2087 = vadd.f32 %v2033, %v2045
    %v2088 = vadd.f32 %v2034, %v2046
    %v2089 = vadd.f32 %v2035, %v2047
    %v2090 = vadd.f32 %v2036, %v2048
    %v2091 = vadd.f32 %v2037, %v2049
    %v2092 = vadd.f32 %v2038, %v2050
    %v2093 = vadd.f32 %v2039, %v2051
    %v2094 = vadd.f32 %v2040, %v2043
    %v2095 = vadd.f32 %v2041, %v2045
    %v2096 = vadd.f32 %v2042, %v2046
    %v2097 = vmax.f32 %v2059, 0.0
    %v2098 = vmax.f32 %v2060, 0.0
    %v2099 = vmax.f32 %v2061, 0.0
    %v2100 = vmax.f32 %v2062, 0.0
    %v2101 = vmax.f32 %v2063, 0.0
    %v2102 = vmax.f32 %v2064, 0.0
    %v2103 = vmax.f32 %v2065, 0.0
    %v2104 = vmax.f32 %v2066, 0.0
    %v2105 = vmax.f32 %v2067, 0.0
    %v2106 = vmax.f32 %v2068, 0.0
    %v2107 = vmax.f32 %v2069, 0.0
    %v2108 = vmax.f32 %v2070, 0.0
    %v2109 = vmax.f32 %v2071, 0.0
    %v2110 = vmax.f32 %v2072, 0.0
    %v2111 = vmax.f32 %v2073, 0.0
    %v2112 = vmax.f32 %v2074, 0.0
    %v2113 = vmax.f32 %v2075, 0.0
    %v2114 = vmax.f32 %v2076, 0.0
    %v2115 = vmax.f32 %v2077, 0.0
    %v2116 = vmax.f32 %v2078, 0.0
    %v2117 = vmax.f32 %v2079, 0.0
    %v2118 = vmax.f32 %v2080, 0.0
    %v2119 = vmax.f32 %v2081, 0.0
    %v2120 = vmax.f32 %v2082, 0.0
    %v2121 = vmax.f32 %v2083, 0.0
    %v2122 = vmax.f32 %v2084, 0.0
    %v2123 = vmax.f32 %v2085, 0.0
    %v2124 = vmax.f32 %v2086, 0.0
    %v2125 = vmax.f32 %v2087, 0.0
    %v2126 = vmax.f32 %v2088, 0.0
    %v2127 = vmax.f32 %v2089, 0.0
    %v2128 = vmax.f32 %v2090, 0.0
    %v2129 = vmax.f32 %v2091, 0.0
    %v2130 = vmax.f32 %v2092, 0.0
    %v2131 = vmax.f32 %v2093, 0.0
    %v2132 = vmax.f32 %v2094, 0.0
    %v2133 = vmax.f32 %v2095, 0.0
    %v2134 = vmax.f32 %v2096, 0.0
    %v2135 = vld [vmem:[%s2 + $0x1f2] sm:$0xff]
    %v2136 = vld [vmem:[%s2 + $0x1fa] sm:$0xff]
    %v2137 = vld [vmem:[%s2 + $0x202] sm:$0xff]
    %v2138 = vld [vmem:[%s2 + $0x20a] sm:$0xff]
    %v2139 = vld [vmem:[%s2 + $0x212] sm:$0xff]
    %v2140 = vld [vmem:[%s2 + $0x21a] sm:$0xff]
    %v2141 = vld [vmem:[%s2 + $0x222] sm:$0xff]
    %v2142 = vld [vmem:[%s2 + $0x22a] sm:$0xff]
    %2181 = vst [vmem:[#allocation1] ss:$9 sm:$0xff] %v2097
    %s2182 = scalar_lea.vmem [#allocation1], 1
    %2183 = vst [vmem:[%s2182] ss:$9 sm:$0xff] %v2098
    %s2184 = scalar_lea.vmem [#allocation1], 2
    %2185 = vst [vmem:[%s2184] ss:$9 sm:$0xff] %v2099
    %s2186 = scalar_lea.vmem [#allocation1], 3
    %2187 = vst [vmem:[%s2186] ss:$9 sm:$0xff] %v2100
    %s2188 = scalar_lea.vmem [#allocation1], 4
    %2189 = vst [vmem:[%s2188] ss:$9 sm:$0xff] %v2101
    %s2190 = scalar_lea.vmem [#allocation1], 5
    %2191 = vst [vmem:[%s2190] ss:$9 sm:$0xff] %v2102
    %s2192 = scalar_lea.vmem [#allocation1], 6
    %2193 = vst [vmem:[%s2192] ss:$9 sm:$0xff] %v2103
    %s2194 = scalar_lea.vmem [#allocation1], 7
    %2195 = vst [vmem:[%s2194] ss:$9 sm:$0xff] %v2104
    %v2196 = vld [vmem:[#allocation1] sm:$0xff]
    %2197 = vst [vmem:[#allocation1] ss:$9 sm:$0xff] %v2105
    %2198 = vst [vmem:[%s2182] ss:$9 sm:$0xff] %v2106
    %2199 = vst [vmem:[%s2184] ss:$9 sm:$0xff] %v2107
    %2200 = vst [vmem:[%s2186] ss:$9 sm:$0xff] %v2108
    %2201 = vst [vmem:[%s2188] ss:$9 sm:$0xff] %v2109
    %2202 = vst [vmem:[%s2190] ss:$9 sm:$0xff] %v2110
    %2203 = vst [vmem:[%s2192] ss:$9 sm:$0xff] %v2111
    %2204 = vst [vmem:[%s2194] ss:$9 sm:$0xff] %v2112
    %v2205 = vld [vmem:[#allocation1] sm:$0xff]
    %2206 = vst [vmem:[#allocation1] ss:$9 sm:$0xff] %v2113
    %2207 = vst [vmem:[%s2182] ss:$9 sm:$0xff] %v2114
    %2208 = vst [vmem:[%s2184] ss:$9 sm:$0xff] %v2115
    %2209 = vst [vmem:[%s2186] ss:$9 sm:$0xff] %v2116
    %2210 = vst [vmem:[%s2188] ss:$9 sm:$0xff] %v2117
    %2211 = vst [vmem:[%s2190] ss:$9 sm:$0xff] %v2118
    %2212 = vst [vmem:[%s2192] ss:$9 sm:$0xff] %v2119
    %2213 = vst [vmem:[%s2194] ss:$9 sm:$0xff] %v2120
    %v2214 = vld [vmem:[#allocation1] sm:$0xff]
    %2215 = vst [vmem:[#allocation1] ss:$9 sm:$0xff] %v2121
    %2216 = vst [vmem:[%s2182] ss:$9 sm:$0xff] %v2122
    %2217 = vst [vmem:[%s2184] ss:$9 sm:$0xff] %v2123
    %2218 = vst [vmem:[%s2186] ss:$9 sm:$0xff] %v2124
    %2219 = vst [vmem:[%s2188] ss:$9 sm:$0xff] %v2125
    %2220 = vst [vmem:[%s2190] ss:$9 sm:$0xff] %v2126
    %2221 = vst [vmem:[%s2192] ss:$9 sm:$0xff] %v2127
    %2222 = vst [vmem:[%s2194] ss:$9 sm:$0xff] %v2128
    %v2223 = vld [vmem:[#allocation1] sm:$0xff]
    %2224 = vst [vmem:[#allocation1] ss:$9 sm:$0xff] %v2129
    %2225 = vst [vmem:[%s2182] ss:$9 sm:$0xff] %v2130
    %2226 = vst [vmem:[%s2184] ss:$9 sm:$0xff] %v2131
    %2227 = vst [vmem:[%s2186] ss:$9 sm:$0xff] %v2132
    %2228 = vst [vmem:[%s2188] ss:$9 sm:$0xff] %v2133
    %2229 = vst [vmem:[%s2190] ss:$9 sm:$0xff] %v2134
    %v2230 = vld [vmem:[#allocation1] sm:$0xff]
    %v2231 = vsel %vm749, %v2196, 0
    %v2233 = vsel %vm749, %v2205, 0
    %v2235 = vsel %vm749, %v2214, 0
    %v2237 = vsel %vm749, %v2223, 0
    %v2239 = vsel %vm749, %v2230, 0
    %2241 = vmatpush.msra.mxu0 0.0
    %2242 = vmatpush.msra.mxu0 0.0
    %2243 = vmatpush.msra.mxu0 0.0
    %2244 = vmatpush.msra.mxu0 0.0
    %2245 = vmatpush.msra.mxu0 0.0
    %2246 = vmatpush.msra.mxu0 0.0
    %2247 = vmatpush.msra.mxu0 0.0
    %2248 = vmatpush.msra.mxu0 0.0
    %2249 = vmatpush.msra.mxu0 %v2142
    %2250 = vmatpush.msra.mxu0 %v2141
    %2251 = vmatpush.msra.mxu0 %v2140
    %2252 = vmatpush.msra.mxu0 %v2139
    %2253 = vmatpush.msra.mxu0 %v2138
    %2254 = vmatpush.msra.mxu0 %v2137
    %2255 = vmatpush.msra.mxu0 %v2136
    %2256 = vmatpush.msra.mxu0 %v2135
    %2257 = vmatmul.f32.gmra.mxu0 %v2231
    %v2258 = vpop.f32.mrf.mxu0
    %v2259 = vadd.f32 0.0, %v2258
    %2260 = vmatmul.f32.gmra.mxu0 %v2233
    %v2261 = vpop.f32.mrf.mxu0
    %v2262 = vadd.f32 0.0, %v2261
    %2263 = vmatmul.f32.gmra.mxu0 %v2235
    %v2264 = vpop.f32.mrf.mxu0
    %v2265 = vadd.f32 0.0, %v2264
    %2266 = vmatmul.f32.gmra.mxu0 %v2237
    %v2267 = vpop.f32.mrf.mxu0
    %v2268 = vadd.f32 0.0, %v2267
    %2269 = vmatmul.f32.gmra.mxu0 %v2239
    %v2270 = vpop.f32.mrf.mxu0
    %v2271 = vadd.f32 0.0, %v2270
    %2272 = vdwg.mxu0
    %v2278 = vrot.slane %v2259, 1
    %v2279 = vrot.slane %v2259, 2
    %v2280 = vrot.slane %v2259, 3
    %v2281 = vrot.slane %v2259, 4
    %v2282 = vrot.slane %v2259, 5
    %v2283 = vrot.slane %v2259, 6
    %v2284 = vrot.slane %v2259, 7
    %v2285 = vrot.slane %v2262, 1
    %v2286 = vrot.slane %v2262, 2
    %v2287 = vrot.slane %v2262, 3
    %v2288 = vrot.slane %v2262, 4
    %v2289 = vrot.slane %v2262, 5
    %v2290 = vrot.slane %v2262, 6
    %v2291 = vrot.slane %v2262, 7
    %v2292 = vrot.slane %v2265, 1
    %v2293 = vrot.slane %v2265, 2
    %v2294 = vrot.slane %v2265, 3
    %v2295 = vrot.slane %v2265, 4
    %v2296 = vrot.slane %v2265, 5
    %v2297 = vrot.slane %v2265, 6
    %v2298 = vrot.slane %v2265, 7
    %v2299 = vrot.slane %v2268, 1
    %v2300 = vrot.slane %v2268, 2
    %v2301 = vrot.slane %v2268, 3
    %v2302 = vrot.slane %v2268, 4
    %v2303 = vrot.slane %v2268, 5
    %v2304 = vrot.slane %v2268, 6
    %v2305 = vrot.slane %v2268, 7
    %v2306 = vrot.slane %v2271, 1
    %v2307 = vrot.slane %v2271, 2
    %v2308 = vrot.slane %v2271, 3
    %v2309 = vrot.slane %v2271, 4
    %v2310 = vrot.slane %v2271, 5
    %2344 = vst [vmem:[#allocation1] ss:$9 sm:$0xff] %v2259
    %s2345 = scalar_lea.vmem [#allocation1], 1
    %2346 = vst [vmem:[%s2345] ss:$9 sm:$0xff] %v2278
    %s2347 = scalar_lea.vmem [#allocation1], 2
    %2348 = vst [vmem:[%s2347] ss:$9 sm:$0xff] %v2279
    %s2349 = scalar_lea.vmem [#allocation1], 3
    %2350 = vst [vmem:[%s2349] ss:$9 sm:$0xff] %v2280
    %s2351 = scalar_lea.vmem [#allocation1], 4
    %2352 = vst [vmem:[%s2351] ss:$9 sm:$0xff] %v2281
    %s2353 = scalar_lea.vmem [#allocation1], 5
    %2354 = vst [vmem:[%s2353] ss:$9 sm:$0xff] %v2282
    %s2355 = scalar_lea.vmem [#allocation1], 6
    %2356 = vst [vmem:[%s2355] ss:$9 sm:$0xff] %v2283
    %s2357 = scalar_lea.vmem [#allocation1], 7
    %2358 = vst [vmem:[%s2357] ss:$9 sm:$0xff] %v2284
    %v2359 = vld [vmem:[#allocation1] sm:$0xff]
    %2360 = vst [vmem:[#allocation1] ss:$9 sm:$0xff] %v2262
    %2361 = vst [vmem:[%s2345] ss:$9 sm:$0xff] %v2285
    %2362 = vst [vmem:[%s2347] ss:$9 sm:$0xff] %v2286
    %2363 = vst [vmem:[%s2349] ss:$9 sm:$0xff] %v2287
    %2364 = vst [vmem:[%s2351] ss:$9 sm:$0xff] %v2288
    %2365 = vst [vmem:[%s2353] ss:$9 sm:$0xff] %v2289
    %2366 = vst [vmem:[%s2355] ss:$9 sm:$0xff] %v2290
    %2367 = vst [vmem:[%s2357] ss:$9 sm:$0xff] %v2291
    %v2368 = vld [vmem:[#allocation1] sm:$0xff]
    %2369 = vst [vmem:[#allocation1] ss:$9 sm:$0xff] %v2265
    %2370 = vst [vmem:[%s2345] ss:$9 sm:$0xff] %v2292
    %2371 = vst [vmem:[%s2347] ss:$9 sm:$0xff] %v2293
    %v2372 = vld [vmem:[#allocation1] sm:$0xff]
    %2373 = vst [vmem:[#allocation1] ss:$9 sm:$0xff] %v2294
    %2374 = vst [vmem:[%s2345] ss:$9 sm:$0xff] %v2295
    %2375 = vst [vmem:[%s2347] ss:$9 sm:$0xff] %v2296
    %2376 = vst [vmem:[%s2349] ss:$9 sm:$0xff] %v2297
    %2377 = vst [vmem:[%s2351] ss:$9 sm:$0xff] %v2298
    %2378 = vst [vmem:[%s2353] ss:$9 sm:$0xff] %v2268
    %2379 = vst [vmem:[%s2355] ss:$9 sm:$0xff] %v2299
    %2380 = vst [vmem:[%s2357] ss:$9 sm:$0xff] %v2300
    %v2381 = vld [vmem:[#allocation1] sm:$0xff]
    %2382 = vst [vmem:[#allocation1] ss:$9 sm:$0xff] %v2301
    %2383 = vst [vmem:[%s2345] ss:$9 sm:$0xff] %v2302
    %2384 = vst [vmem:[%s2347] ss:$9 sm:$0xff] %v2303
    %2385 = vst [vmem:[%s2349] ss:$9 sm:$0xff] %v2304
    %2386 = vst [vmem:[%s2351] ss:$9 sm:$0xff] %v2305
    %2387 = vst [vmem:[%s2353] ss:$9 sm:$0xff] %v2271
    %2388 = vst [vmem:[%s2355] ss:$9 sm:$0xff] %v2306
    %2389 = vst [vmem:[%s2357] ss:$9 sm:$0xff] %v2307
    %v2390 = vld [vmem:[#allocation1] sm:$0xff]
    %2391 = vst [vmem:[#allocation1] ss:$9 sm:$0xff] %v2308
    %2392 = vst [vmem:[%s2345] ss:$9 sm:$0xff] %v2309
    %2393 = vst [vmem:[%s2347] ss:$9 sm:$0xff] %v2310
    %v2394 = vld [vmem:[#allocation1] sm:$0xff]
    %v2401 = vsel %vm749, %v2359, 0.0
    %v2402 = vsel %vm749, %v2368, 0.0
    %v2403 = vadd.f32 %v2401, %v2402
    %v2404 = vsel %vm1788, %v2372, 0.0
    %v2405 = vadd.f32 %v2403, %v2404
    %v2406 = vrot.slane %v2405, 4
    %v2407 = vadd.f32 %v2405, %v2406
    %v2408 = vrot.slane %v2407, 2
    %v2409 = vadd.f32 %v2407, %v2408
    %v2410 = vrot.slane %v2409, 1
    %v2411 = vadd.f32 %v2409, %v2410
    %v2412 = vsel %vm749, %v2381, 0.0
    %v2413 = vsel %vm749, %v2390, 0.0
    %v2414 = vadd.f32 %v2412, %v2413
    %v2415 = vsel %vm1788, %v2394, 0.0
    %v2416 = vadd.f32 %v2414, %v2415
    %v2417 = vrot.slane %v2416, 4
    %v2418 = vadd.f32 %v2416, %v2417
    %v2419 = vrot.slane %v2418, 2
    %v2420 = vadd.f32 %v2418, %v2419
    %v2421 = vrot.slane %v2420, 1
    %v2422 = vadd.f32 %v2420, %v2421
    %v2423 = vsel %vm749, %v2411, 0.0
    %v2424 = vsel %vm749, %v2422, 0.0
    %v2425 = vadd.f32 %v2423, %v2424
    %v2426 = vmul.f32 %v2259, %v2259
    %v2427 = vmul.f32 %v2278, %v2278
    %v2428 = vmul.f32 %v2279, %v2279
    %v2429 = vmul.f32 %v2280, %v2280
    %v2430 = vmul.f32 %v2281, %v2281
    %v2431 = vmul.f32 %v2282, %v2282
    %v2432 = vmul.f32 %v2283, %v2283
    %v2433 = vmul.f32 %v2284, %v2284
    %v2434 = vmul.f32 %v2262, %v2262
    %v2435 = vmul.f32 %v2285, %v2285
    %v2436 = vmul.f32 %v2286, %v2286
    %v2437 = vmul.f32 %v2287, %v2287
    %v2438 = vmul.f32 %v2288, %v2288
    %v2439 = vmul.f32 %v2289, %v2289
    %v2440 = vmul.f32 %v2290, %v2290
    %v2441 = vmul.f32 %v2291, %v2291
    %v2442 = vmul.f32 %v2265, %v2265
    %v2443 = vmul.f32 %v2292, %v2292
    %v2444 = vmul.f32 %v2293, %v2293
    %v2445 = vmul.f32 %v2294, %v2294
    %v2446 = vmul.f32 %v2295, %v2295
    %v2447 = vmul.f32 %v2296, %v2296
    %v2448 = vmul.f32 %v2297, %v2297
    %v2449 = vmul.f32 %v2298, %v2298
    %v2450 = vmul.f32 %v2268, %v2268
    %v2451 = vmul.f32 %v2299, %v2299
    %v2452 = vmul.f32 %v2300, %v2300
    %v2453 = vmul.f32 %v2301, %v2301
    %v2454 = vmul.f32 %v2302, %v2302
    %v2455 = vmul.f32 %v2303, %v2303
    %v2456 = vmul.f32 %v2304, %v2304
    %v2457 = vmul.f32 %v2305, %v2305
    %v2458 = vmul.f32 %v2271, %v2271
    %v2459 = vmul.f32 %v2306, %v2306
    %v2460 = vmul.f32 %v2307, %v2307
    %v2461 = vmul.f32 %v2308, %v2308
    %v2462 = vmul.f32 %v2309, %v2309
    %v2463 = vmul.f32 %v2310, %v2310
    %2502 = vst [vmem:[#allocation1] ss:$9 sm:$0xff] %v2426
    %s2503 = scalar_lea.vmem [#allocation1], 1
    %2504 = vst [vmem:[%s2503] ss:$9 sm:$0xff] %v2427
    %s2505 = scalar_lea.vmem [#allocation1], 2
    %2506 = vst [vmem:[%s2505] ss:$9 sm:$0xff] %v2428
    %s2507 = scalar_lea.vmem [#allocation1], 3
    %2508 = vst [vmem:[%s2507] ss:$9 sm:$0xff] %v2429
    %s2509 = scalar_lea.vmem [#allocation1], 4
    %2510 = vst [vmem:[%s2509] ss:$9 sm:$0xff] %v2430
    %s2511 = scalar_lea.vmem [#allocation1], 5
    %2512 = vst [vmem:[%s2511] ss:$9 sm:$0xff] %v2431
    %s2513 = scalar_lea.vmem [#allocation1], 6
    %2514 = vst [vmem:[%s2513] ss:$9 sm:$0xff] %v2432
    %s2515 = scalar_lea.vmem [#allocation1], 7
    %2516 = vst [vmem:[%s2515] ss:$9 sm:$0xff] %v2433
    %v2517 = vld [vmem:[#allocation1] sm:$0xff]
    %2518 = vst [vmem:[#allocation1] ss:$9 sm:$0xff] %v2434
    %2519 = vst [vmem:[%s2503] ss:$9 sm:$0xff] %v2435
    %2520 = vst [vmem:[%s2505] ss:$9 sm:$0xff] %v2436
    %2521 = vst [vmem:[%s2507] ss:$9 sm:$0xff] %v2437
    %2522 = vst [vmem:[%s2509] ss:$9 sm:$0xff] %v2438
    %2523 = vst [vmem:[%s2511] ss:$9 sm:$0xff] %v2439
    %2524 = vst [vmem:[%s2513] ss:$9 sm:$0xff] %v2440
    %2525 = vst [vmem:[%s2515] ss:$9 sm:$0xff] %v2441
    %v2526 = vld [vmem:[#allocation1] sm:$0xff]
    %2527 = vst [vmem:[#allocation1] ss:$9 sm:$0xff] %v2442
    %2528 = vst [vmem:[%s2503] ss:$9 sm:$0xff] %v2443
    %2529 = vst [vmem:[%s2505] ss:$9 sm:$0xff] %v2444
    %v2530 = vld [vmem:[#allocation1] sm:$0xff]
    %2531 = vst [vmem:[#allocation1] ss:$9 sm:$0xff] %v2445
    %2532 = vst [vmem:[%s2503] ss:$9 sm:$0xff] %v2446
    %2533 = vst [vmem:[%s2505] ss:$9 sm:$0xff] %v2447
    %2534 = vst [vmem:[%s2507] ss:$9 sm:$0xff] %v2448
    %2535 = vst [vmem:[%s2509] ss:$9 sm:$0xff] %v2449
    %2536 = vst [vmem:[%s2511] ss:$9 sm:$0xff] %v2450
    %2537 = vst [vmem:[%s2513] ss:$9 sm:$0xff] %v2451
    %2538 = vst [vmem:[%s2515] ss:$9 sm:$0xff] %v2452
    %v2539 = vld [vmem:[#allocation1] sm:$0xff]
    %2540 = vst [vmem:[#allocation1] ss:$9 sm:$0xff] %v2453
    %2541 = vst [vmem:[%s2503] ss:$9 sm:$0xff] %v2454
    %2542 = vst [vmem:[%s2505] ss:$9 sm:$0xff] %v2455
    %2543 = vst [vmem:[%s2507] ss:$9 sm:$0xff] %v2456
    %2544 = vst [vmem:[%s2509] ss:$9 sm:$0xff] %v2457
    %2545 = vst [vmem:[%s2511] ss:$9 sm:$0xff] %v2458
    %2546 = vst [vmem:[%s2513] ss:$9 sm:$0xff] %v2459
    %2547 = vst [vmem:[%s2515] ss:$9 sm:$0xff] %v2460
    %v2548 = vld [vmem:[#allocation1] sm:$0xff]
    %2549 = vst [vmem:[#allocation1] ss:$9 sm:$0xff] %v2461
    %2550 = vst [vmem:[%s2503] ss:$9 sm:$0xff] %v2462
    %2551 = vst [vmem:[%s2505] ss:$9 sm:$0xff] %v2463
    %v2552 = vld [vmem:[#allocation1] sm:$0xff]
    %v2559 = vsel %vm749, %v2517, 0.0
    %v2560 = vsel %vm749, %v2526, 0.0
    %v2561 = vadd.f32 %v2559, %v2560
    %v2562 = vsel %vm1788, %v2530, 0.0
    %v2563 = vadd.f32 %v2561, %v2562
    %v2564 = vrot.slane %v2563, 4
    %v2565 = vadd.f32 %v2563, %v2564
    %v2566 = vrot.slane %v2565, 2
    %v2567 = vadd.f32 %v2565, %v2566
    %v2568 = vrot.slane %v2567, 1
    %v2569 = vadd.f32 %v2567, %v2568
    %v2570 = vsel %vm749, %v2539, 0.0
    %v2571 = vsel %vm749, %v2548, 0.0
    %v2572 = vadd.f32 %v2570, %v2571
    %v2573 = vsel %vm1788, %v2552, 0.0
    %v2574 = vadd.f32 %v2572, %v2573
    %v2575 = vrot.slane %v2574, 4
    %v2576 = vadd.f32 %v2574, %v2575
    %v2577 = vrot.slane %v2576, 2
    %v2578 = vadd.f32 %v2576, %v2577
    %v2579 = vrot.slane %v2578, 1
    %v2580 = vadd.f32 %v2578, %v2579
    %v2581 = vsel %vm749, %v2569, 0.0
    %v2582 = vsel %vm749, %v2580, 0.0
    %v2583 = vadd.f32 %v2581, %v2582
    %v2584 = vmul.f32 %v2425, 0.02631579
    %v2585 = vmul.f32 %v2583, 0.02631579
    %v2586 = vmul.f32 %v2584, %v2584
    %v2587 = vsub.f32 %v2585, %v2586
    %v2588 = vld [vmem:[%s3 + $0x4] sm:$0x1]
    %v2589 = vadd.f32 %v2587, 1e-05
    %v2590 = vrsqrt.pop %v2589
    %v2591 = vmul.f32 %v2590, %v2589
    %v2592 = vmul.f32 %v2591, %v2590
    %v2593 = vmul.f32 0.5, %v2592
    %v2594 = vsub.f32 1.5, %v2593
    %v2595 = vmul.f32 %v2590, %v2594
    %vm2596 = vweird.f32 %v2589
    %vm2597 = vweird.f32 %v2590
    %vm2598 = vmor %vm2596, %vm2597
    %v2599 = vsel %vm2598, %v2590, %v2595
    %v2600 = vmul.f32 %v2588, %v2599
    %v2601 = vld [vmem:[%s3 + $0x5] sm:$0x1]
    %v2602 = vmul.f32 %v2584, %v2600
    %v2603 = vsub.f32 %v2601, %v2602
    %v2604 = vperm.slane %v2600, 0
    %v2606 = vrot.slane %v2604, 1
    %v2607 = vrot.slane %v2604, 2
    %v2610 = vmul.f32 %v2259, %v2604
    %v2611 = vmul.f32 %v2285, %v2606
    %v2612 = vmul.f32 %v2293, %v2607
    %v2613 = vmul.f32 %v2294, %v2604
    %v2614 = vmul.f32 %v2302, %v2606
    %v2615 = vmul.f32 %v2310, %v2607
    %v2616 = vperm.slane %v2603, 0
    %v2618 = vrot.slane %v2616, 1
    %v2619 = vrot.slane %v2616, 2
    %v2622 = vadd.f32 %v2610, %v2616
    %v2623 = vadd.f32 %v2611, %v2618
    %v2624 = vadd.f32 %v2612, %v2619
    %v2625 = vadd.f32 %v2613, %v2616
    %v2626 = vadd.f32 %v2614, %v2618
    %v2627 = vadd.f32 %v2615, %v2619
    %v2628 = vmax.f32 %v2622, 0.0
    %v2629 = vmax.f32 %v2623, 0.0
    %v2630 = vmax.f32 %v2624, 0.0
    %v2631 = vmax.f32 %v2625, 0.0
    %v2632 = vmax.f32 %v2626, 0.0
    %v2633 = vmax.f32 %v2627, 0.0
    %v2634 = vadd.f32 %v2628, %v1137
    %v2635 = vadd.f32 %v2629, %v1146
    %v2636 = vadd.f32 %v2630, %v1155
    %v2637 = vadd.f32 %v2631, %v1162
    %v2638 = vadd.f32 %v2632, %v1171
    %v2639 = vadd.f32 %v2633, %v1180
    %v2642 = vperm.slane %v2635, 0
    %v2643 = vperm.slane %v2638, 0
    %2644 = vrot.lane.b32.xlu0 %v2642, 64
    %v2645 = vpop.permute.xlu0 %2644
    %2646 = vrot.lane.b32.xlu0 %v2643, 64
    %v2647 = vpop.permute.xlu0 %2646
    %v2650 = vsel %vm749, %v2634, %v2645
    %v2651 = vsel %vm749, %v2637, %v2647
    %v2652 = vld [vmem:[%s2 + $0x232] sm:$0xff]
    %v2653 = vld [vmem:[%s2 + $0x23a] sm:$0xff]
    %v2654 = vld [vmem:[%s2 + $0x242] sm:$0xff]
    %v2655 = vld [vmem:[%s2 + $0x24a] sm:$0xff]
    %v2656 = vld [vmem:[%s2 + $0x252] sm:$0xff]
    %v2657 = vld [vmem:[%s2 + $0x25a] sm:$0xff]
    %v2658 = vld [vmem:[%s2 + $0x262] sm:$0xff]
    %v2659 = vld [vmem:[%s2 + $0x26a] sm:$0xff]
    %v2660 = vld [vmem:[%s2 + $0x272] sm:$0xff]
    %v2661 = vld [vmem:[%s2 + $0x27a] sm:$0xff]
    %v2662 = vld [vmem:[%s2 + $0x282] sm:$0xff]
    %v2663 = vld [vmem:[%s2 + $0x28a] sm:$0xff]
    %v2664 = vld [vmem:[%s2 + $0x292] sm:$0xff]
    %v2665 = vld [vmem:[%s2 + $0x29a] sm:$0xff]
    %v2666 = vld [vmem:[%s2 + $0x2a2] sm:$0xff]
    %v2667 = vld [vmem:[%s2 + $0x2aa] sm:$0xff]
    %v2668 = vld [vmem:[%s2 + $0x2b2] sm:$0xff]
    %v2669 = vld [vmem:[%s2 + $0x2ba] sm:$0xff]
    %v2670 = vld [vmem:[%s2 + $0x2c2] sm:$0xff]
    %v2671 = vld [vmem:[%s2 + $0x2ca] sm:$0xff]
    %v2672 = vld [vmem:[%s2 + $0x2d2] sm:$0xff]
    %v2673 = vld [vmem:[%s2 + $0x2da] sm:$0xff]
    %v2674 = vld [vmem:[%s2 + $0x2e2] sm:$0xff]
    %v2675 = vld [vmem:[%s2 + $0x2ea] sm:$0xff]
    %v2680 = vrot.slane %v2651, 7
    %v2681 = vsel %vm168, %v2680, %v2650
    %v2682 = vrot.slane %v2639, 7
    %v2683 = vsel %vm168, %v2682, %v2636
    %v2685 = vsel %vm749, %v2683, 0
    %2687 = vmatpush.msra.mxu0 %v2667
    %2688 = vmatpush.msra.mxu0 %v2666
    %2689 = vmatpush.msra.mxu0 %v2665
    %2690 = vmatpush.msra.mxu0 %v2664
    %2691 = vmatpush.msra.mxu0 %v2663
    %2692 = vmatpush.msra.mxu0 %v2662
    %2693 = vmatpush.msra.mxu0 %v2661
    %2694 = vmatpush.msra.mxu0 %v2660
    %2695 = vmatpush.msra.mxu0 %v2659
    %2696 = vmatpush.msra.mxu0 %v2658
    %2697 = vmatpush.msra.mxu0 %v2657
    %2698 = vmatpush.msra.mxu0 %v2656
    %2699 = vmatpush.msra.mxu0 %v2655
    %2700 = vmatpush.msra.mxu0 %v2654
    %2701 = vmatpush.msra.mxu0 %v2653
    %2702 = vmatpush.msra.mxu0 %v2652
    %2703 = vmatmul.f32.gmra.mxu0 %v2681
    %v2704 = vpop.f32.mrf.mxu0
    %v2705 = vadd.f32 0.0, %v2704
    %2706 = vdwg.mxu0
    %2707 = vmatpush.msra.mxu0 0.0
    %2708 = vmatpush.msra.mxu0 0.0
    %2709 = vmatpush.msra.mxu0 0.0
    %2710 = vmatpush.msra.mxu0 0.0
    %2711 = vmatpush.msra.mxu0 0.0
    %2712 = vmatpush.msra.mxu0 0.0
    %2713 = vmatpush.msra.mxu0 0.0
    %2714 = vmatpush.msra.mxu0 0.0
    %2715 = vmatpush.msra.mxu0 %v2675
    %2716 = vmatpush.msra.mxu0 %v2674
    %2717 = vmatpush.msra.mxu0 %v2673
    %2718 = vmatpush.msra.mxu0 %v2672
    %2719 = vmatpush.msra.mxu0 %v2671
    %2720 = vmatpush.msra.mxu0 %v2670
    %2721 = vmatpush.msra.mxu0 %v2669
    %2722 = vmatpush.msra.mxu0 %v2668
    %2723 = vmatmul.f32.gmra.mxu0 %v2685
    %v2724 = vpop.f32.mrf.mxu0
    %v2725 = vadd.f32 %v2705, %v2724
    %2726 = vdwg.mxu0
    %v2728 = vrot.slane %v2725, 1
    %v2730 = vadd.f32 %v2725, 0.0
    %v2732 = vrot.slane %v2730, 1
    %v2734 = vsel %vm755, %v2730, 0.0
    %v2735 = vsel %vm755, %v2732, 0.0
    %v2736 = vadd.f32 %v2734, %v2735
    %v2737 = vmul.f32 %v2725, %v2725
    %v2738 = vmul.f32 %v2728, %v2728
    %v2739 = vadd.f32 %v2737, 0.0
    %v2740 = vadd.f32 %v2738, 0.0
    %v2741 = vsel %vm755, %v2739, 0.0
    %v2742 = vsel %vm755, %v2740, 0.0
    %v2743 = vadd.f32 %v2741, %v2742
    %v2744 = vmul.f32 %v2736, 0.5
    %v2745 = vmul.f32 %v2743, 0.5
    %v2746 = vmul.f32 %v2744, %v2744
    %v2747 = vsub.f32 %v2745, %v2746
    %v2748 = vld [vmem:[%s3 + $0x6] sm:$0x1]
    %v2749 = vadd.f32 %v2747, 1e-05
    %v2750 = vrsqrt.pop %v2749
    %v2751 = vmul.f32 %v2750, %v2749
    %v2752 = vmul.f32 %v2751, %v2750
    %v2753 = vmul.f32 0.5, %v2752
    %v2754 = vsub.f32 1.5, %v2753
    %v2755 = vmul.f32 %v2750, %v2754
    %vm2756 = vweird.f32 %v2749
    %vm2757 = vweird.f32 %v2750
    %vm2758 = vmor %vm2756, %vm2757
    %v2759 = vsel %vm2758, %v2750, %v2755
    %v2760 = vmul.f32 %v2748, %v2759
    %v2761 = vld [vmem:[%s3 + $0x7] sm:$0x1]
    %v2762 = vmul.f32 %v2744, %v2760
    %v2763 = vsub.f32 %v2761, %v2762
    %v2764 = vmul.f32 %v2725, %v2760
    %v2765 = vmul.f32 %v2728, %v2760
    %v2766 = vadd.f32 %v2764, %v2763
    %v2767 = vadd.f32 %v2765, %v2763
    %v2768 = vmax.f32 %v2766, 0.0
    %v2769 = vmax.f32 %v2767, 0.0
    %v2770 = vld [vmem:[%s2 + $0x2f2] sm:$0xff]
    %v2771 = vld [vmem:[%s2 + $0x2fa] sm:$0xff]
    %v2772 = vld [vmem:[%s2 + $0x302] sm:$0xff]
    %v2773 = vld [vmem:[%s2 + $0x30a] sm:$0xff]
    %v2774 = vld [vmem:[%s2 + $0x312] sm:$0xff]
    %v2775 = vld [vmem:[%s2 + $0x31a] sm:$0xff]
    %v2776 = vld [vmem:[%s2 + $0x322] sm:$0xff]
    %v2777 = vld [vmem:[%s2 + $0x32a] sm:$0xff]
    %2780 = vst [vmem:[#allocation1] ss:$9 sm:$0xff] %v2768
    %s2781 = scalar_lea.vmem [#allocation1], 1
    %2782 = vst [vmem:[%s2781] ss:$9 sm:$0xff] %v2769
    %v2783 = vld [vmem:[#allocation1] sm:$0xff]
    %v2784 = vsel %vm749, %v2783, 0
    %2786 = vmatpush.msra.mxu0 0.0
    %2787 = vmatpush.msra.mxu0 0.0
    %2788 = vmatpush.msra.mxu0 0.0
    %2789 = vmatpush.msra.mxu0 0.0
    %2790 = vmatpush.msra.mxu0 0.0
    %2791 = vmatpush.msra.mxu0 0.0
    %2792 = vmatpush.msra.mxu0 0.0
    %2793 = vmatpush.msra.mxu0 0.0
    %2794 = vmatpush.msra.mxu0 %v2777
    %2795 = vmatpush.msra.mxu0 %v2776
    %2796 = vmatpush.msra.mxu0 %v2775
    %2797 = vmatpush.msra.mxu0 %v2774
    %2798 = vmatpush.msra.mxu0 %v2773
    %2799 = vmatpush.msra.mxu0 %v2772
    %2800 = vmatpush.msra.mxu0 %v2771
    %2801 = vmatpush.msra.mxu0 %v2770
    %2802 = vmatmul.f32.gmra.mxu0 %v2784
    %v2803 = vpop.f32.mrf.mxu0
    %v2804 = vadd.f32 0.0, %v2803
    %2805 = vdwg.mxu0
    %v2807 = vrot.slane %v2804, 1
    %v2809 = vadd.f32 %v2804, 0.0
    %v2811 = vrot.slane %v2809, 1
    %v2813 = vsel %vm755, %v2809, 0.0
    %v2814 = vsel %vm755, %v2811, 0.0
    %v2815 = vadd.f32 %v2813, %v2814
    %v2816 = vmul.f32 %v2804, %v2804
    %v2817 = vmul.f32 %v2807, %v2807
    %v2818 = vadd.f32 %v2816, 0.0
    %v2819 = vadd.f32 %v2817, 0.0
    %v2820 = vsel %vm755, %v2818, 0.0
    %v2821 = vsel %vm755, %v2819, 0.0
    %v2822 = vadd.f32 %v2820, %v2821
    %v2823 = vmul.f32 %v2815, 0.5
    %v2824 = vmul.f32 %v2822, 0.5
    %v2825 = vmul.f32 %v2823, %v2823
    %v2826 = vsub.f32 %v2824, %v2825
    %v2827 = vld [vmem:[%s3 + $0x8] sm:$0x1]
    %v2828 = vadd.f32 %v2826, 1e-05
    %v2829 = vrsqrt.pop %v2828
    %v2830 = vmul.f32 %v2829, %v2828
    %v2831 = vmul.f32 %v2830, %v2829
    %v2832 = vmul.f32 0.5, %v2831
    %v2833 = vsub.f32 1.5, %v2832
    %v2834 = vmul.f32 %v2829, %v2833
    %vm2835 = vweird.f32 %v2828
    %vm2836 = vweird.f32 %v2829
    %vm2837 = vmor %vm2835, %vm2836
    %v2838 = vsel %vm2837, %v2829, %v2834
    %v2839 = vmul.f32 %v2827, %v2838
    %v2840 = vld [vmem:[%s3 + $0x9] sm:$0x1]
    %v2841 = vmul.f32 %v2823, %v2839
    %v2842 = vsub.f32 %v2840, %v2841
    %v2843 = vmul.f32 %v2804, %v2839
    %v2844 = vmul.f32 %v2807, %v2839
    %v2845 = vadd.f32 %v2843, %v2842
    %v2846 = vadd.f32 %v2844, %v2842
    %v2847 = vmax.f32 %v2845, 0.0
    %v2848 = vmax.f32 %v2846, 0.0
    %v2849 = vadd.f32 %v2847, %v2635
    %v2850 = vadd.f32 %v2848, %v2638
    %v2851 = vld [vmem:[%s2 + $0x332] sm:$0xff]
    %v2852 = vld [vmem:[%s2 + $0x33a] sm:$0xff]
    %v2853 = vld [vmem:[%s2 + $0x342] sm:$0xff]
    %v2854 = vld [vmem:[%s2 + $0x34a] sm:$0xff]
    %v2855 = vld [vmem:[%s2 + $0x352] sm:$0xff]
    %v2856 = vld [vmem:[%s2 + $0x35a] sm:$0xff]
    %v2857 = vld [vmem:[%s2 + $0x362] sm:$0xff]
    %v2858 = vld [vmem:[%s2 + $0x36a] sm:$0xff]
    %2861 = vst [vmem:[#allocation1] ss:$9 sm:$0xff] %v2849
    %s2862 = scalar_lea.vmem [#allocation1], 1
    %2863 = vst [vmem:[%s2862] ss:$9 sm:$0xff] %v2850
    %v2864 = vld [vmem:[#allocation1] sm:$0xff]
    %v2865 = vsel %vm749, %v2864, 0
    %2867 = vmatpush.msra.mxu0 0.0
    %2868 = vmatpush.msra.mxu0 0.0
    %2869 = vmatpush.msra.mxu0 0.0
    %2870 = vmatpush.msra.mxu0 0.0
    %2871 = vmatpush.msra.mxu0 0.0
    %2872 = vmatpush.msra.mxu0 0.0
    %2873 = vmatpush.msra.mxu0 0.0
    %2874 = vmatpush.msra.mxu0 0.0
    %2875 = vmatpush.msra.mxu0 %v2858
    %2876 = vmatpush.msra.mxu0 %v2857
    %2877 = vmatpush.msra.mxu0 %v2856
    %2878 = vmatpush.msra.mxu0 %v2855
    %2879 = vmatpush.msra.mxu0 %v2854
    %2880 = vmatpush.msra.mxu0 %v2853
    %2881 = vmatpush.msra.mxu0 %v2852
    %2882 = vmatpush.msra.mxu0 %v2851
    %2883 = vmatmul.f32.gmra.mxu0 %v2865
    %v2884 = vpop.f32.mrf.mxu0
    %v2885 = vadd.f32 0.0, %v2884
    %2886 = vdwg.mxu0
    %v2888 = vrot.slane %v2885, 1
    %v2890 = vld [vmem:[%s3 + $0xa] sm:$0x1]
    %v2891 = vadd.f32 %v2885, %v2890
    %v2892 = vadd.f32 %v2888, %v2890
    %v2893 = vmax.f32 %v2891, 0.0
    %v2894 = vmax.f32 %v2892, 0.0
    %v2895 = vld [vmem:[%s2 + $0x372] sm:$0xff]
    %v2896 = vld [vmem:[%s2 + $0x37a] sm:$0xff]
    %v2897 = vld [vmem:[%s2 + $0x382] sm:$0xff]
    %v2898 = vld [vmem:[%s2 + $0x38a] sm:$0xff]
    %v2899 = vld [vmem:[%s2 + $0x392] sm:$0xff]
    %v2900 = vld [vmem:[%s2 + $0x39a] sm:$0xff]
    %v2901 = vld [vmem:[%s2 + $0x3a2] sm:$0xff]
    %v2902 = vld [vmem:[%s2 + $0x3aa] sm:$0xff]
    %v2903 = vld [vmem:[%s3 + $0xb] sm:$0x1]
    %v2904 = vperm.slane %v2903, 0
    %2907 = vst [vmem:[#allocation1] ss:$9 sm:$0xff] %v2893
    %s2908 = scalar_lea.vmem [#allocation1], 1
    %2909 = vst [vmem:[%s2908] ss:$9 sm:$0xff] %v2894
    %v2910 = vld [vmem:[#allocation1] sm:$0xff]
    %v2911 = vsel %vm749, %v2910, 0
    %2913 = vmatpush.msra.mxu0 0.0
    %2914 = vmatpush.msra.mxu0 0.0
    %2915 = vmatpush.msra.mxu0 0.0
    %2916 = vmatpush.msra.mxu0 0.0
    %2917 = vmatpush.msra.mxu0 0.0
    %2918 = vmatpush.msra.mxu0 0.0
    %2919 = vmatpush.msra.mxu0 0.0
    %2920 = vmatpush.msra.mxu0 0.0
    %2921 = vmatpush.msra.mxu0 %v2902
    %2922 = vmatpush.msra.mxu0 %v2901
    %2923 = vmatpush.msra.mxu0 %v2900
    %2924 = vmatpush.msra.mxu0 %v2899
    %2925 = vmatpush.msra.mxu0 %v2898
    %2926 = vmatpush.msra.mxu0 %v2897
    %2927 = vmatpush.msra.mxu0 %v2896
    %2928 = vmatpush.msra.mxu0 %v2895
    %2929 = vmatmul.f32.gmra.mxu0 %v2911
    %v2930 = vpop.f32.mrf.mxu0
    %v2931 = vadd.f32 %v2904, %v2930
    %2932 = vdwg.mxu0
    %v2933 = vlaneseq
    %v2934 = vand.u32 %v2933, 127
    %vm2935 = vcmask 50176
    %v2936 = vsel %vm2935, %v2931, -inf
    %2937 = vmax.xlane.f32.xlu0 %v2936
    %v2938 = vpop.xlane.xlu0 %2937
    %vm2939 = vcmp.eq.f32.partialorder %v2931, %v2938
    %v2940 = vsel %vm2939, %v2934, 7
    %v2941 = vsel %vm2935, %v2940, 2147483647
    %v2942 = vand.u32 %v2941, 65535
    %v2943 = vshra.s32 %v2941, 16
    %v2944 = vcvt.s32.f32 %v2942
    %v2945 = vcvt.s32.f32 %v2943
    %2946 = vmin.xlane.f32.xlu0 %v2945
    %v2947 = vpop.xlane.xlu0 %2946
    %vm2948 = vcmp.eq.f32.partialorder %v2945, %v2947
    %v2949 = vsel %vm2948, %v2944, inf
    %2950 = vmin.xlane.f32.xlu0 %v2949
    %v2951 = vpop.xlane.xlu0 %2950
    %v2952 = vcvt.f32.s32 %v2951
    %v2953 = vcvt.f32.s32 %v2947
    %v2954 = vshll.u32 %v2953, 16
    %v2955 = vadd.s32 %v2954, %v2952
    %vm2956 = vcmp.lt.s32.totalorder %v2955, 6
    %v2957 = vsel %vm2956, %v2955, 6
    %v2958 = vsub.f32 %v2931, %v2938
    %v2959 = vmul.f32 %v2958, 1.442695
    %v2960 = vpow.pop %v2959
    %v2961 = vsel %vm2935, %v2960, 0.0
    %2962 = vadd.xlane.f32.xlu0 %v2961
    %v2963 = vpop.xlane.xlu0 %2962
    %v2964 = vlog2.pop %v2963
    %v2965 = vmul.f32 %v2964, 0.6931472
    %v2966 = vadd.f32 %v2938, %v2965
    %v2967 = vld [vmem:[%s1] sm:$0x3]
    %2968 = vset.pattern.permute.xlu0 0
    %2969 = vperm.xlu0 %2968, %v2967
    %v2970 = vpop.permute.xlu0 %2969
    %vm2971 = vcmp.eq.s32.totalorder %v2934, %v2970
    %v2972 = vsel %vm2971, %v2931, 0.0
    %v2973 = vsel %vm2935, %v2972, 0.0
    %2974 = vadd.xlane.f32.xlu0 %v2973
    %v2975 = vpop.xlane.xlu0 %2974
    %vm2976 = vcmask 1024
    %2977 = vst.msk [vmem:[%s4] sm:$0x3] %vm2976, %v2957
    %v2978 = vsub.f32 %v2966, %v2975
    %v2979 = vsel %vm2976, %v2978, 0.0
    %2980 = vadd.xlane.f32.xlu0 %v2979
    %v2981 = vpop.xlane.xlu0 %2980
    %v2982 = vrot.slane %v2981, 4
    %v2983 = vadd.f32 %v2981, %v2982
    %v2984 = vrot.slane %v2983, 2
    %v2985 = vadd.f32 %v2983, %v2984
    %v2986 = vrot.slane %v2985, 1
    %v2987 = vadd.f32 %v2985, %v2986
    %s2988 = vtos %v2987
    %v2989 = vrcp.pop 2.0
    %v2990 = vmul.f32 2.0, %v2989
    %v2991 = vsub.f32 1.0, %v2990
    %v2992 = vmul.f32 %v2989, %v2991
    %v2993 = vadd.f32 %v2989, %v2992
    %vm2994 = vweird.f32 %v2989
    %v2995 = vsel %vm2994, %v2989, %v2993
    %s2996 = vtos %v2995
    %s2997 = smul.f32 %s2988, %s2996
    %v2998 = vstv %s2997
    %vm2999 = vcmask 0
    %3000 = vst.msk [vmem:[#allocation2] sm:$0x1] %vm2999, %v2998
    // Predicated region
    $region18: #{forward.1} parent=1 // pred_check
      _
    $region19: #{forward.1} parent=1 // pred_check_branch
      %3002 = sbr.rel (0) target = $region21
    $region20: #{forward.1} parent=1 // pred_region
      _
    $region21: #{forward.1} parent=1 // pred_fallthru
      _
    // Predicated region
    $region22: #{forward.1} parent=1 // pred_check
      _
    $region23: #{forward.1} parent=1 // pred_check_branch
      %3004 = sbr.rel (0) target = $region25
    $region24: #{forward.1} parent=1 // pred_region
      %3006 = vsyncadd [#allocation3], 0
      %s3008 = sshll.u32 [#allocation2], 4
      %s3009 = int_to_ptr.vmem [resolvable:$true] %s3008
      %s3010 = sshll.u32 %s5, 4
      %s3011 = int_to_ptr.hbm [resolvable:$true] %s3010
      %3013 = dma.vmem_to_hbm [thread:$0]  %s3009, 16, %s3011, [#allocation3]
    $region25: #{forward.1} parent=1 // pred_fallthru
      _
    // Predicated region
    $region26: #{forward.1} parent=1 // pred_check
      _
    $region27: #{forward.1} parent=1 // pred_check_branch
      %3015 = sbr.rel (0) target = $region29
    $region28: #{forward.1} parent=1 // pred_region
      _
    $region29: #{forward.1} parent=1 // pred_fallthru
      _
    // Predicated region
    $region30: #{forward.1} parent=1 // pred_check
      _
    $region31: #{forward.1} parent=1 // pred_check_branch
      %3017 = sbr.rel (0) target = $region33
    $region32: #{forward.1} parent=1 // pred_region
      %3019 = dma.done [#allocation3], 16
    $region33: #{forward.1} parent=1 // pred_fallthru
      _
    %3020 = vsyncpa [#allocation3], 1

</llo_original>
